<compile_context>
chip_gen: v7x
topology: tpu7x:2x2x1
jax: 0.10.0
libtpu: 0.0.40
codegen_flags: <defaults>
</compile_context>

<pallas_src>
import functools
import math

import jax
import jax.numpy as jnp
from jax.experimental import pallas as pl
from jax.experimental.pallas import tpu as pltpu


# ----------------------------- in-kernel helpers -----------------------------

def _layernorm(x, g, b, eps):
    mu = jnp.mean(x, axis=-1, keepdims=True)
    xc = x - mu
    var = jnp.mean(xc * xc, axis=-1, keepdims=True)
    return xc * jax.lax.rsqrt(var + eps) * g + b


def _gelu(x):
    # TODO(synk): TAPE/ProteinBERT uses the exact erf-based GELU; erf lowering
    # in Mosaic is not guaranteed, so the tanh approximation is used here (the
    # in-file reference uses the same form).
    c = math.sqrt(2.0 / math.pi)
    return 0.5 * x * (1.0 + jnp.tanh(c * (x + 0.044715 * x * x * x)))


# --------------------- Pallas kernel: one ProteinBertLayer ---------------------

def bert_layer_kernel(xq_ref, xkv_ref, mask_ref,
                      wq_ref, bq_ref, wkv_ref, bkv_ref,
                      wo_ref, bo_ref, g1_ref, be1_ref,
                      wi_ref, bi_ref, w2_ref, b2_ref,
                      g2_ref, be2_ref,
                      out_ref,
                      *, num_heads, head_size, eps):
    H = num_heads * head_size
    xq = xq_ref[0].astype(jnp.float32)      # (TQ, H) query tile (residual path)
    xkv = xkv_ref[0]                        # (S, H)  full sequence (K/V path)
    mask = mask_ref[...]                    # (1, 1, S) additive attention mask
    TQ = xq.shape[0]
    S = xkv.shape[0]

    xq_bf = xq.astype(jnp.bfloat16)
    xkv_bf = xkv.astype(jnp.bfloat16)

    # --- projections: bf16 operands, f32 accumulation, f32 bias ---
    # (1/sqrt(head_size) is pre-folded into wq/bq on the host.)
    q = jnp.dot(xq_bf, wq_ref[...], preferred_element_type=jnp.float32) + bq_ref[...]
    kv = jnp.dot(xkv_bf, wkv_ref[...], preferred_element_type=jnp.float32) + bkv_ref[...]

    # Head split via reshape + swapaxes (no per-head lane slicing / concat).
    def heads(t, rows):                     # (rows, H) -> (NH, rows, hd)
        return jnp.swapaxes(t.reshape(rows, num_heads, head_size), 0, 1)

    qh = heads(q.astype(jnp.bfloat16), TQ)
    kh = heads(kv[:, :H].astype(jnp.bfloat16), S)
    vh = heads(kv[:, H:].astype(jnp.bfloat16), S)

    # --- head-batched attention scores (NH, TQ, S), f32 accumulation ---
    s = jax.lax.dot_general(qh, kh, (((2,), (2,)), ((0,), (0,))),
                            preferred_element_type=jnp.float32)
    s = s + mask                            # (1,1,S) broadcast over heads/queries
    s = s - jnp.max(s, axis=-1, keepdims=True)
    # TODO(synk): on v6e/v7x the exp can run in bf16 (EUP) for ~2x transcendental
    # throughput; kept in f32 here for accuracy headroom.
    p = jnp.exp(s)
    p = p * pl.reciprocal(jnp.sum(p, axis=-1, keepdims=True), approx=True)
    # attention dropout is identity at inference

    ctx_h = jax.lax.dot_general(p.astype(jnp.bfloat16), vh,
                                (((2,), (1,)), ((0,), (0,))),
                                preferred_element_type=jnp.float32)  # (NH,TQ,hd)
    ctx = jnp.swapaxes(ctx_h, 0, 1).reshape(TQ, H)

    # --- attention output dense + residual + LayerNorm ---
    attn = jnp.dot(ctx.astype(jnp.bfloat16), wo_ref[...],
                   preferred_element_type=jnp.float32) + bo_ref[...]
    h1 = _layernorm(attn + xq, g1_ref[...], be1_ref[...], eps)

    # --- GELU MLP + residual + LayerNorm ---
    # TODO(synk): for production I (3072) tile the intermediate dim with an
    # f32 VMEM accumulator + pl.when init/finalize instead of one wide dot.
    inter = _gelu(jnp.dot(h1.astype(jnp.bfloat16), wi_ref[...],
                          preferred_element_type=jnp.float32) + bi_ref[...])
    out = jnp.dot(inter.astype(jnp.bfloat16), w2_ref[...],
                  preferred_element_type=jnp.float32) + b2_ref[...]
    out_ref[0] = _layernorm(out + h1, g2_ref[...], be2_ref[...],
                            eps).astype(out_ref.dtype)


# --------------------- host-side param prep & wrappers ---------------------

def prep_layer_params(p, num_heads):
    """Fold 1/sqrt(hd) into Q, fuse K/V, cast weights to bf16 (biases f32).

    Called ONCE at model-load time (hoisted out of the per-forward loop)."""
    H = p["wq"].shape[0]
    hd = H // num_heads
    scale = 1.0 / math.sqrt(hd)
    f32, bf16 = jnp.float32, jnp.bfloat16
    return {
        "wq": (p["wq"] * scale).astype(bf16),
        "bq": (p["bq"] * scale).astype(f32),
        "wkv": jnp.concatenate([p["wk"], p["wv"]], axis=1).astype(bf16),
        "bkv": jnp.concatenate([p["bk"], p["bv"]], axis=1).astype(f32),
        "wo": p["wo"].astype(bf16), "bo": p["bo"].astype(f32),
        "ln1_g": p["ln1_g"].astype(f32), "ln1_b": p["ln1_b"].astype(f32),
        "wi": p["wi"].astype(bf16), "bi": p["bi"].astype(f32),
        "w2": p["w2"].astype(bf16), "b2": p["b2"].astype(f32),
        "ln2_g": p["ln2_g"].astype(f32), "ln2_b": p["ln2_b"].astype(f32),
    }


@functools.lru_cache(maxsize=1)
def _vmem_limit_bytes():
    # ~48 MiB on 64 MiB parts (v7x); ~96 MiB on 128 MiB parts (v5e/v6e).
    try:
        cap = int(pltpu.get_tpu_info().vmem_capacity_bytes)
    except Exception:
        cap = 64 * 1024 * 1024
    return max(32 * 1024 * 1024, min(cap * 3 // 4, 100 * 1024 * 1024))


def _pick_q_tile(S):
    # 256-row query tiles fill the 256-wide MXU on v6e/v7x; 128 is enough on v5e.
    for t in (256, 128):
        if S % t == 0:
            return t
    return S


def protein_bert_layer(x, add_mask, pp, *, num_heads, eps,
                       out_dtype=jnp.float32, single_buffer_weights=True):
    """One ProteinBertLayer.  x: [B,S,H], add_mask: [B,1,S] additive."""
    B, S, H = x.shape
    I = pp["wi"].shape[1]
    TQ = _pick_q_tile(S)
    n_q = S // TQ

    sb = single_buffer_weights and hasattr(pl, "Buffered")

    def const_spec(shape):
        zeros = (0,) * len(shape)
        if sb:
            # Constant index_map across the grid -> a single pipeline buffer is
            # enough; halves the weight VMEM footprint.
            return pl.BlockSpec(shape, lambda b, qi: zeros,
                                pipeline_mode=pl.Buffered(1))
        return pl.BlockSpec(shape, lambda b, qi: zeros)

    in_specs = [
        pl.BlockSpec((1, TQ, H), lambda b, qi: (b, qi, 0)),   # x (query tile)
        pl.BlockSpec((1, S, H), lambda b, qi: (b, 0, 0)),     # x (full seq, K/V)
        pl.BlockSpec((1, 1, S), lambda b, qi: (b, 0, 0)),     # additive mask
        const_spec((H, H)), const_spec((1, H)),               # Q dense (pre-scaled)
        const_spec((H, 2 * H)), const_spec((1, 2 * H)),       # fused K/V dense
        const_spec((H, H)), const_spec((1, H)),               # attn output dense
        const_spec((1, H)), const_spec((1, H)),               # LayerNorm 1
        const_spec((H, I)), const_spec((1, I)),               # intermediate dense
        const_spec((I, H)), const_spec((1, H)),               # output dense
        const_spec((1, H)), const_spec((1, H)),               # LayerNorm 2
    ]

    kernel = functools.partial(bert_layer_kernel, num_heads=num_heads,
                               head_size=H // num_heads, eps=eps)

    return pl.pallas_call(
        kernel,
        out_shape=jax.ShapeDtypeStruct((B, S, H), out_dtype),
        grid_spec=pltpu.PrefetchScalarGridSpec(
            num_scalar_prefetch=0,
            grid=(B, n_q),
            in_specs=in_specs,
            out_specs=pl.BlockSpec((1, TQ, H), lambda b, qi: (b, qi, 0)),
        ),
        compiler_params=pltpu.CompilerParams(
            dimension_semantics=("parallel", "parallel"),
            vmem_limit_bytes=_vmem_limit_bytes()),
    )(x, x, add_mask,
      pp["wq"], pp["bq"], pp["wkv"], pp["bkv"], pp["wo"], pp["bo"],
      pp["ln1_g"], pp["ln1_b"], pp["wi"], pp["bi"], pp["w2"], pp["b2"],
      pp["ln2_g"], pp["ln2_b"])


_USE_SINGLE_BUFFER_WEIGHTS = True  # flipped off if this Pallas build rejects Buffered(1)


def protein_bert_encoder(hidden_states, add_mask, prepped_layers, *, num_heads, eps):
    """Stack of ProteinBertLayer's (output_hidden_states/attentions = False).

    Hidden states are carried between layers in bf16 (halves activation HBM
    traffic); the final layer writes f32."""
    # TODO(synk): cross-call weight prefetch (P10) of layer L+1's weights during
    # layer L would hide the per-layer weight DMA for small B*S.
    global _USE_SINGLE_BUFFER_WEIGHTS
    h = hidden_states
    n = len(prepped_layers)
    for i, pp in enumerate(prepped_layers):
        out_dtype = jnp.float32 if i == n - 1 else jnp.bfloat16
        if _USE_SINGLE_BUFFER_WEIGHTS:
            try:
                h = protein_bert_layer(h, add_mask, pp, num_heads=num_heads,
                                       eps=eps, out_dtype=out_dtype,
                                       single_buffer_weights=True)
                continue
            except Exception:
                _USE_SINGLE_BUFFER_WEIGHTS = False
        h = protein_bert_layer(h, add_mask, pp, num_heads=num_heads, eps=eps,
                               out_dtype=out_dtype, single_buffer_weights=False)
    return (h,)


# --------------- pure-JAX f32 reference (original formulation) ---------------

def reference_layer(x, add_mask, p, num_heads, eps):
    B, S, H = x.shape
    hd = H // num_heads
    q = x @ p["wq"] + p["bq"]
    k = x @ p["wk"] + p["bk"]
    v = x @ p["wv"] + p["bv"]
    q = q.reshape(B, S, num_heads, hd).transpose(0, 2, 1, 3)
    k = k.reshape(B, S, num_heads, hd).transpose(0, 2, 1, 3)
    v = v.reshape(B, S, num_heads, hd).transpose(0, 2, 1, 3)
    s = jnp.einsum("bhqd,bhkd->bhqk", q, k) / math.sqrt(hd)
    s = s + add_mask[:, None, :, :]
    pattn = jax.nn.softmax(s, axis=-1)
    ctx = jnp.einsum("bhqk,bhkd->bhqd", pattn, v)
    ctx = ctx.transpose(0, 2, 1, 3).reshape(B, S, H)
    attn = ctx @ p["wo"] + p["bo"]
    h1 = _layernorm(attn + x, p["ln1_g"], p["ln1_b"], eps)
    inter = _gelu(h1 @ p["wi"] + p["bi"])
    out = inter @ p["w2"] + p["b2"]
    return _layernorm(out + h1, p["ln2_g"], p["ln2_b"], eps)


def reference_encoder(x, add_mask, layer_params, num_heads, eps):
    for p in layer_params:
        x = reference_layer(x, add_mask, p, num_heads, eps)
    return x


# ----------------------------------- main -----------------------------------

if __name__ == "__main__":
    # small config
    B, S = 2, 8
    H, NH, I = 32, 4, 64
    NUM_LAYERS = 2
    EPS = 1e-12

    key = jax.random.PRNGKey(0)

    def init_layer(k):
        ks = jax.random.split(k, 12)
        scale = 0.02
        return {
            "wq": scale * jax.random.normal(ks[0], (H, H), jnp.float32),
            "bq": scale * jax.random.normal(ks[1], (1, H), jnp.float32),
            "wk": scale * jax.random.normal(ks[2], (H, H), jnp.float32),
            "bk": scale * jax.random.normal(ks[3], (1, H), jnp.float32),
            "wv": scale * jax.random.normal(ks[4], (H, H), jnp.float32),
            "bv": scale * jax.random.normal(ks[5], (1, H), jnp.float32),
            "wo": scale * jax.random.normal(ks[6], (H, H), jnp.float32),
            "bo": scale * jax.random.normal(ks[7], (1, H), jnp.float32),
            "ln1_g": jnp.ones((1, H), jnp.float32),
            "ln1_b": jnp.zeros((1, H), jnp.float32),
            "wi": scale * jax.random.normal(ks[8], (H, I), jnp.float32),
            "bi": scale * jax.random.normal(ks[9], (1, I), jnp.float32),
            "w2": scale * jax.random.normal(ks[10], (I, H), jnp.float32),
            "b2": scale * jax.random.normal(ks[11], (1, H), jnp.float32),
            "ln2_g": jnp.ones((1, H), jnp.float32),
            "ln2_b": jnp.zeros((1, H), jnp.float32),
        }

    key, *layer_keys = jax.random.split(key, NUM_LAYERS + 1)
    layer_params = [init_layer(k) for k in layer_keys]

    # Weight prep (fusion / folding / bf16 cast) happens once, at load time.
    prepped_layers = [prep_layer_params(p, NH) for p in layer_params]

    key, kx = jax.random.split(key)
    hidden_states = jax.random.normal(kx, (B, S, H), jnp.float32)

    # token mask (1 = keep, 0 = pad) -> HF-style additive mask [B, 1, S]
    token_mask = jnp.ones((B, S), jnp.float32).at[1, 6:].set(0.0)
    add_mask = ((1.0 - token_mask) * -10000.0)[:, None, :]

    out = protein_bert_encoder(hidden_states, add_mask, prepped_layers,
                               num_heads=NH, eps=EPS)[0]
    out = jax.block_until_ready(out)

    ref = reference_encoder(hidden_states, add_mask, layer_params, NH, EPS)
    assert out.shape == (B, S, H)
    assert bool(jnp.all(jnp.isfinite(out))), "non-finite values in kernel output"
    # bf16 matmul operands + bf16 inter-layer hidden states + approx reciprocal
    # -> compare against the exact f32 reference with a relaxed tolerance.
    assert jnp.allclose(out, ref, rtol=3e-2, atol=3e-2), "mismatch vs reference"

    print("KERNEL_OK")
</pallas_src>

<mosaic_0001>
module attributes {stable_mosaic.version = 11 : i64} {
  func.func @bert_layer_kernel(%arg0: i32, %arg1: i32, %arg2: memref<1x8x32xf32, #tpu.memory_space<vmem>>, %arg3: memref<1x8x32xf32, #tpu.memory_space<vmem>>, %arg4: memref<1x1x8xf32, #tpu.memory_space<vmem>>, %arg5: memref<32x32xbf16, #tpu.memory_space<vmem>>, %arg6: memref<1x32xf32, #tpu.memory_space<vmem>>, %arg7: memref<32x64xbf16, #tpu.memory_space<vmem>>, %arg8: memref<1x64xf32, #tpu.memory_space<vmem>>, %arg9: memref<32x32xbf16, #tpu.memory_space<vmem>>, %arg10: memref<1x32xf32, #tpu.memory_space<vmem>>, %arg11: memref<1x32xf32, #tpu.memory_space<vmem>>, %arg12: memref<1x32xf32, #tpu.memory_space<vmem>>, %arg13: memref<32x64xbf16, #tpu.memory_space<vmem>>, %arg14: memref<1x64xf32, #tpu.memory_space<vmem>>, %arg15: memref<64x32xbf16, #tpu.memory_space<vmem>>, %arg16: memref<1x32xf32, #tpu.memory_space<vmem>>, %arg17: memref<1x32xf32, #tpu.memory_space<vmem>>, %arg18: memref<1x32xf32, #tpu.memory_space<vmem>>, %arg19: memref<1x8x32xbf16, #tpu.memory_space<vmem>>) attributes {dimension_semantics = [#tpu.dimension_semantics<parallel>, #tpu.dimension_semantics<parallel>], iteration_bounds = array<i64: 2, 1>, scalar_prefetch = 0 : i64, scratch_operands = 0 : i64, tpu.core_type = #tpu.core_type<tc>, window_params = [{transform_indices = @transform_0, window_bounds = array<i64: 1, 8, 32>}, {transform_indices = @transform_1, window_bounds = array<i64: 1, 8, 32>}, {transform_indices = @transform_2, window_bounds = array<i64: 1, 1, 8>}, {pipeline_mode = #tpu.pipeline_mode<synchronous>, transform_indices = @transform_3, window_bounds = array<i64: 32, 32>}, {pipeline_mode = #tpu.pipeline_mode<synchronous>, transform_indices = @transform_4, window_bounds = array<i64: 1, 32>}, {pipeline_mode = #tpu.pipeline_mode<synchronous>, transform_indices = @transform_5, window_bounds = array<i64: 32, 64>}, {pipeline_mode = #tpu.pipeline_mode<synchronous>, transform_indices = @transform_6, window_bounds = array<i64: 1, 64>}, {pipeline_mode = #tpu.pipeline_mode<synchronous>, transform_indices = @transform_7, window_bounds = array<i64: 32, 32>}, {pipeline_mode = #tpu.pipeline_mode<synchronous>, transform_indices = @transform_8, window_bounds = array<i64: 1, 32>}, {pipeline_mode = #tpu.pipeline_mode<synchronous>, transform_indices = @transform_9, window_bounds = array<i64: 1, 32>}, {pipeline_mode = #tpu.pipeline_mode<synchronous>, transform_indices = @transform_10, window_bounds = array<i64: 1, 32>}, {pipeline_mode = #tpu.pipeline_mode<synchronous>, transform_indices = @transform_11, window_bounds = array<i64: 32, 64>}, {pipeline_mode = #tpu.pipeline_mode<synchronous>, transform_indices = @transform_12, window_bounds = array<i64: 1, 64>}, {pipeline_mode = #tpu.pipeline_mode<synchronous>, transform_indices = @transform_13, window_bounds = array<i64: 64, 32>}, {pipeline_mode = #tpu.pipeline_mode<synchronous>, transform_indices = @transform_14, window_bounds = array<i64: 1, 32>}, {pipeline_mode = #tpu.pipeline_mode<synchronous>, transform_indices = @transform_15, window_bounds = array<i64: 1, 32>}, {pipeline_mode = #tpu.pipeline_mode<synchronous>, transform_indices = @transform_16, window_bounds = array<i64: 1, 32>}, {transform_indices = @transform_17, window_bounds = array<i64: 1, 8, 32>}]} {
    %c0 = arith.constant 0 : index
    %c0_0 = arith.constant 0 : index
    %c0_1 = arith.constant 0 : index
    %0 = vector.load %arg2[%c0, %c0_0, %c0_1] : memref<1x8x32xf32, #tpu.memory_space<vmem>>, vector<1x8x32xf32>
    %1 = vector.shape_cast %0 : vector<1x8x32xf32> to vector<8x32xf32>
    %c0_2 = arith.constant 0 : index
    %c0_3 = arith.constant 0 : index
    %c0_4 = arith.constant 0 : index
    %2 = vector.load %arg3[%c0_2, %c0_3, %c0_4] : memref<1x8x32xf32, #tpu.memory_space<vmem>>, vector<1x8x32xf32>
    %3 = vector.shape_cast %2 : vector<1x8x32xf32> to vector<8x32xf32>
    %c0_5 = arith.constant 0 : index
    %c0_6 = arith.constant 0 : index
    %c0_7 = arith.constant 0 : index
    %4 = vector.load %arg4[%c0_5, %c0_6, %c0_7] : memref<1x1x8xf32, #tpu.memory_space<vmem>>, vector<1x1x8xf32>
    %5 = arith.truncf %1 : vector<8x32xf32> to vector<8x32xbf16>
    %6 = arith.truncf %3 : vector<8x32xf32> to vector<8x32xbf16>
    %c0_8 = arith.constant 0 : index
    %c0_9 = arith.constant 0 : index
    %7 = vector.load %arg5[%c0_8, %c0_9] : memref<32x32xbf16, #tpu.memory_space<vmem>>, vector<32x32xbf16>
    %cst = arith.constant dense<0.000000e+00> : vector<8x32xf32>
    %8 = tpu.matmul %5, %7, %cst {dimension_numbers = #tpu.dot_dimension_numbers<[1], [0], [0], [1], [0, 0, 1, 1], [], []>} : vector<8x32xbf16>, vector<32x32xbf16>, vector<8x32xf32> -> vector<8x32xf32>
    %c0_10 = arith.constant 0 : index
    %c0_11 = arith.constant 0 : index
    %9 = vector.load %arg6[%c0_10, %c0_11] : memref<1x32xf32, #tpu.memory_space<vmem>>, vector<1x32xf32>
    %10 = vector.broadcast %9 : vector<1x32xf32> to vector<8x32xf32>
    %11 = arith.addf %8, %10 : vector<8x32xf32>
    %c0_12 = arith.constant 0 : index
    %c0_13 = arith.constant 0 : index
    %12 = vector.load %arg7[%c0_12, %c0_13] : memref<32x64xbf16, #tpu.memory_space<vmem>>, vector<32x64xbf16>
    %cst_14 = arith.constant dense<0.000000e+00> : vector<8x64xf32>
    %13 = tpu.matmul %6, %12, %cst_14 {dimension_numbers = #tpu.dot_dimension_numbers<[1], [0], [0], [1], [0, 0, 1, 1], [], []>} : vector<8x32xbf16>, vector<32x64xbf16>, vector<8x64xf32> -> vector<8x64xf32>
    %c0_15 = arith.constant 0 : index
    %c0_16 = arith.constant 0 : index
    %14 = vector.load %arg8[%c0_15, %c0_16] : memref<1x64xf32, #tpu.memory_space<vmem>>, vector<1x64xf32>
    %15 = vector.broadcast %14 : vector<1x64xf32> to vector<8x64xf32>
    %16 = arith.addf %13, %15 : vector<8x64xf32>
    %17 = arith.truncf %11 : vector<8x32xf32> to vector<8x32xbf16>
    %18 = vector.shape_cast %17 : vector<8x32xbf16> to vector<8x4x8xbf16>
    %19 = tpu.transpose %18, [1, 0, 2] : vector<8x4x8xbf16> -> vector<4x8x8xbf16>
    %20 = vector.extract_strided_slice %16 {offsets = [0, 0], sizes = [8, 32], strides = [1, 1]} : vector<8x64xf32> to vector<8x32xf32>
    %21 = arith.truncf %20 : vector<8x32xf32> to vector<8x32xbf16>
    %22 = vector.shape_cast %21 : vector<8x32xbf16> to vector<8x4x8xbf16>
    %23 = tpu.transpose %22, [1, 0, 2] : vector<8x4x8xbf16> -> vector<4x8x8xbf16>
    %24 = vector.extract_strided_slice %16 {offsets = [0, 32], sizes = [8, 32], strides = [1, 1]} : vector<8x64xf32> to vector<8x32xf32>
    %25 = arith.truncf %24 : vector<8x32xf32> to vector<8x32xbf16>
    %26 = vector.shape_cast %25 : vector<8x32xbf16> to vector<8x4x8xbf16>
    %27 = tpu.transpose %26, [1, 0, 2] : vector<8x4x8xbf16> -> vector<4x8x8xbf16>
    %cst_17 = arith.constant dense<0.000000e+00> : vector<4x8x8xf32>
    %28 = tpu.matmul %19, %23, %cst_17 {dimension_numbers = #tpu.dot_dimension_numbers<[2], [2], [1], [1], [0, 0, 0, 1, 1, 1], [0], [0]>} : vector<4x8x8xbf16>, vector<4x8x8xbf16>, vector<4x8x8xf32> -> vector<4x8x8xf32>
    %29 = vector.broadcast %4 : vector<1x1x8xf32> to vector<4x8x8xf32>
    %30 = arith.addf %28, %29 : vector<4x8x8xf32>
    %cst_18 = arith.constant dense<0xFF800000> : vector<4x8xf32>
    %31 = vector.multi_reduction <maximumf>, %30, %cst_18 [2] : vector<4x8x8xf32> to vector<4x8xf32>
    %32 = vector.shape_cast %31 : vector<4x8xf32> to vector<4x8x1xf32>
    %33 = vector.broadcast %32 : vector<4x8x1xf32> to vector<4x8x8xf32>
    %34 = arith.subf %30, %33 : vector<4x8x8xf32>
    %35 = math.exp %34 : vector<4x8x8xf32>
    %cst_19 = arith.constant dense<0.000000e+00> : vector<4x8xf32>
    %36 = vector.multi_reduction <add>, %35, %cst_19 [2] : vector<4x8x8xf32> to vector<4x8xf32>
    %37 = vector.shape_cast %36 : vector<4x8xf32> to vector<4x8x1xf32>
    %38 = tpu.reciprocal %37 {approx = true} : vector<4x8x1xf32> -> vector<4x8x1xf32>
    %39 = vector.broadcast %38 : vector<4x8x1xf32> to vector<4x8x8xf32>
    %40 = arith.mulf %35, %39 : vector<4x8x8xf32>
    %41 = arith.truncf %40 : vector<4x8x8xf32> to vector<4x8x8xbf16>
    %cst_20 = arith.constant dense<0.000000e+00> : vector<4x8x8xf32>
    %42 = tpu.matmul %41, %27, %cst_20 {dimension_numbers = #tpu.dot_dimension_numbers<[2], [1], [1], [2], [0, 0, 0, 1, 1, 2], [0], [0]>} : vector<4x8x8xbf16>, vector<4x8x8xbf16>, vector<4x8x8xf32> -> vector<4x8x8xf32>
    %43 = tpu.transpose %42, [1, 0, 2] : vector<4x8x8xf32> -> vector<8x4x8xf32>
    %44 = vector.shape_cast %43 : vector<8x4x8xf32> to vector<8x32xf32>
    %45 = arith.truncf %44 : vector<8x32xf32> to vector<8x32xbf16>
    %c0_21 = arith.constant 0 : index
    %c0_22 = arith.constant 0 : index
    %46 = vector.load %arg9[%c0_21, %c0_22] : memref<32x32xbf16, #tpu.memory_space<vmem>>, vector<32x32xbf16>
    %cst_23 = arith.constant dense<0.000000e+00> : vector<8x32xf32>
    %47 = tpu.matmul %45, %46, %cst_23 {dimension_numbers = #tpu.dot_dimension_numbers<[1], [0], [0], [1], [0, 0, 1, 1], [], []>} : vector<8x32xbf16>, vector<32x32xbf16>, vector<8x32xf32> -> vector<8x32xf32>
    %c0_24 = arith.constant 0 : index
    %c0_25 = arith.constant 0 : index
    %48 = vector.load %arg10[%c0_24, %c0_25] : memref<1x32xf32, #tpu.memory_space<vmem>>, vector<1x32xf32>
    %49 = vector.broadcast %48 : vector<1x32xf32> to vector<8x32xf32>
    %50 = arith.addf %47, %49 : vector<8x32xf32>
    %51 = arith.addf %50, %1 : vector<8x32xf32>
    %c0_26 = arith.constant 0 : index
    %c0_27 = arith.constant 0 : index
    %52 = vector.load %arg11[%c0_26, %c0_27] : memref<1x32xf32, #tpu.memory_space<vmem>>, vector<1x32xf32>
    %c0_28 = arith.constant 0 : index
    %c0_29 = arith.constant 0 : index
    %53 = vector.load %arg12[%c0_28, %c0_29] : memref<1x32xf32, #tpu.memory_space<vmem>>, vector<1x32xf32>
    %cst_30 = arith.constant dense<0.000000e+00> : vector<8xf32>
    %54 = vector.multi_reduction <add>, %51, %cst_30 [1] : vector<8x32xf32> to vector<8xf32>
    %55 = vector.shape_cast %54 : vector<8xf32> to vector<8x1xf32>
    %cst_31 = arith.constant 3.200000e+01 : f32
    %56 = vector.broadcast %cst_31 : f32 to vector<8x1xf32>
    %57 = arith.divf %55, %56 : vector<8x1xf32>
    %58 = vector.broadcast %57 : vector<8x1xf32> to vector<8x32xf32>
    %59 = arith.subf %51, %58 : vector<8x32xf32>
    %60 = arith.mulf %59, %59 : vector<8x32xf32>
    %cst_32 = arith.constant dense<0.000000e+00> : vector<8xf32>
    %61 = vector.multi_reduction <add>, %60, %cst_32 [1] : vector<8x32xf32> to vector<8xf32>
    %62 = vector.shape_cast %61 : vector<8xf32> to vector<8x1xf32>
    %cst_33 = arith.constant 3.200000e+01 : f32
    %63 = vector.broadcast %cst_33 : f32 to vector<8x1xf32>
    %64 = arith.divf %62, %63 : vector<8x1xf32>
    %cst_34 = arith.constant 9.99999996E-13 : f32
    %65 = vector.broadcast %cst_34 : f32 to vector<8x1xf32>
    %66 = arith.addf %64, %65 : vector<8x1xf32>
    %67 = math.rsqrt %66 : vector<8x1xf32>
    %68 = vector.broadcast %67 : vector<8x1xf32> to vector<8x32xf32>
    %69 = arith.mulf %59, %68 : vector<8x32xf32>
    %70 = vector.broadcast %52 : vector<1x32xf32> to vector<8x32xf32>
    %71 = arith.mulf %69, %70 : vector<8x32xf32>
    %72 = vector.broadcast %53 : vector<1x32xf32> to vector<8x32xf32>
    %73 = arith.addf %71, %72 : vector<8x32xf32>
    %74 = arith.truncf %73 : vector<8x32xf32> to vector<8x32xbf16>
    %c0_35 = arith.constant 0 : index
    %c0_36 = arith.constant 0 : index
    %75 = vector.load %arg13[%c0_35, %c0_36] : memref<32x64xbf16, #tpu.memory_space<vmem>>, vector<32x64xbf16>
    %cst_37 = arith.constant dense<0.000000e+00> : vector<8x64xf32>
    %76 = tpu.matmul %74, %75, %cst_37 {dimension_numbers = #tpu.dot_dimension_numbers<[1], [0], [0], [1], [0, 0, 1, 1], [], []>} : vector<8x32xbf16>, vector<32x64xbf16>, vector<8x64xf32> -> vector<8x64xf32>
    %c0_38 = arith.constant 0 : index
    %c0_39 = arith.constant 0 : index
    %77 = vector.load %arg14[%c0_38, %c0_39] : memref<1x64xf32, #tpu.memory_space<vmem>>, vector<1x64xf32>
    %78 = vector.broadcast %77 : vector<1x64xf32> to vector<8x64xf32>
    %79 = arith.addf %76, %78 : vector<8x64xf32>
    %cst_40 = arith.constant 5.000000e-01 : f32
    %80 = vector.broadcast %cst_40 : f32 to vector<8x64xf32>
    %81 = arith.mulf %80, %79 : vector<8x64xf32>
    %cst_41 = arith.constant 4.471500e-02 : f32
    %82 = vector.broadcast %cst_41 : f32 to vector<8x64xf32>
    %83 = arith.mulf %82, %79 : vector<8x64xf32>
    %84 = arith.mulf %83, %79 : vector<8x64xf32>
    %85 = arith.mulf %84, %79 : vector<8x64xf32>
    %86 = arith.addf %79, %85 : vector<8x64xf32>
    %cst_42 = arith.constant 0.797884583 : f32
    %87 = vector.broadcast %cst_42 : f32 to vector<8x64xf32>
    %88 = arith.mulf %87, %86 : vector<8x64xf32>
    %89 = math.tanh %88 : vector<8x64xf32>
    %cst_43 = arith.constant 1.000000e+00 : f32
    %90 = vector.broadcast %cst_43 : f32 to vector<8x64xf32>
    %91 = arith.addf %90, %89 : vector<8x64xf32>
    %92 = arith.mulf %81, %91 : vector<8x64xf32>
    %93 = arith.truncf %92 : vector<8x64xf32> to vector<8x64xbf16>
    %c0_44 = arith.constant 0 : index
    %c0_45 = arith.constant 0 : index
    %94 = vector.load %arg15[%c0_44, %c0_45] : memref<64x32xbf16, #tpu.memory_space<vmem>>, vector<64x32xbf16>
    %cst_46 = arith.constant dense<0.000000e+00> : vector<8x32xf32>
    %95 = tpu.matmul %93, %94, %cst_46 {dimension_numbers = #tpu.dot_dimension_numbers<[1], [0], [0], [1], [0, 0, 1, 1], [], []>} : vector<8x64xbf16>, vector<64x32xbf16>, vector<8x32xf32> -> vector<8x32xf32>
    %c0_47 = arith.constant 0 : index
    %c0_48 = arith.constant 0 : index
    %96 = vector.load %arg16[%c0_47, %c0_48] : memref<1x32xf32, #tpu.memory_space<vmem>>, vector<1x32xf32>
    %97 = vector.broadcast %96 : vector<1x32xf32> to vector<8x32xf32>
    %98 = arith.addf %95, %97 : vector<8x32xf32>
    %99 = arith.addf %98, %73 : vector<8x32xf32>
    %c0_49 = arith.constant 0 : index
    %c0_50 = arith.constant 0 : index
    %100 = vector.load %arg17[%c0_49, %c0_50] : memref<1x32xf32, #tpu.memory_space<vmem>>, vector<1x32xf32>
    %c0_51 = arith.constant 0 : index
    %c0_52 = arith.constant 0 : index
    %101 = vector.load %arg18[%c0_51, %c0_52] : memref<1x32xf32, #tpu.memory_space<vmem>>, vector<1x32xf32>
    %cst_53 = arith.constant dense<0.000000e+00> : vector<8xf32>
    %102 = vector.multi_reduction <add>, %99, %cst_53 [1] : vector<8x32xf32> to vector<8xf32>
    %103 = vector.shape_cast %102 : vector<8xf32> to vector<8x1xf32>
    %cst_54 = arith.constant 3.200000e+01 : f32
    %104 = vector.broadcast %cst_54 : f32 to vector<8x1xf32>
    %105 = arith.divf %103, %104 : vector<8x1xf32>
    %106 = vector.broadcast %105 : vector<8x1xf32> to vector<8x32xf32>
    %107 = arith.subf %99, %106 : vector<8x32xf32>
    %108 = arith.mulf %107, %107 : vector<8x32xf32>
    %cst_55 = arith.constant dense<0.000000e+00> : vector<8xf32>
    %109 = vector.multi_reduction <add>, %108, %cst_55 [1] : vector<8x32xf32> to vector<8xf32>
    %110 = vector.shape_cast %109 : vector<8xf32> to vector<8x1xf32>
    %cst_56 = arith.constant 3.200000e+01 : f32
    %111 = vector.broadcast %cst_56 : f32 to vector<8x1xf32>
    %112 = arith.divf %110, %111 : vector<8x1xf32>
    %cst_57 = arith.constant 9.99999996E-13 : f32
    %113 = vector.broadcast %cst_57 : f32 to vector<8x1xf32>
    %114 = arith.addf %112, %113 : vector<8x1xf32>
    %115 = math.rsqrt %114 : vector<8x1xf32>
    %116 = vector.broadcast %115 : vector<8x1xf32> to vector<8x32xf32>
    %117 = arith.mulf %107, %116 : vector<8x32xf32>
    %118 = vector.broadcast %100 : vector<1x32xf32> to vector<8x32xf32>
    %119 = arith.mulf %117, %118 : vector<8x32xf32>
    %120 = vector.broadcast %101 : vector<1x32xf32> to vector<8x32xf32>
    %121 = arith.addf %119, %120 : vector<8x32xf32>
    %122 = arith.truncf %121 : vector<8x32xf32> to vector<8x32xbf16>
    %c0_58 = arith.constant 0 : index
    %c0_59 = arith.constant 0 : index
    %c0_60 = arith.constant 0 : index
    %123 = vector.load %arg19[%c0_58, %c0_59, %c0_60] : memref<1x8x32xbf16, #tpu.memory_space<vmem>>, vector<1x8x32xbf16>
    %124 = vector.shape_cast %123 : vector<1x8x32xbf16> to vector<8x32xbf16>
    %125 = vector.shape_cast %122 : vector<8x32xbf16> to vector<1x8x32xbf16>
    tpu.vector_store %arg19[%c0_58, %c0_59, %c0_60], %125 {strides = array<i32>} : memref<1x8x32xbf16, #tpu.memory_space<vmem>>, vector<1x8x32xbf16>,
    return
  }
  func.func @transform_0(%arg0: i32, %arg1: i32) -> (i32, i32, i32) {
    %c0_i32 = arith.constant 0 : i32
    %c0_i32_0 = arith.constant 0 : i32
    return %arg0, %arg1, %c0_i32 : i32, i32, i32
  }
  func.func @transform_1(%arg0: i32, %arg1: i32) -> (i32, i32, i32) {
    %c0_i32 = arith.constant 0 : i32
    %c0_i32_0 = arith.constant 0 : i32
    %c0_i32_1 = arith.constant 0 : i32
    return %arg0, %c0_i32, %c0_i32_0 : i32, i32, i32
  }
  func.func @transform_2(%arg0: i32, %arg1: i32) -> (i32, i32, i32) {
    %c0_i32 = arith.constant 0 : i32
    %c0_i32_0 = arith.constant 0 : i32
    %c0_i32_1 = arith.constant 0 : i32
    return %arg0, %c0_i32, %c0_i32_0 : i32, i32, i32
  }
  func.func @transform_3(%arg0: i32, %arg1: i32) -> (i32, i32) {
    %c0_i32 = arith.constant 0 : i32
    %c0_i32_0 = arith.constant 0 : i32
    %c0_i32_1 = arith.constant 0 : i32
    return %c0_i32, %c0_i32_0 : i32, i32
  }
  func.func @transform_4(%arg0: i32, %arg1: i32) -> (i32, i32) {
    %c0_i32 = arith.constant 0 : i32
    %c0_i32_0 = arith.constant 0 : i32
    %c0_i32_1 = arith.constant 0 : i32
    return %c0_i32, %c0_i32_0 : i32, i32
  }
  func.func @transform_5(%arg0: i32, %arg1: i32) -> (i32, i32) {
    %c0_i32 = arith.constant 0 : i32
    %c0_i32_0 = arith.constant 0 : i32
    %c0_i32_1 = arith.constant 0 : i32
    return %c0_i32, %c0_i32_0 : i32, i32
  }
  func.func @transform_6(%arg0: i32, %arg1: i32) -> (i32, i32) {
    %c0_i32 = arith.constant 0 : i32
    %c0_i32_0 = arith.constant 0 : i32
    %c0_i32_1 = arith.constant 0 : i32
    return %c0_i32, %c0_i32_0 : i32, i32
  }
  func.func @transform_7(%arg0: i32, %arg1: i32) -> (i32, i32) {
    %c0_i32 = arith.constant 0 : i32
    %c0_i32_0 = arith.constant 0 : i32
    %c0_i32_1 = arith.constant 0 : i32
    return %c0_i32, %c0_i32_0 : i32, i32
  }
  func.func @transform_8(%arg0: i32, %arg1: i32) -> (i32, i32) {
    %c0_i32 = arith.constant 0 : i32
    %c0_i32_0 = arith.constant 0 : i32
    %c0_i32_1 = arith.constant 0 : i32
    return %c0_i32, %c0_i32_0 : i32, i32
  }
  func.func @transform_9(%arg0: i32, %arg1: i32) -> (i32, i32) {
    %c0_i32 = arith.constant 0 : i32
    %c0_i32_0 = arith.constant 0 : i32
    %c0_i32_1 = arith.constant 0 : i32
    return %c0_i32, %c0_i32_0 : i32, i32
  }
  func.func @transform_10(%arg0: i32, %arg1: i32) -> (i32, i32) {
    %c0_i32 = arith.constant 0 : i32
    %c0_i32_0 = arith.constant 0 : i32
    %c0_i32_1 = arith.constant 0 : i32
    return %c0_i32, %c0_i32_0 : i32, i32
  }
  func.func @transform_11(%arg0: i32, %arg1: i32) -> (i32, i32) {
    %c0_i32 = arith.constant 0 : i32
    %c0_i32_0 = arith.constant 0 : i32
    %c0_i32_1 = arith.constant 0 : i32
    return %c0_i32, %c0_i32_0 : i32, i32
  }
  func.func @transform_12(%arg0: i32, %arg1: i32) -> (i32, i32) {
    %c0_i32 = arith.constant 0 : i32
    %c0_i32_0 = arith.constant 0 : i32
    %c0_i32_1 = arith.constant 0 : i32
    return %c0_i32, %c0_i32_0 : i32, i32
  }
  func.func @transform_13(%arg0: i32, %arg1: i32) -> (i32, i32) {
    %c0_i32 = arith.constant 0 : i32
    %c0_i32_0 = arith.constant 0 : i32
    %c0_i32_1 = arith.constant 0 : i32
    return %c0_i32, %c0_i32_0 : i32, i32
  }
  func.func @transform_14(%arg0: i32, %arg1: i32) -> (i32, i32) {
    %c0_i32 = arith.constant 0 : i32
    %c0_i32_0 = arith.constant 0 : i32
    %c0_i32_1 = arith.constant 0 : i32
    return %c0_i32, %c0_i32_0 : i32, i32
  }
  func.func @transform_15(%arg0: i32, %arg1: i32) -> (i32, i32) {
    %c0_i32 = arith.constant 0 : i32
    %c0_i32_0 = arith.constant 0 : i32
    %c0_i32_1 = arith.constant 0 : i32
    return %c0_i32, %c0_i32_0 : i32, i32
  }
  func.func @transform_16(%arg0: i32, %arg1: i32) -> (i32, i32) {
    %c0_i32 = arith.constant 0 : i32
    %c0_i32_0 = arith.constant 0 : i32
    %c0_i32_1 = arith.constant 0 : i32
    return %c0_i32, %c0_i32_0 : i32, i32
  }
  func.func @transform_17(%arg0: i32, %arg1: i32) -> (i32, i32, i32) {
    %c0_i32 = arith.constant 0 : i32
    %c0_i32_0 = arith.constant 0 : i32
    return %arg0, %arg1, %c0_i32 : i32, i32, i32
  }
}

module attributes {stable_mosaic.version = 11 : i64} {
  func.func @bert_layer_kernel(%arg0: i32, %arg1: i32, %arg2: memref<1x8x32xf32, #tpu.memory_space<vmem>>, %arg3: memref<1x8x32xf32, #tpu.memory_space<vmem>>, %arg4: memref<1x1x8xf32, #tpu.memory_space<vmem>>, %arg5: memref<32x32xbf16, #tpu.memory_space<vmem>>, %arg6: memref<1x32xf32, #tpu.memory_space<vmem>>, %arg7: memref<32x64xbf16, #tpu.memory_space<vmem>>, %arg8: memref<1x64xf32, #tpu.memory_space<vmem>>, %arg9: memref<32x32xbf16, #tpu.memory_space<vmem>>, %arg10: memref<1x32xf32, #tpu.memory_space<vmem>>, %arg11: memref<1x32xf32, #tpu.memory_space<vmem>>, %arg12: memref<1x32xf32, #tpu.memory_space<vmem>>, %arg13: memref<32x64xbf16, #tpu.memory_space<vmem>>, %arg14: memref<1x64xf32, #tpu.memory_space<vmem>>, %arg15: memref<64x32xbf16, #tpu.memory_space<vmem>>, %arg16: memref<1x32xf32, #tpu.memory_space<vmem>>, %arg17: memref<1x32xf32, #tpu.memory_space<vmem>>, %arg18: memref<1x32xf32, #tpu.memory_space<vmem>>, %arg19: memref<1x8x32xbf16, #tpu.memory_space<vmem>>) attributes {dimension_semantics = [#tpu.dimension_semantics<parallel>, #tpu.dimension_semantics<parallel>], iteration_bounds = array<i64: 2, 1>, scalar_prefetch = 0 : i64, scratch_operands = 0 : i64, tpu.core_type = #tpu.core_type<tc>, window_params = [{transform_indices = @transform_0, window_bounds = array<i64: 1, 8, 32>}, {transform_indices = @transform_1, window_bounds = array<i64: 1, 8, 32>}, {transform_indices = @transform_2, window_bounds = array<i64: 1, 1, 8>}, {pipeline_mode = #tpu.pipeline_mode<synchronous>, transform_indices = @transform_3, window_bounds = array<i64: 32, 32>}, {pipeline_mode = #tpu.pipeline_mode<synchronous>, transform_indices = @transform_4, window_bounds = array<i64: 1, 32>}, {pipeline_mode = #tpu.pipeline_mode<synchronous>, transform_indices = @transform_5, window_bounds = array<i64: 32, 64>}, {pipeline_mode = #tpu.pipeline_mode<synchronous>, transform_indices = @transform_6, window_bounds = array<i64: 1, 64>}, {pipeline_mode = #tpu.pipeline_mode<synchronous>, transform_indices = @transform_7, window_bounds = array<i64: 32, 32>}, {pipeline_mode = #tpu.pipeline_mode<synchronous>, transform_indices = @transform_8, window_bounds = array<i64: 1, 32>}, {pipeline_mode = #tpu.pipeline_mode<synchronous>, transform_indices = @transform_9, window_bounds = array<i64: 1, 32>}, {pipeline_mode = #tpu.pipeline_mode<synchronous>, transform_indices = @transform_10, window_bounds = array<i64: 1, 32>}, {pipeline_mode = #tpu.pipeline_mode<synchronous>, transform_indices = @transform_11, window_bounds = array<i64: 32, 64>}, {pipeline_mode = #tpu.pipeline_mode<synchronous>, transform_indices = @transform_12, window_bounds = array<i64: 1, 64>}, {pipeline_mode = #tpu.pipeline_mode<synchronous>, transform_indices = @transform_13, window_bounds = array<i64: 64, 32>}, {pipeline_mode = #tpu.pipeline_mode<synchronous>, transform_indices = @transform_14, window_bounds = array<i64: 1, 32>}, {pipeline_mode = #tpu.pipeline_mode<synchronous>, transform_indices = @transform_15, window_bounds = array<i64: 1, 32>}, {pipeline_mode = #tpu.pipeline_mode<synchronous>, transform_indices = @transform_16, window_bounds = array<i64: 1, 32>}, {transform_indices = @transform_17, window_bounds = array<i64: 1, 8, 32>}]} {
    %c0 = arith.constant 0 : index
    %c0_0 = arith.constant 0 : index
    %c0_1 = arith.constant 0 : index
    %0 = vector.load %arg2[%c0, %c0_0, %c0_1] : memref<1x8x32xf32, #tpu.memory_space<vmem>>, vector<1x8x32xf32>
    %1 = vector.shape_cast %0 : vector<1x8x32xf32> to vector<8x32xf32>
    %c0_2 = arith.constant 0 : index
    %c0_3 = arith.constant 0 : index
    %c0_4 = arith.constant 0 : index
    %2 = vector.load %arg3[%c0_2, %c0_3, %c0_4] : memref<1x8x32xf32, #tpu.memory_space<vmem>>, vector<1x8x32xf32>
    %3 = vector.shape_cast %2 : vector<1x8x32xf32> to vector<8x32xf32>
    %c0_5 = arith.constant 0 : index
    %c0_6 = arith.constant 0 : index
    %c0_7 = arith.constant 0 : index
    %4 = vector.load %arg4[%c0_5, %c0_6, %c0_7] : memref<1x1x8xf32, #tpu.memory_space<vmem>>, vector<1x1x8xf32>
    %5 = arith.truncf %1 : vector<8x32xf32> to vector<8x32xbf16>
    %6 = arith.truncf %3 : vector<8x32xf32> to vector<8x32xbf16>
    %c0_8 = arith.constant 0 : index
    %c0_9 = arith.constant 0 : index
    %7 = vector.load %arg5[%c0_8, %c0_9] : memref<32x32xbf16, #tpu.memory_space<vmem>>, vector<32x32xbf16>
    %cst = arith.constant dense<0.000000e+00> : vector<8x32xf32>
    %8 = tpu.matmul %5, %7, %cst {dimension_numbers = #tpu.dot_dimension_numbers<[1], [0], [0], [1], [0, 0, 1, 1], [], []>} : vector<8x32xbf16>, vector<32x32xbf16>, vector<8x32xf32> -> vector<8x32xf32>
    %c0_10 = arith.constant 0 : index
    %c0_11 = arith.constant 0 : index
    %9 = vector.load %arg6[%c0_10, %c0_11] : memref<1x32xf32, #tpu.memory_space<vmem>>, vector<1x32xf32>
    %10 = vector.broadcast %9 : vector<1x32xf32> to vector<8x32xf32>
    %11 = arith.addf %8, %10 : vector<8x32xf32>
    %c0_12 = arith.constant 0 : index
    %c0_13 = arith.constant 0 : index
    %12 = vector.load %arg7[%c0_12, %c0_13] : memref<32x64xbf16, #tpu.memory_space<vmem>>, vector<32x64xbf16>
    %cst_14 = arith.constant dense<0.000000e+00> : vector<8x64xf32>
    %13 = tpu.matmul %6, %12, %cst_14 {dimension_numbers = #tpu.dot_dimension_numbers<[1], [0], [0], [1], [0, 0, 1, 1], [], []>} : vector<8x32xbf16>, vector<32x64xbf16>, vector<8x64xf32> -> vector<8x64xf32>
    %c0_15 = arith.constant 0 : index
    %c0_16 = arith.constant 0 : index
    %14 = vector.load %arg8[%c0_15, %c0_16] : memref<1x64xf32, #tpu.memory_space<vmem>>, vector<1x64xf32>
    %15 = vector.broadcast %14 : vector<1x64xf32> to vector<8x64xf32>
    %16 = arith.addf %13, %15 : vector<8x64xf32>
    %17 = arith.truncf %11 : vector<8x32xf32> to vector<8x32xbf16>
    %18 = vector.shape_cast %17 : vector<8x32xbf16> to vector<8x4x8xbf16>
    %19 = tpu.transpose %18, [1, 0, 2] : vector<8x4x8xbf16> -> vector<4x8x8xbf16>
    %20 = vector.extract_strided_slice %16 {offsets = [0, 0], sizes = [8, 32], strides = [1, 1]} : vector<8x64xf32> to vector<8x32xf32>
    %21 = arith.truncf %20 : vector<8x32xf32> to vector<8x32xbf16>
    %22 = vector.shape_cast %21 : vector<8x32xbf16> to vector<8x4x8xbf16>
    %23 = tpu.transpose %22, [1, 0, 2] : vector<8x4x8xbf16> -> vector<4x8x8xbf16>
    %24 = vector.extract_strided_slice %16 {offsets = [0, 32], sizes = [8, 32], strides = [1, 1]} : vector<8x64xf32> to vector<8x32xf32>
    %25 = arith.truncf %24 : vector<8x32xf32> to vector<8x32xbf16>
    %26 = vector.shape_cast %25 : vector<8x32xbf16> to vector<8x4x8xbf16>
    %27 = tpu.transpose %26, [1, 0, 2] : vector<8x4x8xbf16> -> vector<4x8x8xbf16>
    %cst_17 = arith.constant dense<0.000000e+00> : vector<4x8x8xf32>
    %28 = tpu.matmul %19, %23, %cst_17 {dimension_numbers = #tpu.dot_dimension_numbers<[2], [2], [1], [1], [0, 0, 0, 1, 1, 1], [0], [0]>} : vector<4x8x8xbf16>, vector<4x8x8xbf16>, vector<4x8x8xf32> -> vector<4x8x8xf32>
    %29 = vector.broadcast %4 : vector<1x1x8xf32> to vector<4x8x8xf32>
    %30 = arith.addf %28, %29 : vector<4x8x8xf32>
    %cst_18 = arith.constant dense<0xFF800000> : vector<4x8xf32>
    %31 = vector.multi_reduction <maximumf>, %30, %cst_18 [2] : vector<4x8x8xf32> to vector<4x8xf32>
    %32 = vector.shape_cast %31 : vector<4x8xf32> to vector<4x8x1xf32>
    %33 = vector.broadcast %32 : vector<4x8x1xf32> to vector<4x8x8xf32>
    %34 = arith.subf %30, %33 : vector<4x8x8xf32>
    %35 = math.exp %34 : vector<4x8x8xf32>
    %cst_19 = arith.constant dense<0.000000e+00> : vector<4x8xf32>
    %36 = vector.multi_reduction <add>, %35, %cst_19 [2] : vector<4x8x8xf32> to vector<4x8xf32>
    %37 = vector.shape_cast %36 : vector<4x8xf32> to vector<4x8x1xf32>
    %38 = tpu.reciprocal %37 {approx = true} : vector<4x8x1xf32> -> vector<4x8x1xf32>
    %39 = vector.broadcast %38 : vector<4x8x1xf32> to vector<4x8x8xf32>
    %40 = arith.mulf %35, %39 : vector<4x8x8xf32>
    %41 = arith.truncf %40 : vector<4x8x8xf32> to vector<4x8x8xbf16>
    %cst_20 = arith.constant dense<0.000000e+00> : vector<4x8x8xf32>
    %42 = tpu.matmul %41, %27, %cst_20 {dimension_numbers = #tpu.dot_dimension_numbers<[2], [1], [1], [2], [0, 0, 0, 1, 1, 2], [0], [0]>} : vector<4x8x8xbf16>, vector<4x8x8xbf16>, vector<4x8x8xf32> -> vector<4x8x8xf32>
    %43 = tpu.transpose %42, [1, 0, 2] : vector<4x8x8xf32> -> vector<8x4x8xf32>
    %44 = vector.shape_cast %43 : vector<8x4x8xf32> to vector<8x32xf32>
    %45 = arith.truncf %44 : vector<8x32xf32> to vector<8x32xbf16>
    %c0_21 = arith.constant 0 : index
    %c0_22 = arith.constant 0 : index
    %46 = vector.load %arg9[%c0_21, %c0_22] : memref<32x32xbf16, #tpu.memory_space<vmem>>, vector<32x32xbf16>
    %cst_23 = arith.constant dense<0.000000e+00> : vector<8x32xf32>
    %47 = tpu.matmul %45, %46, %cst_23 {dimension_numbers = #tpu.dot_dimension_numbers<[1], [0], [0], [1], [0, 0, 1, 1], [], []>} : vector<8x32xbf16>, vector<32x32xbf16>, vector<8x32xf32> -> vector<8x32xf32>
    %c0_24 = arith.constant 0 : index
    %c0_25 = arith.constant 0 : index
    %48 = vector.load %arg10[%c0_24, %c0_25] : memref<1x32xf32, #tpu.memory_space<vmem>>, vector<1x32xf32>
    %49 = vector.broadcast %48 : vector<1x32xf32> to vector<8x32xf32>
    %50 = arith.addf %47, %49 : vector<8x32xf32>
    %51 = arith.addf %50, %1 : vector<8x32xf32>
    %c0_26 = arith.constant 0 : index
    %c0_27 = arith.constant 0 : index
    %52 = vector.load %arg11[%c0_26, %c0_27] : memref<1x32xf32, #tpu.memory_space<vmem>>, vector<1x32xf32>
    %c0_28 = arith.constant 0 : index
    %c0_29 = arith.constant 0 : index
    %53 = vector.load %arg12[%c0_28, %c0_29] : memref<1x32xf32, #tpu.memory_space<vmem>>, vector<1x32xf32>
    %cst_30 = arith.constant dense<0.000000e+00> : vector<8xf32>
    %54 = vector.multi_reduction <add>, %51, %cst_30 [1] : vector<8x32xf32> to vector<8xf32>
    %55 = vector.shape_cast %54 : vector<8xf32> to vector<8x1xf32>
    %cst_31 = arith.constant 3.200000e+01 : f32
    %56 = vector.broadcast %cst_31 : f32 to vector<8x1xf32>
    %57 = arith.divf %55, %56 : vector<8x1xf32>
    %58 = vector.broadcast %57 : vector<8x1xf32> to vector<8x32xf32>
    %59 = arith.subf %51, %58 : vector<8x32xf32>
    %60 = arith.mulf %59, %59 : vector<8x32xf32>
    %cst_32 = arith.constant dense<0.000000e+00> : vector<8xf32>
    %61 = vector.multi_reduction <add>, %60, %cst_32 [1] : vector<8x32xf32> to vector<8xf32>
    %62 = vector.shape_cast %61 : vector<8xf32> to vector<8x1xf32>
    %cst_33 = arith.constant 3.200000e+01 : f32
    %63 = vector.broadcast %cst_33 : f32 to vector<8x1xf32>
    %64 = arith.divf %62, %63 : vector<8x1xf32>
    %cst_34 = arith.constant 9.99999996E-13 : f32
    %65 = vector.broadcast %cst_34 : f32 to vector<8x1xf32>
    %66 = arith.addf %64, %65 : vector<8x1xf32>
    %67 = math.rsqrt %66 : vector<8x1xf32>
    %68 = vector.broadcast %67 : vector<8x1xf32> to vector<8x32xf32>
    %69 = arith.mulf %59, %68 : vector<8x32xf32>
    %70 = vector.broadcast %52 : vector<1x32xf32> to vector<8x32xf32>
    %71 = arith.mulf %69, %70 : vector<8x32xf32>
    %72 = vector.broadcast %53 : vector<1x32xf32> to vector<8x32xf32>
    %73 = arith.addf %71, %72 : vector<8x32xf32>
    %74 = arith.truncf %73 : vector<8x32xf32> to vector<8x32xbf16>
    %c0_35 = arith.constant 0 : index
    %c0_36 = arith.constant 0 : index
    %75 = vector.load %arg13[%c0_35, %c0_36] : memref<32x64xbf16, #tpu.memory_space<vmem>>, vector<32x64xbf16>
    %cst_37 = arith.constant dense<0.000000e+00> : vector<8x64xf32>
    %76 = tpu.matmul %74, %75, %cst_37 {dimension_numbers = #tpu.dot_dimension_numbers<[1], [0], [0], [1], [0, 0, 1, 1], [], []>} : vector<8x32xbf16>, vector<32x64xbf16>, vector<8x64xf32> -> vector<8x64xf32>
    %c0_38 = arith.constant 0 : index
    %c0_39 = arith.constant 0 : index
    %77 = vector.load %arg14[%c0_38, %c0_39] : memref<1x64xf32, #tpu.memory_space<vmem>>, vector<1x64xf32>
    %78 = vector.broadcast %77 : vector<1x64xf32> to vector<8x64xf32>
    %79 = arith.addf %76, %78 : vector<8x64xf32>
    %cst_40 = arith.constant 5.000000e-01 : f32
    %80 = vector.broadcast %cst_40 : f32 to vector<8x64xf32>
    %81 = arith.mulf %80, %79 : vector<8x64xf32>
    %cst_41 = arith.constant 4.471500e-02 : f32
    %82 = vector.broadcast %cst_41 : f32 to vector<8x64xf32>
    %83 = arith.mulf %82, %79 : vector<8x64xf32>
    %84 = arith.mulf %83, %79 : vector<8x64xf32>
    %85 = arith.mulf %84, %79 : vector<8x64xf32>
    %86 = arith.addf %79, %85 : vector<8x64xf32>
    %cst_42 = arith.constant 0.797884583 : f32
    %87 = vector.broadcast %cst_42 : f32 to vector<8x64xf32>
    %88 = arith.mulf %87, %86 : vector<8x64xf32>
    %89 = math.tanh %88 : vector<8x64xf32>
    %cst_43 = arith.constant 1.000000e+00 : f32
    %90 = vector.broadcast %cst_43 : f32 to vector<8x64xf32>
    %91 = arith.addf %90, %89 : vector<8x64xf32>
    %92 = arith.mulf %81, %91 : vector<8x64xf32>
    %93 = arith.truncf %92 : vector<8x64xf32> to vector<8x64xbf16>
    %c0_44 = arith.constant 0 : index
    %c0_45 = arith.constant 0 : index
    %94 = vector.load %arg15[%c0_44, %c0_45] : memref<64x32xbf16, #tpu.memory_space<vmem>>, vector<64x32xbf16>
    %cst_46 = arith.constant dense<0.000000e+00> : vector<8x32xf32>
    %95 = tpu.matmul %93, %94, %cst_46 {dimension_numbers = #tpu.dot_dimension_numbers<[1], [0], [0], [1], [0, 0, 1, 1], [], []>} : vector<8x64xbf16>, vector<64x32xbf16>, vector<8x32xf32> -> vector<8x32xf32>
    %c0_47 = arith.constant 0 : index
    %c0_48 = arith.constant 0 : index
    %96 = vector.load %arg16[%c0_47, %c0_48] : memref<1x32xf32, #tpu.memory_space<vmem>>, vector<1x32xf32>
    %97 = vector.broadcast %96 : vector<1x32xf32> to vector<8x32xf32>
    %98 = arith.addf %95, %97 : vector<8x32xf32>
    %99 = arith.addf %98, %73 : vector<8x32xf32>
    %c0_49 = arith.constant 0 : index
    %c0_50 = arith.constant 0 : index
    %100 = vector.load %arg17[%c0_49, %c0_50] : memref<1x32xf32, #tpu.memory_space<vmem>>, vector<1x32xf32>
    %c0_51 = arith.constant 0 : index
    %c0_52 = arith.constant 0 : index
    %101 = vector.load %arg18[%c0_51, %c0_52] : memref<1x32xf32, #tpu.memory_space<vmem>>, vector<1x32xf32>
    %cst_53 = arith.constant dense<0.000000e+00> : vector<8xf32>
    %102 = vector.multi_reduction <add>, %99, %cst_53 [1] : vector<8x32xf32> to vector<8xf32>
    %103 = vector.shape_cast %102 : vector<8xf32> to vector<8x1xf32>
    %cst_54 = arith.constant 3.200000e+01 : f32
    %104 = vector.broadcast %cst_54 : f32 to vector<8x1xf32>
    %105 = arith.divf %103, %104 : vector<8x1xf32>
    %106 = vector.broadcast %105 : vector<8x1xf32> to vector<8x32xf32>
    %107 = arith.subf %99, %106 : vector<8x32xf32>
    %108 = arith.mulf %107, %107 : vector<8x32xf32>
    %cst_55 = arith.constant dense<0.000000e+00> : vector<8xf32>
    %109 = vector.multi_reduction <add>, %108, %cst_55 [1] : vector<8x32xf32> to vector<8xf32>
    %110 = vector.shape_cast %109 : vector<8xf32> to vector<8x1xf32>
    %cst_56 = arith.constant 3.200000e+01 : f32
    %111 = vector.broadcast %cst_56 : f32 to vector<8x1xf32>
    %112 = arith.divf %110, %111 : vector<8x1xf32>
    %cst_57 = arith.constant 9.99999996E-13 : f32
    %113 = vector.broadcast %cst_57 : f32 to vector<8x1xf32>
    %114 = arith.addf %112, %113 : vector<8x1xf32>
    %115 = math.rsqrt %114 : vector<8x1xf32>
    %116 = vector.broadcast %115 : vector<8x1xf32> to vector<8x32xf32>
    %117 = arith.mulf %107, %116 : vector<8x32xf32>
    %118 = vector.broadcast %100 : vector<1x32xf32> to vector<8x32xf32>
    %119 = arith.mulf %117, %118 : vector<8x32xf32>
    %120 = vector.broadcast %101 : vector<1x32xf32> to vector<8x32xf32>
    %121 = arith.addf %119, %120 : vector<8x32xf32>
    %122 = arith.truncf %121 : vector<8x32xf32> to vector<8x32xbf16>
    %c0_58 = arith.constant 0 : index
    %c0_59 = arith.constant 0 : index
    %c0_60 = arith.constant 0 : index
    %123 = vector.load %arg19[%c0_58, %c0_59, %c0_60] : memref<1x8x32xbf16, #tpu.memory_space<vmem>>, vector<1x8x32xbf16>
    %124 = vector.shape_cast %123 : vector<1x8x32xbf16> to vector<8x32xbf16>
    %125 = vector.shape_cast %122 : vector<8x32xbf16> to vector<1x8x32xbf16>
    tpu.vector_store %arg19[%c0_58, %c0_59, %c0_60], %125 {strides = array<i32>} : memref<1x8x32xbf16, #tpu.memory_space<vmem>>, vector<1x8x32xbf16>,
    return
  }
  func.func @transform_0(%arg0: i32, %arg1: i32) -> (i32, i32, i32) {
    %c0_i32 = arith.constant 0 : i32
    %c0_i32_0 = arith.constant 0 : i32
    return %arg0, %arg1, %c0_i32 : i32, i32, i32
  }
  func.func @transform_1(%arg0: i32, %arg1: i32) -> (i32, i32, i32) {
    %c0_i32 = arith.constant 0 : i32
    %c0_i32_0 = arith.constant 0 : i32
    %c0_i32_1 = arith.constant 0 : i32
    return %arg0, %c0_i32, %c0_i32_0 : i32, i32, i32
  }
  func.func @transform_2(%arg0: i32, %arg1: i32) -> (i32, i32, i32) {
    %c0_i32 = arith.constant 0 : i32
    %c0_i32_0 = arith.constant 0 : i32
    %c0_i32_1 = arith.constant 0 : i32
    return %arg0, %c0_i32, %c0_i32_0 : i32, i32, i32
  }
  func.func @transform_3(%arg0: i32, %arg1: i32) -> (i32, i32) {
    %c0_i32 = arith.constant 0 : i32
    %c0_i32_0 = arith.constant 0 : i32
    %c0_i32_1 = arith.constant 0 : i32
    return %c0_i32, %c0_i32_0 : i32, i32
  }
  func.func @transform_4(%arg0: i32, %arg1: i32) -> (i32, i32) {
    %c0_i32 = arith.constant 0 : i32
    %c0_i32_0 = arith.constant 0 : i32
    %c0_i32_1 = arith.constant 0 : i32
    return %c0_i32, %c0_i32_0 : i32, i32
  }
  func.func @transform_5(%arg0: i32, %arg1: i32) -> (i32, i32) {
    %c0_i32 = arith.constant 0 : i32
    %c0_i32_0 = arith.constant 0 : i32
    %c0_i32_1 = arith.constant 0 : i32
    return %c0_i32, %c0_i32_0 : i32, i32
  }
  func.func @transform_6(%arg0: i32, %arg1: i32) -> (i32, i32) {
    %c0_i32 = arith.constant 0 : i32
    %c0_i32_0 = arith.constant 0 : i32
    %c0_i32_1 = arith.constant 0 : i32
    return %c0_i32, %c0_i32_0 : i32, i32
  }
  func.func @transform_7(%arg0: i32, %arg1: i32) -> (i32, i32) {
    %c0_i32 = arith.constant 0 : i32
    %c0_i32_0 = arith.constant 0 : i32
    %c0_i32_1 = arith.constant 0 : i32
    return %c0_i32, %c0_i32_0 : i32, i32
  }
  func.func @transform_8(%arg0: i32, %arg1: i32) -> (i32, i32) {
    %c0_i32 = arith.constant 0 : i32
    %c0_i32_0 = arith.constant 0 : i32
    %c0_i32_1 = arith.constant 0 : i32
    return %c0_i32, %c0_i32_0 : i32, i32
  }
  func.func @transform_9(%arg0: i32, %arg1: i32) -> (i32, i32) {
    %c0_i32 = arith.constant 0 : i32
    %c0_i32_0 = arith.constant 0 : i32
    %c0_i32_1 = arith.constant 0 : i32
    return %c0_i32, %c0_i32_0 : i32, i32
  }
  func.func @transform_10(%arg0: i32, %arg1: i32) -> (i32, i32) {
    %c0_i32 = arith.constant 0 : i32
    %c0_i32_0 = arith.constant 0 : i32
    %c0_i32_1 = arith.constant 0 : i32
    return %c0_i32, %c0_i32_0 : i32, i32
  }
  func.func @transform_11(%arg0: i32, %arg1: i32) -> (i32, i32) {
    %c0_i32 = arith.constant 0 : i32
    %c0_i32_0 = arith.constant 0 : i32
    %c0_i32_1 = arith.constant 0 : i32
    return %c0_i32, %c0_i32_0 : i32, i32
  }
  func.func @transform_12(%arg0: i32, %arg1: i32) -> (i32, i32) {
    %c0_i32 = arith.constant 0 : i32
    %c0_i32_0 = arith.constant 0 : i32
    %c0_i32_1 = arith.constant 0 : i32
    return %c0_i32, %c0_i32_0 : i32, i32
  }
  func.func @transform_13(%arg0: i32, %arg1: i32) -> (i32, i32) {
    %c0_i32 = arith.constant 0 : i32
    %c0_i32_0 = arith.constant 0 : i32
    %c0_i32_1 = arith.constant 0 : i32
    return %c0_i32, %c0_i32_0 : i32, i32
  }
  func.func @transform_14(%arg0: i32, %arg1: i32) -> (i32, i32) {
    %c0_i32 = arith.constant 0 : i32
    %c0_i32_0 = arith.constant 0 : i32
    %c0_i32_1 = arith.constant 0 : i32
    return %c0_i32, %c0_i32_0 : i32, i32
  }
  func.func @transform_15(%arg0: i32, %arg1: i32) -> (i32, i32) {
    %c0_i32 = arith.constant 0 : i32
    %c0_i32_0 = arith.constant 0 : i32
    %c0_i32_1 = arith.constant 0 : i32
    return %c0_i32, %c0_i32_0 : i32, i32
  }
  func.func @transform_16(%arg0: i32, %arg1: i32) -> (i32, i32) {
    %c0_i32 = arith.constant 0 : i32
    %c0_i32_0 = arith.constant 0 : i32
    %c0_i32_1 = arith.constant 0 : i32
    return %c0_i32, %c0_i32_0 : i32, i32
  }
  func.func @transform_17(%arg0: i32, %arg1: i32) -> (i32, i32, i32) {
    %c0_i32 = arith.constant 0 : i32
    %c0_i32_0 = arith.constant 0 : i32
    return %arg0, %arg1, %c0_i32 : i32, i32, i32
  }
}

</mosaic_0001>

<llo_original>
// kernel: tpu_custom_call.1
$region0: #{tpu_custom_call.1}
  #allocation0 [shape = 'u32[]', space=smem, size = 0x4, offset = 0x4, fixed_abs, tag = 'smem constant byte address 0x4 - core index']
  #allocation1 [shape = 'u32[144,128]{1,0:T(1,128)}', space=vmem, size = 0x12000, scoped, tag = 'internal scratch']
  %s0 = inlined_call_operand.vmem [shape: f32[2,8,32], index: 0, kind: input, shape index: {}]
  %s1 = inlined_call_operand.vmem [shape: f32[2,8,32], index: 1, kind: input, shape index: {}]
  %s2 = inlined_call_operand.vmem [shape: f32[2,1,8], index: 2, kind: input, shape index: {}]
  %s3 = inlined_call_operand.vmem [shape: bf16[32,32], index: 3, kind: input, shape index: {}]
  %s4 = inlined_call_operand.hbm [shape: f32[1,32], index: 4, kind: input, shape index: {}]
  %s5 = inlined_call_operand.hbm [shape: bf16[32,64], index: 5, kind: input, shape index: {}]
  %s6 = inlined_call_operand.hbm [shape: f32[1,64], index: 6, kind: input, shape index: {}]
  %s7 = inlined_call_operand.hbm [shape: bf16[32,32], index: 7, kind: input, shape index: {}]
  %s8 = inlined_call_operand.hbm [shape: f32[1,32], index: 8, kind: input, shape index: {}]
  %s9 = inlined_call_operand.hbm [shape: f32[1,32], index: 9, kind: input, shape index: {}]
  %s10 = inlined_call_operand.vmem [shape: f32[1,32], index: 10, kind: input, shape index: {}]
  %s11 = inlined_call_operand.vmem [shape: bf16[32,64], index: 11, kind: input, shape index: {}]
  %s12 = inlined_call_operand.vmem [shape: f32[1,64], index: 12, kind: input, shape index: {}]
  %s13 = inlined_call_operand.vmem [shape: bf16[64,32], index: 13, kind: input, shape index: {}]
  %s14 = inlined_call_operand.vmem [shape: f32[1,32], index: 14, kind: input, shape index: {}]
  %s15 = inlined_call_operand.vmem [shape: f32[1,32], index: 15, kind: input, shape index: {}]
  %s16 = inlined_call_operand.vmem [shape: f32[1,32], index: 16, kind: input, shape index: {}]
  %s17 = inlined_call_operand.hbm [shape: bf16[2,8,32], index: 17, kind: output, shape index: {}]
  %s18 = sld [smem:[#allocation0]]
  $region125: #{tpu_custom_call.1} parent=0
    _
  %s20 = ssub.s32 1, %s18
  %s21 = scalar_select 0, %s20, %s18
  $region1: #{tpu_custom_call.1} parent=0
    #allocation2 [shape = 'u8[512]{0}', space=vmem, size = 0x400, scoped, tag = 'input window, operand 4, single buffered']
    #allocation3 [shape = 's32[2]{0}', space=sflag, size = 0x8, scoped, tag = 'scoped memory for tpu_custom_call.1']
    #allocation4 [shape = 's32[2]{0}', space=sflag, size = 0x8, scoped, tag = 'scoped memory for tpu_custom_call.1']
    #allocation5 [shape = 'u8[8192]{0}', space=vmem, size = 0x2000, scoped, tag = 'input window, operand 5, single buffered']
    #allocation6 [shape = 's32[1]{0}', space=sflag, size = 0x4, scoped, tag = 'scoped memory for tpu_custom_call.1']
    #allocation7 [shape = 'u8[512]{0}', space=vmem, size = 0x400, scoped, tag = 'input window, operand 6, single buffered']
    #allocation8 [shape = 'u8[8192]{0}', space=vmem, size = 0x2000, scoped, tag = 'input window, operand 7, single buffered']
    #allocation9 [shape = 's32[1]{0}', space=sflag, size = 0x4, scoped, tag = 'scoped memory for tpu_custom_call.1']
    #allocation10 [shape = 'u8[512]{0}', space=vmem, size = 0x400, scoped, tag = 'input window, operand 8, single buffered']
    #allocation11 [shape = 'u8[512]{0}', space=vmem, size = 0x400, scoped, tag = 'input window, operand 9, single buffered']
    #allocation12 [shape = 's32[1]{0}', space=sflag, size = 0x4, scoped, tag = 'scoped memory for tpu_custom_call.1']
    #allocation13 [shape = 'u8[4096]{0}', space=vmem, size = 0x1000, scoped, tag = 'output window, operand 0']
    %22 = vsyncpa [#allocation3], 0
    %23 = vsyncpa [#allocation6], 0
    %24 = vsyncpa [#allocation9], 0
    %25 = vsyncpa [#allocation12], 0
    %26 = vsyncpa [#allocation4], 0
    %s27 = scalar_lea.sflag [#allocation4], 1
    %28 = vsyncpa %s27, 0
    loop: start=0, step=1, limit=4
    $region2: #{tpu_custom_call.1} parent=1 // loop_pre_header
      _
    $region3: #{tpu_custom_call.1} parent=1 // loop_header
      %s30 = sphi 0, %s34
      %p31 = scmp.ge.s32.totalorder %s30, 4
      %s37 = sphi 0, %s49
      %s38 = sphi 0, %s45
      %s39 = sphi 0, %s37
      %s40 = sphi 0, %s38
      %s41 = sphi 0, %s39
      %s42 = sphi 0, %s40
      %s54 = sphi 0, %s56
      %s57 = sphi 0, %s54
      %s58 = sphi 0, %s57
      %s74 = sphi 0, %s58
      %s80 = sphi 0, %s82
      %s83 = sphi 0, %s80
      %s84 = sphi 0, %s83
      %s100 = sphi 0, %s84
      %s106 = sphi 0, %s108
      %s109 = sphi 0, %s106
      %s110 = sphi 0, %s109
      %s126 = sphi 0, %s110
      %s130 = sphi 0, %s130
      %s132 = sphi 0, %s130
      %s133 = sphi 0, %s132
      %s147 = sphi 0, %s133
      %s151 = sphi 0, %s151
      %s153 = sphi 0, %s151
      %s154 = sphi 0, %s153
      %s168 = sphi 0, %s154
      %s172 = sphi 0, %s172
      %s174 = sphi 0, %s172
      %s175 = sphi 0, %s174
      %s189 = sphi 0, %s175
      %s193 = sphi 0, %s193
      %s195 = sphi 0, %s193
      %s196 = sphi 0, %s195
      %s210 = sphi 0, %s196
      %s214 = sphi 0, %s214
      %s216 = sphi 0, %s214
      %s217 = sphi 0, %s216
      %s231 = sphi 0, %s217
      %s235 = sphi 0, %s235
      %s237 = sphi 0, %s235
      %s238 = sphi 0, %s237
      %s252 = sphi 0, %s238
      %s256 = sphi 0, %s256
      %s258 = sphi 0, %s256
      %s259 = sphi 0, %s258
      %s273 = sphi 0, %s259
      %s277 = sphi 0, %s277
      %s279 = sphi 0, %s277
      %s280 = sphi 0, %s279
      %s294 = sphi 0, %s280
      %s298 = sphi 0, %s298
      %s300 = sphi 0, %s298
      %s301 = sphi 0, %s300
      %s315 = sphi 0, %s301
      %s319 = sphi 0, %s319
      %s321 = sphi 0, %s319
      %s322 = sphi 0, %s321
      %s336 = sphi 0, %s322
      %s340 = sphi 0, %s340
      %s342 = sphi 0, %s340
      %s343 = sphi 0, %s342
      %s357 = sphi 0, %s343
      %s361 = sphi 0, %s361
      %s363 = sphi 0, %s361
      %s364 = sphi 0, %s363
      %s378 = sphi 0, %s364
      %s382 = sphi 0, %s382
      %s384 = sphi 0, %s382
      %s385 = sphi 0, %s384
      %s399 = sphi 0, %s385
      %s403 = sphi 0, %s403
      %s405 = sphi 0, %s403
      %s406 = sphi 0, %s405
      %s420 = sphi 0, %s406
      %s428 = sphi 0, %s430
      %s431 = sphi 0, %s428
      %s432 = sphi 0, %s431
      %s448 = sphi 0, %s432
    $region4: #{tpu_custom_call.1} parent=1 // loop_header_branch
      %33 = sbr.rel (%p31) target = $region8
    $region5: #{tpu_custom_call.1} parent=1 // loop_body
      %s35 = ssub.s32 %s30, 1
      %s36 = ssub.s32 %s30, 2
      %s43 = sadd.s32 1, %s38
      %p44 = scmp.ge.s32.totalorder %s43, 1
      %s45 = scalar_select %p44, 0, %s43
      %s46 = sadd.s32 1, %s37
      %s47 = scalar_select %p44, %s46, %s37
      %p48 = scmp.ge.s32.totalorder %s47, 2
      %s49 = scalar_select %p48, 0, %s47
      %s50 = ssub.s32 %s37, %s49
      %s51 = ssub.s32 %s38, %s45
      %s52 = sor.u32 %s50, %s51
      %p53 = scmp.eq.s32.totalorder %s52, 0
      %s55 = sadd.s32 %s54, 1
      %s56 = scalar_select %p53, %s54, %s55
      %p59 = pneg %p53
      %p60 = scmp.eq.s32.totalorder %s30, 1
      %p61 = por %p59, %p60
      %p62 = scmp.ne.s32.totalorder %s54, %s57
      %p63 = scmp.eq.s32.totalorder %s30, 0
      %p64 = por %p62, %p63
      %p65 = scmp.ne.s32.totalorder %s54, %s57
      %p66 = scmp.eq.s32.totalorder %s35, 1
      %p67 = por %p65, %p66
      %p68 = scmp.ne.s32.totalorder %s57, %s58
      %p69 = scmp.eq.s32.totalorder %s35, 0
      %p70 = por %p68, %p69
      %p71 = scmp.ne.s32.totalorder %s57, %s58
      %p72 = scmp.eq.s32.totalorder %s36, 1
      %p73 = por %p71, %p72
      %p75 = scmp.ne.s32.totalorder %s58, %s74
      %p76 = scmp.eq.s32.totalorder %s36, 0
      %p77 = por %p75, %p76
      %s78 = ssub.s32 %s37, %s49
      %p79 = scmp.eq.s32.totalorder %s78, 0
      %s81 = sadd.s32 %s80, 1
      %s82 = scalar_select %p79, %s80, %s81
      %p85 = pneg %p79
      %p86 = scmp.eq.s32.totalorder %s30, 1
      %p87 = por %p85, %p86
      %p88 = scmp.ne.s32.totalorder %s80, %s83
      %p89 = scmp.eq.s32.totalorder %s30, 0
      %p90 = por %p88, %p89
      %p91 = scmp.ne.s32.totalorder %s80, %s83
      %p92 = scmp.eq.s32.totalorder %s35, 1
      %p93 = por %p91, %p92
      %p94 = scmp.ne.s32.totalorder %s83, %s84
      %p95 = scmp.eq.s32.totalorder %s35, 0
      %p96 = por %p94, %p95
      %p97 = scmp.ne.s32.totalorder %s83, %s84
      %p98 = scmp.eq.s32.totalorder %s36, 1
      %p99 = por %p97, %p98
      %p101 = scmp.ne.s32.totalorder %s84, %s100
      %p102 = scmp.eq.s32.totalorder %s36, 0
      %p103 = por %p101, %p102
      %s104 = ssub.s32 %s37, %s49
      %p105 = scmp.eq.s32.totalorder %s104, 0
      %s107 = sadd.s32 %s106, 1
      %s108 = scalar_select %p105, %s106, %s107
      %p111 = pneg %p105
      %p112 = scmp.eq.s32.totalorder %s30, 1
      %p113 = por %p111, %p112
      %p114 = scmp.ne.s32.totalorder %s106, %s109
      %p115 = scmp.eq.s32.totalorder %s30, 0
      %p116 = por %p114, %p115
      %p117 = scmp.ne.s32.totalorder %s106, %s109
      %p118 = scmp.eq.s32.totalorder %s35, 1
      %p119 = por %p117, %p118
      %p120 = scmp.ne.s32.totalorder %s109, %s110
      %p121 = scmp.eq.s32.totalorder %s35, 0
      %p122 = por %p120, %p121
      %p123 = scmp.ne.s32.totalorder %s109, %s110
      %p124 = scmp.eq.s32.totalorder %s36, 1
      %p125 = por %p123, %p124
      %p127 = scmp.ne.s32.totalorder %s110, %s126
      %p128 = scmp.eq.s32.totalorder %s36, 0
      %p129 = por %p127, %p128
      %s131 = sadd.s32 %s130, 1
      %p134 = scmp.eq.s32.totalorder %s30, 1
      %p135 = scmp.ne.s32.totalorder %s130, %s132
      %p136 = scmp.eq.s32.totalorder %s30, 0
      %p137 = por %p135, %p136
      %p138 = scmp.ne.s32.totalorder %s130, %s132
      %p139 = scmp.eq.s32.totalorder %s35, 1
      %p140 = por %p138, %p139
      %p141 = scmp.ne.s32.totalorder %s132, %s133
      %p142 = scmp.eq.s32.totalorder %s35, 0
      %p143 = por %p141, %p142
      %p144 = scmp.ne.s32.totalorder %s132, %s133
      %p145 = scmp.eq.s32.totalorder %s36, 1
      %p146 = por %p144, %p145
      %p148 = scmp.ne.s32.totalorder %s133, %s147
      %p149 = scmp.eq.s32.totalorder %s36, 0
      %p150 = por %p148, %p149
      %s152 = sadd.s32 %s151, 1
      %p155 = scmp.eq.s32.totalorder %s30, 1
      %p156 = scmp.ne.s32.totalorder %s151, %s153
      %p157 = scmp.eq.s32.totalorder %s30, 0
      %p158 = por %p156, %p157
      %p159 = scmp.ne.s32.totalorder %s151, %s153
      %p160 = scmp.eq.s32.totalorder %s35, 1
      %p161 = por %p159, %p160
      %p162 = scmp.ne.s32.totalorder %s153, %s154
      %p163 = scmp.eq.s32.totalorder %s35, 0
      %p164 = por %p162, %p163
      %p165 = scmp.ne.s32.totalorder %s153, %s154
      %p166 = scmp.eq.s32.totalorder %s36, 1
      %p167 = por %p165, %p166
      %p169 = scmp.ne.s32.totalorder %s154, %s168
      %p170 = scmp.eq.s32.totalorder %s36, 0
      %p171 = por %p169, %p170
      %s173 = sadd.s32 %s172, 1
      %p176 = scmp.eq.s32.totalorder %s30, 1
      %p177 = scmp.ne.s32.totalorder %s172, %s174
      %p178 = scmp.eq.s32.totalorder %s30, 0
      %p179 = por %p177, %p178
      %p180 = scmp.ne.s32.totalorder %s172, %s174
      %p181 = scmp.eq.s32.totalorder %s35, 1
      %p182 = por %p180, %p181
      %p183 = scmp.ne.s32.totalorder %s174, %s175
      %p184 = scmp.eq.s32.totalorder %s35, 0
      %p185 = por %p183, %p184
      %p186 = scmp.ne.s32.totalorder %s174, %s175
      %p187 = scmp.eq.s32.totalorder %s36, 1
      %p188 = por %p186, %p187
      %p190 = scmp.ne.s32.totalorder %s175, %s189
      %p191 = scmp.eq.s32.totalorder %s36, 0
      %p192 = por %p190, %p191
      %s194 = sadd.s32 %s193, 1
      %p197 = scmp.eq.s32.totalorder %s30, 1
      %p198 = scmp.ne.s32.totalorder %s193, %s195
      %p199 = scmp.eq.s32.totalorder %s30, 0
      %p200 = por %p198, %p199
      %p201 = scmp.ne.s32.totalorder %s193, %s195
      %p202 = scmp.eq.s32.totalorder %s35, 1
      %p203 = por %p201, %p202
      %p204 = scmp.ne.s32.totalorder %s195, %s196
      %p205 = scmp.eq.s32.totalorder %s35, 0
      %p206 = por %p204, %p205
      %p207 = scmp.ne.s32.totalorder %s195, %s196
      %p208 = scmp.eq.s32.totalorder %s36, 1
      %p209 = por %p207, %p208
      %p211 = scmp.ne.s32.totalorder %s196, %s210
      %p212 = scmp.eq.s32.totalorder %s36, 0
      %p213 = por %p211, %p212
      %s215 = sadd.s32 %s214, 1
      %p218 = scmp.eq.s32.totalorder %s30, 1
      %p219 = scmp.ne.s32.totalorder %s214, %s216
      %p220 = scmp.eq.s32.totalorder %s30, 0
      %p221 = por %p219, %p220
      %p222 = scmp.ne.s32.totalorder %s214, %s216
      %p223 = scmp.eq.s32.totalorder %s35, 1
      %p224 = por %p222, %p223
      %p225 = scmp.ne.s32.totalorder %s216, %s217
      %p226 = scmp.eq.s32.totalorder %s35, 0
      %p227 = por %p225, %p226
      %p228 = scmp.ne.s32.totalorder %s216, %s217
      %p229 = scmp.eq.s32.totalorder %s36, 1
      %p230 = por %p228, %p229
      %p232 = scmp.ne.s32.totalorder %s217, %s231
      %p233 = scmp.eq.s32.totalorder %s36, 0
      %p234 = por %p232, %p233
      %s236 = sadd.s32 %s235, 1
      %p239 = scmp.eq.s32.totalorder %s30, 1
      %p240 = scmp.ne.s32.totalorder %s235, %s237
      %p241 = scmp.eq.s32.totalorder %s30, 0
      %p242 = por %p240, %p241
      %p243 = scmp.ne.s32.totalorder %s235, %s237
      %p244 = scmp.eq.s32.totalorder %s35, 1
      %p245 = por %p243, %p244
      %p246 = scmp.ne.s32.totalorder %s237, %s238
      %p247 = scmp.eq.s32.totalorder %s35, 0
      %p248 = por %p246, %p247
      %p249 = scmp.ne.s32.totalorder %s237, %s238
      %p250 = scmp.eq.s32.totalorder %s36, 1
      %p251 = por %p249, %p250
      %p253 = scmp.ne.s32.totalorder %s238, %s252
      %p254 = scmp.eq.s32.totalorder %s36, 0
      %p255 = por %p253, %p254
      %s257 = sadd.s32 %s256, 1
      %p260 = scmp.eq.s32.totalorder %s30, 1
      %p261 = scmp.ne.s32.totalorder %s256, %s258
      %p262 = scmp.eq.s32.totalorder %s30, 0
      %p263 = por %p261, %p262
      %p264 = scmp.ne.s32.totalorder %s256, %s258
      %p265 = scmp.eq.s32.totalorder %s35, 1
      %p266 = por %p264, %p265
      %p267 = scmp.ne.s32.totalorder %s258, %s259
      %p268 = scmp.eq.s32.totalorder %s35, 0
      %p269 = por %p267, %p268
      %p270 = scmp.ne.s32.totalorder %s258, %s259
      %p271 = scmp.eq.s32.totalorder %s36, 1
      %p272 = por %p270, %p271
      %p274 = scmp.ne.s32.totalorder %s259, %s273
      %p275 = scmp.eq.s32.totalorder %s36, 0
      %p276 = por %p274, %p275
      %s278 = sadd.s32 %s277, 1
      %p281 = scmp.eq.s32.totalorder %s30, 1
      %p282 = scmp.ne.s32.totalorder %s277, %s279
      %p283 = scmp.eq.s32.totalorder %s30, 0
      %p284 = por %p282, %p283
      %p285 = scmp.ne.s32.totalorder %s277, %s279
      %p286 = scmp.eq.s32.totalorder %s35, 1
      %p287 = por %p285, %p286
      %p288 = scmp.ne.s32.totalorder %s279, %s280
      %p289 = scmp.eq.s32.totalorder %s35, 0
      %p290 = por %p288, %p289
      %p291 = scmp.ne.s32.totalorder %s279, %s280
      %p292 = scmp.eq.s32.totalorder %s36, 1
      %p293 = por %p291, %p292
      %p295 = scmp.ne.s32.totalorder %s280, %s294
      %p296 = scmp.eq.s32.totalorder %s36, 0
      %p297 = por %p295, %p296
      %s299 = sadd.s32 %s298, 1
      %p302 = scmp.eq.s32.totalorder %s30, 1
      %p303 = scmp.ne.s32.totalorder %s298, %s300
      %p304 = scmp.eq.s32.totalorder %s30, 0
      %p305 = por %p303, %p304
      %p306 = scmp.ne.s32.totalorder %s298, %s300
      %p307 = scmp.eq.s32.totalorder %s35, 1
      %p308 = por %p306, %p307
      %p309 = scmp.ne.s32.totalorder %s300, %s301
      %p310 = scmp.eq.s32.totalorder %s35, 0
      %p311 = por %p309, %p310
      %p312 = scmp.ne.s32.totalorder %s300, %s301
      %p313 = scmp.eq.s32.totalorder %s36, 1
      %p314 = por %p312, %p313
      %p316 = scmp.ne.s32.totalorder %s301, %s315
      %p317 = scmp.eq.s32.totalorder %s36, 0
      %p318 = por %p316, %p317
      %s320 = sadd.s32 %s319, 1
      %p323 = scmp.eq.s32.totalorder %s30, 1
      %p324 = scmp.ne.s32.totalorder %s319, %s321
      %p325 = scmp.eq.s32.totalorder %s30, 0
      %p326 = por %p324, %p325
      %p327 = scmp.ne.s32.totalorder %s319, %s321
      %p328 = scmp.eq.s32.totalorder %s35, 1
      %p329 = por %p327, %p328
      %p330 = scmp.ne.s32.totalorder %s321, %s322
      %p331 = scmp.eq.s32.totalorder %s35, 0
      %p332 = por %p330, %p331
      %p333 = scmp.ne.s32.totalorder %s321, %s322
      %p334 = scmp.eq.s32.totalorder %s36, 1
      %p335 = por %p333, %p334
      %p337 = scmp.ne.s32.totalorder %s322, %s336
      %p338 = scmp.eq.s32.totalorder %s36, 0
      %p339 = por %p337, %p338
      %s341 = sadd.s32 %s340, 1
      %p344 = scmp.eq.s32.totalorder %s30, 1
      %p345 = scmp.ne.s32.totalorder %s340, %s342
      %p346 = scmp.eq.s32.totalorder %s30, 0
      %p347 = por %p345, %p346
      %p348 = scmp.ne.s32.totalorder %s340, %s342
      %p349 = scmp.eq.s32.totalorder %s35, 1
      %p350 = por %p348, %p349
      %p351 = scmp.ne.s32.totalorder %s342, %s343
      %p352 = scmp.eq.s32.totalorder %s35, 0
      %p353 = por %p351, %p352
      %p354 = scmp.ne.s32.totalorder %s342, %s343
      %p355 = scmp.eq.s32.totalorder %s36, 1
      %p356 = por %p354, %p355
      %p358 = scmp.ne.s32.totalorder %s343, %s357
      %p359 = scmp.eq.s32.totalorder %s36, 0
      %p360 = por %p358, %p359
      %s362 = sadd.s32 %s361, 1
      %p365 = scmp.eq.s32.totalorder %s30, 1
      %p366 = scmp.ne.s32.totalorder %s361, %s363
      %p367 = scmp.eq.s32.totalorder %s30, 0
      %p368 = por %p366, %p367
      %p369 = scmp.ne.s32.totalorder %s361, %s363
      %p370 = scmp.eq.s32.totalorder %s35, 1
      %p371 = por %p369, %p370
      %p372 = scmp.ne.s32.totalorder %s363, %s364
      %p373 = scmp.eq.s32.totalorder %s35, 0
      %p374 = por %p372, %p373
      %p375 = scmp.ne.s32.totalorder %s363, %s364
      %p376 = scmp.eq.s32.totalorder %s36, 1
      %p377 = por %p375, %p376
      %p379 = scmp.ne.s32.totalorder %s364, %s378
      %p380 = scmp.eq.s32.totalorder %s36, 0
      %p381 = por %p379, %p380
      %s383 = sadd.s32 %s382, 1
      %p386 = scmp.eq.s32.totalorder %s30, 1
      %p387 = scmp.ne.s32.totalorder %s382, %s384
      %p388 = scmp.eq.s32.totalorder %s30, 0
      %p389 = por %p387, %p388
      %p390 = scmp.ne.s32.totalorder %s382, %s384
      %p391 = scmp.eq.s32.totalorder %s35, 1
      %p392 = por %p390, %p391
      %p393 = scmp.ne.s32.totalorder %s384, %s385
      %p394 = scmp.eq.s32.totalorder %s35, 0
      %p395 = por %p393, %p394
      %p396 = scmp.ne.s32.totalorder %s384, %s385
      %p397 = scmp.eq.s32.totalorder %s36, 1
      %p398 = por %p396, %p397
      %p400 = scmp.ne.s32.totalorder %s385, %s399
      %p401 = scmp.eq.s32.totalorder %s36, 0
      %p402 = por %p400, %p401
      %s404 = sadd.s32 %s403, 1
      %p407 = scmp.eq.s32.totalorder %s30, 1
      %p408 = scmp.ne.s32.totalorder %s403, %s405
      %p409 = scmp.eq.s32.totalorder %s30, 0
      %p410 = por %p408, %p409
      %p411 = scmp.ne.s32.totalorder %s403, %s405
      %p412 = scmp.eq.s32.totalorder %s35, 1
      %p413 = por %p411, %p412
      %p414 = scmp.ne.s32.totalorder %s405, %s406
      %p415 = scmp.eq.s32.totalorder %s35, 0
      %p416 = por %p414, %p415
      %p417 = scmp.ne.s32.totalorder %s405, %s406
      %p418 = scmp.eq.s32.totalorder %s36, 1
      %p419 = por %p417, %p418
      %p421 = scmp.ne.s32.totalorder %s406, %s420
      %p422 = scmp.eq.s32.totalorder %s36, 0
      %p423 = por %p421, %p422
      %s424 = ssub.s32 %s37, %s49
      %s425 = ssub.s32 %s38, %s45
      %s426 = sor.u32 %s424, %s425
      %p427 = scmp.eq.s32.totalorder %s426, 0
      %s429 = sadd.s32 %s428, 1
      %s430 = scalar_select %p427, %s428, %s429
      %p433 = pneg %p427
      %p434 = scmp.eq.s32.totalorder %s30, 1
      %p435 = por %p433, %p434
      %p436 = scmp.ne.s32.totalorder %s428, %s431
      %p437 = scmp.eq.s32.totalorder %s30, 0
      %p438 = por %p436, %p437
      %p439 = scmp.ne.s32.totalorder %s428, %s431
      %p440 = scmp.eq.s32.totalorder %s35, 1
      %p441 = por %p439, %p440
      %p442 = scmp.ne.s32.totalorder %s431, %s432
      %p443 = scmp.eq.s32.totalorder %s35, 0
      %p444 = por %p442, %p443
      %p445 = scmp.ne.s32.totalorder %s431, %s432
      %p446 = scmp.eq.s32.totalorder %s36, 1
      %p447 = por %p445, %p446
      %p449 = scmp.ne.s32.totalorder %s432, %s448
      %p450 = scmp.eq.s32.totalorder %s36, 0
      %p451 = por %p449, %p450
      %p452 = scmp.le.s32.totalorder 1, %s30
      %p453 = scmp.lt.s32.totalorder %s30, 3
      %p454 = pnand %p452, %p453
      %p455 = pneg %p454
      // Predicated region
      $region9: #{tpu_custom_call.1} parent=5 // pred_check
        _
      $region10: #{tpu_custom_call.1} parent=5 // pred_check_branch
        %457 = sbr.rel (%p454) target = $region12
      $region11: #{tpu_custom_call.1} parent=5 // pred_region
        %s458 = ssub.s32 %s30, 1
        // Predicated region
        $region13: #{tpu_custom_call.1} parent=11 // pred_check
          %p459 = pneg %p143
        $region14: #{tpu_custom_call.1} parent=11 // pred_check_branch
          %461 = sbr.rel (%p459) target = $region16
        $region15: #{tpu_custom_call.1} parent=11 // pred_region
          _
        $region16: #{tpu_custom_call.1} parent=11 // pred_fallthru
          _
        // Predicated region
        $region17: #{tpu_custom_call.1} parent=11 // pred_check
          %p462 = pneg %p164
        $region18: #{tpu_custom_call.1} parent=11 // pred_check_branch
          %464 = sbr.rel (%p462) target = $region20
        $region19: #{tpu_custom_call.1} parent=11 // pred_region
          %s466 = ssub.s32 16, 16
          %467 = vsyncadd [#allocation3], %s466
          %s469 = sshll.u32 [#allocation2], 4
          %s470 = int_to_ptr.vmem [resolvable:$true] %s469
          %472 = dma.hbm_to_vmem [thread:$0]  %s4, 16, %s470, [#allocation3]
        $region20: #{tpu_custom_call.1} parent=11 // pred_fallthru
          _
        // Predicated region
        $region21: #{tpu_custom_call.1} parent=11 // pred_check
          %p473 = pneg %p185
        $region22: #{tpu_custom_call.1} parent=11 // pred_check_branch
          %475 = sbr.rel (%p473) target = $region24
        $region23: #{tpu_custom_call.1} parent=11 // pred_region
          %s477 = ssub.s32 256, 256
          %478 = vsyncadd [#allocation6], %s477
          %s479 = sshll.u32 [#allocation5], 4
          %s480 = int_to_ptr.vmem [resolvable:$true] %s479
          %485 = dma.hbm_to_vmem [thread:$0]  %s5, 256, %s480, [#allocation6], 64, 64, 4
        $region24: #{tpu_custom_call.1} parent=11 // pred_fallthru
          _
        // Predicated region
        $region25: #{tpu_custom_call.1} parent=11 // pred_check
          %p486 = pneg %p206
        $region26: #{tpu_custom_call.1} parent=11 // pred_check_branch
          %488 = sbr.rel (%p486) target = $region28
        $region27: #{tpu_custom_call.1} parent=11 // pred_region
          %s490 = ssub.s32 16, 16
          %491 = vsyncadd [#allocation6], %s490
          %s493 = sshll.u32 [#allocation7], 4
          %s494 = int_to_ptr.vmem [resolvable:$true] %s493
          %496 = dma.hbm_to_vmem [thread:$0]  %s6, 16, %s494, [#allocation6]
        $region28: #{tpu_custom_call.1} parent=11 // pred_fallthru
          _
        // Predicated region
        $region29: #{tpu_custom_call.1} parent=11 // pred_check
          %p497 = pneg %p227
        $region30: #{tpu_custom_call.1} parent=11 // pred_check_branch
          %499 = sbr.rel (%p497) target = $region32
        $region31: #{tpu_custom_call.1} parent=11 // pred_region
          %s501 = ssub.s32 256, 256
          %502 = vsyncadd [#allocation9], %s501
          %s503 = sshll.u32 [#allocation8], 4
          %s504 = int_to_ptr.vmem [resolvable:$true] %s503
          %509 = dma.hbm_to_vmem [thread:$0]  %s7, 256, %s504, [#allocation9], 64, 64, 4
        $region32: #{tpu_custom_call.1} parent=11 // pred_fallthru
          _
        // Predicated region
        $region33: #{tpu_custom_call.1} parent=11 // pred_check
          %p510 = pneg %p248
        $region34: #{tpu_custom_call.1} parent=11 // pred_check_branch
          %512 = sbr.rel (%p510) target = $region36
        $region35: #{tpu_custom_call.1} parent=11 // pred_region
          %s514 = ssub.s32 16, 16
          %515 = vsyncadd [#allocation9], %s514
          %s517 = sshll.u32 [#allocation10], 4
          %s518 = int_to_ptr.vmem [resolvable:$true] %s517
          %520 = dma.hbm_to_vmem [thread:$0]  %s8, 16, %s518, [#allocation9]
        $region36: #{tpu_custom_call.1} parent=11 // pred_fallthru
          _
        // Predicated region
        $region37: #{tpu_custom_call.1} parent=11 // pred_check
          %p521 = pneg %p269
        $region38: #{tpu_custom_call.1} parent=11 // pred_check_branch
          %523 = sbr.rel (%p521) target = $region40
        $region39: #{tpu_custom_call.1} parent=11 // pred_region
          %s525 = ssub.s32 16, 16
          %526 = vsyncadd [#allocation12], %s525
          %s528 = sshll.u32 [#allocation11], 4
          %s529 = int_to_ptr.vmem [resolvable:$true] %s528
          %531 = dma.hbm_to_vmem [thread:$0]  %s9, 16, %s529, [#allocation12]
        $region40: #{tpu_custom_call.1} parent=11 // pred_fallthru
          _
        // Predicated region
        $region41: #{tpu_custom_call.1} parent=11 // pred_check
          %p532 = pneg %p290
        $region42: #{tpu_custom_call.1} parent=11 // pred_check_branch
          %534 = sbr.rel (%p532) target = $region44
        $region43: #{tpu_custom_call.1} parent=11 // pred_region
          _
        $region44: #{tpu_custom_call.1} parent=11 // pred_fallthru
          _
        // Predicated region
        $region45: #{tpu_custom_call.1} parent=11 // pred_check
          %p535 = pneg %p311
        $region46: #{tpu_custom_call.1} parent=11 // pred_check_branch
          %537 = sbr.rel (%p535) target = $region48
        $region47: #{tpu_custom_call.1} parent=11 // pred_region
          _
        $region48: #{tpu_custom_call.1} parent=11 // pred_fallthru
          _
        // Predicated region
        $region49: #{tpu_custom_call.1} parent=11 // pred_check
          %p538 = pneg %p332
        $region50: #{tpu_custom_call.1} parent=11 // pred_check_branch
          %540 = sbr.rel (%p538) target = $region52
        $region51: #{tpu_custom_call.1} parent=11 // pred_region
          _
        $region52: #{tpu_custom_call.1} parent=11 // pred_fallthru
          _
        // Predicated region
        $region53: #{tpu_custom_call.1} parent=11 // pred_check
          %p541 = pneg %p353
        $region54: #{tpu_custom_call.1} parent=11 // pred_check_branch
          %543 = sbr.rel (%p541) target = $region56
        $region55: #{tpu_custom_call.1} parent=11 // pred_region
          _
        $region56: #{tpu_custom_call.1} parent=11 // pred_fallthru
          _
        // Predicated region
        $region57: #{tpu_custom_call.1} parent=11 // pred_check
          %p544 = pneg %p374
        $region58: #{tpu_custom_call.1} parent=11 // pred_check_branch
          %546 = sbr.rel (%p544) target = $region60
        $region59: #{tpu_custom_call.1} parent=11 // pred_region
          _
        $region60: #{tpu_custom_call.1} parent=11 // pred_fallthru
          _
        // Predicated region
        $region61: #{tpu_custom_call.1} parent=11 // pred_check
          %p547 = pneg %p395
        $region62: #{tpu_custom_call.1} parent=11 // pred_check_branch
          %549 = sbr.rel (%p547) target = $region64
        $region63: #{tpu_custom_call.1} parent=11 // pred_region
          _
        $region64: #{tpu_custom_call.1} parent=11 // pred_fallthru
          _
        // Predicated region
        $region65: #{tpu_custom_call.1} parent=11 // pred_check
          %p550 = pneg %p416
        $region66: #{tpu_custom_call.1} parent=11 // pred_check_branch
          %552 = sbr.rel (%p550) target = $region68
        $region67: #{tpu_custom_call.1} parent=11 // pred_region
          _
        $region68: #{tpu_custom_call.1} parent=11 // pred_fallthru
          _
      $region12: #{tpu_custom_call.1} parent=5 // pred_fallthru
        _
      %p553 = scmp.lt.s32.totalorder %s30, 2
      // Predicated region
      $region69: #{tpu_custom_call.1} parent=5 // pred_check
        %p554 = pneg %p553
      $region70: #{tpu_custom_call.1} parent=5 // pred_check_branch
        %556 = sbr.rel (%p554) target = $region72
      $region71: #{tpu_custom_call.1} parent=5 // pred_region
        // Predicated region
        $region73: #{tpu_custom_call.1} parent=71 // pred_check
          %p557 = pneg %p64
        $region74: #{tpu_custom_call.1} parent=71 // pred_check_branch
          %559 = sbr.rel (%p557) target = $region76
        $region75: #{tpu_custom_call.1} parent=71 // pred_region
          %p560 = scmp.lt.s32.totalorder %s37, 1
          %s561 = scalar_select %p560, %s37, 1
          %p562 = scmp.lt.s32.totalorder %s38, 0
          %s563 = scalar_select %p562, %s38, 0
          %s564 = sadd.s32 %s563, %s561
          %s565 = smul.addr %s564, 8
          %s566 = scalar_lea.vmem %s0, %s565
        $region76: #{tpu_custom_call.1} parent=71 // pred_fallthru
          _
        // Predicated region
        $region77: #{tpu_custom_call.1} parent=71 // pred_check
          %p567 = pneg %p90
        $region78: #{tpu_custom_call.1} parent=71 // pred_check_branch
          %569 = sbr.rel (%p567) target = $region80
        $region79: #{tpu_custom_call.1} parent=71 // pred_region
          %p570 = scmp.lt.s32.totalorder %s37, 1
          %s571 = scalar_select %p570, %s37, 1
          %s572 = smul.addr %s571, 8
          %s573 = scalar_lea.vmem %s1, %s572
        $region80: #{tpu_custom_call.1} parent=71 // pred_fallthru
          _
        // Predicated region
        $region81: #{tpu_custom_call.1} parent=71 // pred_check
          %p574 = pneg %p116
        $region82: #{tpu_custom_call.1} parent=71 // pred_check_branch
          %576 = sbr.rel (%p574) target = $region84
        $region83: #{tpu_custom_call.1} parent=71 // pred_region
          %p577 = scmp.lt.s32.totalorder %s37, 1
          %s578 = scalar_select %p577, %s37, 1
          %s579 = scalar_lea.vmem %s2, %s578
        $region84: #{tpu_custom_call.1} parent=71 // pred_fallthru
          _
      $region72: #{tpu_custom_call.1} parent=5 // pred_fallthru
        _
      %p580 = scmp.le.s32.totalorder 1, %s30
      %p581 = scmp.lt.s32.totalorder %s30, 3
      %p582 = pnand %p580, %p581
      %p583 = pneg %p582
      // Predicated region
      $region85: #{tpu_custom_call.1} parent=5 // pred_check
        _
      $region86: #{tpu_custom_call.1} parent=5 // pred_check_branch
        %585 = sbr.rel (%p582) target = $region88
      $region87: #{tpu_custom_call.1} parent=5 // pred_region
        %s586 = ssub.s32 %s30, 1
        // Predicated region
        $region89: #{tpu_custom_call.1} parent=87 // pred_check
          %p587 = pneg %p164
        $region90: #{tpu_custom_call.1} parent=87 // pred_check_branch
          %589 = sbr.rel (%p587) target = $region92
        $region91: #{tpu_custom_call.1} parent=87 // pred_region
          %590 = dma.done [#allocation3], 16
        $region92: #{tpu_custom_call.1} parent=87 // pred_fallthru
          _
        // Predicated region
        $region93: #{tpu_custom_call.1} parent=87 // pred_check
          %p591 = pneg %p185
        $region94: #{tpu_custom_call.1} parent=87 // pred_check_branch
          %593 = sbr.rel (%p591) target = $region96
        $region95: #{tpu_custom_call.1} parent=87 // pred_region
          %594 = dma.done [#allocation6], 256
        $region96: #{tpu_custom_call.1} parent=87 // pred_fallthru
          _
        // Predicated region
        $region97: #{tpu_custom_call.1} parent=87 // pred_check
          %p595 = pneg %p206
        $region98: #{tpu_custom_call.1} parent=87 // pred_check_branch
          %597 = sbr.rel (%p595) target = $region100
        $region99: #{tpu_custom_call.1} parent=87 // pred_region
          %598 = dma.done [#allocation6], 16
        $region100: #{tpu_custom_call.1} parent=87 // pred_fallthru
          _
        // Predicated region
        $region101: #{tpu_custom_call.1} parent=87 // pred_check
          %p599 = pneg %p227
        $region102: #{tpu_custom_call.1} parent=87 // pred_check_branch
          %601 = sbr.rel (%p599) target = $region104
        $region103: #{tpu_custom_call.1} parent=87 // pred_region
          %602 = dma.done [#allocation9], 256
        $region104: #{tpu_custom_call.1} parent=87 // pred_fallthru
          _
        // Predicated region
        $region105: #{tpu_custom_call.1} parent=87 // pred_check
          %p603 = pneg %p248
        $region106: #{tpu_custom_call.1} parent=87 // pred_check_branch
          %605 = sbr.rel (%p603) target = $region108
        $region107: #{tpu_custom_call.1} parent=87 // pred_region
          %606 = dma.done [#allocation9], 16
        $region108: #{tpu_custom_call.1} parent=87 // pred_fallthru
          _
        // Predicated region
        $region109: #{tpu_custom_call.1} parent=87 // pred_check
          %p607 = pneg %p269
        $region110: #{tpu_custom_call.1} parent=87 // pred_check_branch
          %609 = sbr.rel (%p607) target = $region112
        $region111: #{tpu_custom_call.1} parent=87 // pred_region
          %610 = dma.done [#allocation12], 16
        $region112: #{tpu_custom_call.1} parent=87 // pred_fallthru
          _
        %p611 = scmp.lt.s32.totalorder %s39, 1
        %s612 = scalar_select %p611, %s39, 1
        %p613 = scmp.lt.s32.totalorder %s40, 0
        %s614 = scalar_select %p613, %s40, 0
        %s615 = sadd.s32 %s614, %s612
        %s616 = smul.addr %s615, 8
        %s617 = scalar_lea.vmem %s0, %s616
        %p618 = pneg %p70
        %p619 = pneg %p67
        %p620 = scmp.lt.s32.totalorder %s39, 1
        %s621 = scalar_select %p620, %s39, 1
        %s622 = smul.addr %s621, 8
        %s623 = scalar_lea.vmem %s1, %s622
        %p624 = pneg %p96
        %p625 = pneg %p93
        %p626 = scmp.lt.s32.totalorder %s39, 1
        %s627 = scalar_select %p626, %s39, 1
        %s628 = scalar_lea.vmem %s2, %s627
        %p629 = pneg %p122
        %p630 = pneg %p119
        %p631 = pneg %p143
        %p632 = pneg %p140
        %p633 = pneg %p164
        %p634 = pneg %p161
        %p635 = pneg %p185
        %p636 = pneg %p182
        %p637 = pneg %p206
        %p638 = pneg %p203
        %p639 = pneg %p227
        %p640 = pneg %p224
        %p641 = pneg %p248
        %p642 = pneg %p245
        %p643 = pneg %p269
        %p644 = pneg %p266
        %p645 = pneg %p290
        %p646 = pneg %p287
        %p647 = pneg %p311
        %p648 = pneg %p308
        %p649 = pneg %p332
        %p650 = pneg %p329
        %p651 = pneg %p353
        %p652 = pneg %p350
        %p653 = pneg %p374
        %p654 = pneg %p371
        %p655 = pneg %p395
        %p656 = pneg %p392
        %p657 = pneg %p416
        %p658 = pneg %p413
        %p659 = pneg %p444
        %p660 = pneg %p441
        %s661 = sand.u32 %s431, 1
        %s662 = scalar_lea.sflag [#allocation4], %s661
        %s663 = sand.u32 %s431, 1
        %s664 = smul.addr %s663, 4
        %s665 = scalar_lea.vmem [#allocation13], %s664
        %p666 = scmp.lt.s32.totalorder %s39, 1
        %s667 = scalar_select %p666, %s39, 1
        %p668 = scmp.lt.s32.totalorder %s40, 0
        %s669 = scalar_select %p668, %s40, 0
        %s670 = sadd.s32 %s669, %s667
        %s671 = smul.addr %s670, 8
        %s672 = scalar_lea.vmem %s0, %s671
        %p673 = scmp.lt.s32.totalorder %s39, 1
        %s674 = scalar_select %p673, %s39, 1
        %s675 = smul.addr %s674, 8
        %s676 = scalar_lea.vmem %s1, %s675
        %p677 = scmp.lt.s32.totalorder %s39, 1
        %s678 = scalar_select %p677, %s39, 1
        %s679 = scalar_lea.vmem %s2, %s678
        %v681 = vld [vmem:[%s672] sm:$0xff]
        %v682 = vld [vmem:[%s676] sm:$0xff]
        %v683 = vld [vmem:[%s679] sm:$0x1]
        %v684 = vpack.c.bf16 %v681, %v681
        %v685 = vpack.c.bf16 %v682, %v682
        %v686 = vld [vmem:[%s3] sm:$0xf]
        %v687 = vld [vmem:[%s3 + $0x4] sm:$0xf]
        %v688 = vld [vmem:[%s3 + $0x8] sm:$0xf]
        %v689 = vld [vmem:[%s3 + $0xc] sm:$0xf]
        %v690 = vld [vmem:[#allocation2] sm:$0x1]
        %v692 = vlaneseq
        %v693 = vshrl.u32 %v692, 7
        %v694 = vsub.s32 0, %v693
        %v695 = vrot.slane %v690, %v694
        %v701 = vunpack.c.l.b16 %v686
        %v702 = vunpack.c.l.b16 %v687
        %v703 = vunpack.c.l.b16 %v688
        %v704 = vunpack.c.l.b16 %v689
        %v705 = vpack.c.b16 %v702, %v701
        %v706 = vpack.c.b16 %v704, %v703
        %vm709 = vcmask 261120
        %v711 = vsel %vm709, %v684, 0
        %713 = vmatprep.subr.bf16.mxu0 0
        %714 = vmatpush1.bf16.msra.mxu0 %v705
        %715 = vmatprep.subr.bf16.mxu0 0
        %716 = vmatpush1.bf16.msra.mxu0 %v706
        %717 = vmatprep.subr.bf16.mxu0 0
        %718 = vmatpush1.bf16.msra.mxu0 0
        %719 = vmatprep.subr.bf16.mxu0 0
        %720 = vmatpush1.bf16.msra.mxu0 0
        %721 = vmatprep.subr.bf16.mxu0 0
        %722 = vmatpush1.bf16.msra.mxu0 0
        %723 = vmatprep.subr.bf16.mxu0 0
        %724 = vmatpush1.bf16.msra.mxu0 0
        %725 = vmatprep.subr.bf16.mxu0 0
        %726 = vmatpush1.bf16.msra.mxu0 0
        %727 = vmatprep.subr.bf16.mxu0 0
        %728 = vmatpush1.bf16.msra.mxu0 0
        %729 = vmatprep.subr.bf16.mxu0 0
        %730 = vmatpush1.bf16.msra.mxu0 0
        %731 = vmatprep.subr.bf16.mxu0 0
        %732 = vmatpush1.bf16.msra.mxu0 0
        %733 = vmatprep.subr.bf16.mxu0 0
        %734 = vmatpush1.bf16.msra.mxu0 0
        %735 = vmatprep.subr.bf16.mxu0 0
        %736 = vmatpush1.bf16.msra.mxu0 0
        %737 = vmatprep.subr.bf16.mxu0 0
        %738 = vmatpush1.bf16.msra.mxu0 0
        %739 = vmatprep.subr.bf16.mxu0 0
        %740 = vmatpush1.bf16.msra.mxu0 0
        %741 = vmatprep.subr.bf16.mxu0 0
        %742 = vmatpush1.bf16.msra.mxu0 0
        %743 = vmatprep.subr.bf16.mxu0 0
        %744 = vmatpush1.bf16.msra.mxu0 0
        %745 = vmatprep.mubr.bf16.mxu0 0
        %746 = vmatmul.mubr.bf16.gmra.mrb[0].mxu0 %v711
        %v747 = vpop.f32.mrb[0].mxu0
        %v748 = vadd.f32 %v695, %v747
        %v749 = vpop.f32.mrb[0].mxu0
        %v750 = vpop.f32.mrb[0].mxu0
        %v751 = vpop.f32.mrb[0].mxu0
        %752 = vdwg.mxu0
        %v753 = vld [vmem:[#allocation5] sm:$0xf]
        %v754 = vld [vmem:[#allocation5 + $0x4] sm:$0xf]
        %v755 = vld [vmem:[#allocation5 + $0x8] sm:$0xf]
        %v756 = vld [vmem:[#allocation5 + $0xc] sm:$0xf]
        %v757 = vld [vmem:[#allocation7] sm:$0x1]
        %v759 = vlaneseq
        %v760 = vshrl.u32 %v759, 7
        %v761 = vsub.s32 0, %v760
        %v762 = vrot.slane %v757, %v761
        %v768 = vunpack.c.l.b16 %v753
        %v769 = vunpack.c.l.b16 %v754
        %v770 = vunpack.c.l.b16 %v755
        %v771 = vunpack.c.l.b16 %v756
        %v772 = vpack.c.b16 %v769, %v768
        %v773 = vpack.c.b16 %v771, %v770
        %v777 = vsel %vm709, %v685, 0
        %779 = vmatprep.subr.bf16.mxu0 0
        %780 = vmatpush1.bf16.msra.mxu0 %v772
        %781 = vmatprep.subr.bf16.mxu0 0
        %782 = vmatpush1.bf16.msra.mxu0 %v773
        %783 = vmatprep.subr.bf16.mxu0 0
        %784 = vmatpush1.bf16.msra.mxu0 0
        %785 = vmatprep.subr.bf16.mxu0 0
        %786 = vmatpush1.bf16.msra.mxu0 0
        %787 = vmatprep.subr.bf16.mxu0 0
        %788 = vmatpush1.bf16.msra.mxu0 0
        %789 = vmatprep.subr.bf16.mxu0 0
        %790 = vmatpush1.bf16.msra.mxu0 0
        %791 = vmatprep.subr.bf16.mxu0 0
        %792 = vmatpush1.bf16.msra.mxu0 0
        %793 = vmatprep.subr.bf16.mxu0 0
        %794 = vmatpush1.bf16.msra.mxu0 0
        %795 = vmatprep.subr.bf16.mxu0 0
        %796 = vmatpush1.bf16.msra.mxu0 0
        %797 = vmatprep.subr.bf16.mxu0 0
        %798 = vmatpush1.bf16.msra.mxu0 0
        %799 = vmatprep.subr.bf16.mxu0 0
        %800 = vmatpush1.bf16.msra.mxu0 0
        %801 = vmatprep.subr.bf16.mxu0 0
        %802 = vmatpush1.bf16.msra.mxu0 0
        %803 = vmatprep.subr.bf16.mxu0 0
        %804 = vmatpush1.bf16.msra.mxu0 0
        %805 = vmatprep.subr.bf16.mxu0 0
        %806 = vmatpush1.bf16.msra.mxu0 0
        %807 = vmatprep.subr.bf16.mxu0 0
        %808 = vmatpush1.bf16.msra.mxu0 0
        %809 = vmatprep.subr.bf16.mxu0 0
        %810 = vmatpush1.bf16.msra.mxu0 0
        %811 = vmatprep.mubr.bf16.mxu0 0
        %812 = vmatmul.mubr.bf16.gmra.mrb[0].mxu0 %v777
        %v813 = vpop.f32.mrb[0].mxu0
        %v814 = vadd.f32 %v762, %v813
        %v815 = vpop.f32.mrb[0].mxu0
        %v816 = vpop.f32.mrb[0].mxu0
        %v817 = vpop.f32.mrb[0].mxu0
        %818 = vdwg.mxu0
        %v819 = vpack.c.bf16 %v748, %v748
        %821 = vrot.lane.b32.xlu0 %v819, 120
        %v822 = vpop.permute.xlu0 %821
        %823 = vrot.lane.b32.xlu0 %v819, 112
        %v824 = vpop.permute.xlu0 %823
        %825 = vrot.lane.b32.xlu0 %v819, 104
        %v826 = vpop.permute.xlu0 %825
        %v828 = vunpack.c.l.s4 1983009808
        %v829 = vunpack.c.0.s8 %v828
        %v830 = vlaneseq
        %v831 = vshrl.u32 %v830, 7
        %v832 = vsub.s32 %v829, %v831
        %v833 = vrot.slane %v819, %v832
        %v836 = vunpack.c.l.s4 1983009808
        %v837 = vunpack.c.0.s8 %v836
        %v838 = vlaneseq
        %v839 = vshrl.u32 %v838, 7
        %v840 = vsub.s32 %v837, %v839
        %v841 = vrot.slane %v824, %v840
        %v842 = vcombine.low %v833, %v841
        %v843 = vcombine.high %v833, %v841
        %v845 = vunpack.c.l.s4 1934713408
        %v846 = vunpack.c.0.s8 %v845
        %v847 = vlaneseq
        %v848 = vshrl.u32 %v847, 7
        %v849 = vsub.s32 %v846, %v848
        %v850 = vrot.slane %v842, %v849
        %v852 = vunpack.c.l.s4 1934713408
        %v853 = vunpack.c.0.s8 %v852
        %v854 = vlaneseq
        %v855 = vshrl.u32 %v854, 7
        %v856 = vsub.s32 %v853, %v855
        %v857 = vrot.slane %v843, %v856
        %v858 = vcombine.high %v850, 0
        %v859 = vcombine.high %v857, 0
        %v862 = vunpack.c.l.s4 1983009808
        %v863 = vunpack.c.0.s8 %v862
        %v864 = vlaneseq
        %v865 = vshrl.u32 %v864, 7
        %v866 = vsub.s32 %v863, %v865
        %v867 = vrot.slane %v822, %v866
        %v870 = vunpack.c.l.s4 1983009808
        %v871 = vunpack.c.0.s8 %v870
        %v872 = vlaneseq
        %v873 = vshrl.u32 %v872, 7
        %v874 = vsub.s32 %v871, %v873
        %v875 = vrot.slane %v826, %v874
        %v876 = vcombine.low %v867, %v875
        %v877 = vcombine.high %v867, %v875
        %v879 = vunpack.c.l.s4 1934713408
        %v880 = vunpack.c.0.s8 %v879
        %v881 = vlaneseq
        %v882 = vshrl.u32 %v881, 7
        %v883 = vsub.s32 %v880, %v882
        %v884 = vrot.slane %v876, %v883
        %v886 = vunpack.c.l.s4 1934713408
        %v887 = vunpack.c.0.s8 %v886
        %v888 = vlaneseq
        %v889 = vshrl.u32 %v888, 7
        %v890 = vsub.s32 %v887, %v889
        %v891 = vrot.slane %v877, %v890
        %v892 = vcombine.high %v884, 0
        %v893 = vcombine.high %v891, 0
        %v896 = vpack.i.b16 %v884, %v850
        %v898 = vshrl.u32 %v850, 16
        %v899 = vshrl.u32 %v884, 16
        %v900 = vpack.i.b16 %v899, %v898
        %v904 = vpack.i.b16 %v892, %v858
        %v906 = vshrl.u32 %v858, 16
        %v907 = vshrl.u32 %v892, 16
        %v908 = vpack.i.b16 %v907, %v906
        %v912 = vpack.i.b16 %v891, %v857
        %v914 = vshrl.u32 %v857, 16
        %v915 = vshrl.u32 %v891, 16
        %v916 = vpack.i.b16 %v915, %v914
        %v920 = vpack.i.b16 %v893, %v859
        %v922 = vshrl.u32 %v859, 16
        %v923 = vshrl.u32 %v893, 16
        %v924 = vpack.i.b16 %v923, %v922
        %v926 = vcombine.low %v896, %v912
        %v928 = vunpack.c.l.s4 1983009808
        %v929 = vunpack.c.0.s8 %v928
        %v930 = vlaneseq
        %v931 = vshrl.u32 %v930, 7
        %v932 = vsub.s32 %v929, %v931
        %v933 = vrot.slane %v926, %v932
        %v934 = vcombine.low %v904, %v920
        %v936 = vunpack.c.l.s4 1983009808
        %v937 = vunpack.c.0.s8 %v936
        %v938 = vlaneseq
        %v939 = vshrl.u32 %v938, 7
        %v940 = vsub.s32 %v937, %v939
        %v941 = vrot.slane %v934, %v940
        %v942 = vcombine.low %v933, %v941
        %v944 = vunpack.c.l.s4 1934713408
        %v945 = vunpack.c.0.s8 %v944
        %v946 = vlaneseq
        %v947 = vshrl.u32 %v946, 7
        %v948 = vsub.s32 %v945, %v947
        %v949 = vrot.slane %v942, %v948
        %v950 = vcombine.high %v949, 0
        %v951 = vcombine.low %v900, %v916
        %v953 = vunpack.c.l.s4 1983009808
        %v954 = vunpack.c.0.s8 %v953
        %v955 = vlaneseq
        %v956 = vshrl.u32 %v955, 7
        %v957 = vsub.s32 %v954, %v956
        %v958 = vrot.slane %v951, %v957
        %v959 = vcombine.low %v908, %v924
        %v961 = vunpack.c.l.s4 1983009808
        %v962 = vunpack.c.0.s8 %v961
        %v963 = vlaneseq
        %v964 = vshrl.u32 %v963, 7
        %v965 = vsub.s32 %v962, %v964
        %v966 = vrot.slane %v959, %v965
        %v967 = vcombine.low %v958, %v966
        %v969 = vunpack.c.l.s4 1934713408
        %v970 = vunpack.c.0.s8 %v969
        %v971 = vlaneseq
        %v972 = vshrl.u32 %v971, 7
        %v973 = vsub.s32 %v970, %v972
        %v974 = vrot.slane %v967, %v973
        %v975 = vcombine.high %v974, 0
        %v978 = vpack.i.b16 %v974, %v949
        %v979 = vshrl.u32 %v949, 16
        %v980 = vshrl.u32 %v974, 16
        %v981 = vpack.i.b16 %v980, %v979
        %v984 = vpack.i.b16 %v975, %v950
        %v985 = vshrl.u32 %v950, 16
        %v986 = vshrl.u32 %v975, 16
        %v987 = vpack.i.b16 %v986, %v985
        %v988 = vpack.c.bf16 %v814, %v814
        %990 = vrot.lane.b32.xlu0 %v988, 120
        %v991 = vpop.permute.xlu0 %990
        %992 = vrot.lane.b32.xlu0 %v988, 112
        %v993 = vpop.permute.xlu0 %992
        %994 = vrot.lane.b32.xlu0 %v988, 104
        %v995 = vpop.permute.xlu0 %994
        %v997 = vunpack.c.l.s4 1983009808
        %v998 = vunpack.c.0.s8 %v997
        %v999 = vlaneseq
        %v1000 = vshrl.u32 %v999, 7
        %v1001 = vsub.s32 %v998, %v1000
        %v1002 = vrot.slane %v988, %v1001
        %v1005 = vunpack.c.l.s4 1983009808
        %v1006 = vunpack.c.0.s8 %v1005
        %v1007 = vlaneseq
        %v1008 = vshrl.u32 %v1007, 7
        %v1009 = vsub.s32 %v1006, %v1008
        %v1010 = vrot.slane %v993, %v1009
        %v1011 = vcombine.low %v1002, %v1010
        %v1012 = vcombine.high %v1002, %v1010
        %v1014 = vunpack.c.l.s4 1934713408
        %v1015 = vunpack.c.0.s8 %v1014
        %v1016 = vlaneseq
        %v1017 = vshrl.u32 %v1016, 7
        %v1018 = vsub.s32 %v1015, %v1017
        %v1019 = vrot.slane %v1011, %v1018
        %v1021 = vunpack.c.l.s4 1934713408
        %v1022 = vunpack.c.0.s8 %v1021
        %v1023 = vlaneseq
        %v1024 = vshrl.u32 %v1023, 7
        %v1025 = vsub.s32 %v1022, %v1024
        %v1026 = vrot.slane %v1012, %v1025
        %v1027 = vcombine.high %v1019, 0
        %v1028 = vcombine.high %v1026, 0
        %v1031 = vunpack.c.l.s4 1983009808
        %v1032 = vunpack.c.0.s8 %v1031
        %v1033 = vlaneseq
        %v1034 = vshrl.u32 %v1033, 7
        %v1035 = vsub.s32 %v1032, %v1034
        %v1036 = vrot.slane %v991, %v1035
        %v1039 = vunpack.c.l.s4 1983009808
        %v1040 = vunpack.c.0.s8 %v1039
        %v1041 = vlaneseq
        %v1042 = vshrl.u32 %v1041, 7
        %v1043 = vsub.s32 %v1040, %v1042
        %v1044 = vrot.slane %v995, %v1043
        %v1045 = vcombine.low %v1036, %v1044
        %v1046 = vcombine.high %v1036, %v1044
        %v1048 = vunpack.c.l.s4 1934713408
        %v1049 = vunpack.c.0.s8 %v1048
        %v1050 = vlaneseq
        %v1051 = vshrl.u32 %v1050, 7
        %v1052 = vsub.s32 %v1049, %v1051
        %v1053 = vrot.slane %v1045, %v1052
        %v1055 = vunpack.c.l.s4 1934713408
        %v1056 = vunpack.c.0.s8 %v1055
        %v1057 = vlaneseq
        %v1058 = vshrl.u32 %v1057, 7
        %v1059 = vsub.s32 %v1056, %v1058
        %v1060 = vrot.slane %v1046, %v1059
        %v1061 = vcombine.high %v1053, 0
        %v1062 = vcombine.high %v1060, 0
        %v1065 = vpack.i.b16 %v1053, %v1019
        %v1067 = vshrl.u32 %v1019, 16
        %v1068 = vshrl.u32 %v1053, 16
        %v1069 = vpack.i.b16 %v1068, %v1067
        %v1073 = vpack.i.b16 %v1061, %v1027
        %v1075 = vshrl.u32 %v1027, 16
        %v1076 = vshrl.u32 %v1061, 16
        %v1077 = vpack.i.b16 %v1076, %v1075
        %v1081 = vpack.i.b16 %v1060, %v1026
        %v1083 = vshrl.u32 %v1026, 16
        %v1084 = vshrl.u32 %v1060, 16
        %v1085 = vpack.i.b16 %v1084, %v1083
        %v1089 = vpack.i.b16 %v1062, %v1028
        %v1091 = vshrl.u32 %v1028, 16
        %v1092 = vshrl.u32 %v1062, 16
        %v1093 = vpack.i.b16 %v1092, %v1091
        %v1095 = vcombine.low %v1065, %v1081
        %v1097 = vunpack.c.l.s4 1983009808
        %v1098 = vunpack.c.0.s8 %v1097
        %v1099 = vlaneseq
        %v1100 = vshrl.u32 %v1099, 7
        %v1101 = vsub.s32 %v1098, %v1100
        %v1102 = vrot.slane %v1095, %v1101
        %v1103 = vcombine.low %v1073, %v1089
        %v1105 = vunpack.c.l.s4 1983009808
        %v1106 = vunpack.c.0.s8 %v1105
        %v1107 = vlaneseq
        %v1108 = vshrl.u32 %v1107, 7
        %v1109 = vsub.s32 %v1106, %v1108
        %v1110 = vrot.slane %v1103, %v1109
        %v1111 = vcombine.low %v1102, %v1110
        %v1113 = vunpack.c.l.s4 1934713408
        %v1114 = vunpack.c.0.s8 %v1113
        %v1115 = vlaneseq
        %v1116 = vshrl.u32 %v1115, 7
        %v1117 = vsub.s32 %v1114, %v1116
        %v1118 = vrot.slane %v1111, %v1117
        %v1119 = vcombine.high %v1118, 0
        %v1120 = vcombine.low %v1069, %v1085
        %v1122 = vunpack.c.l.s4 1983009808
        %v1123 = vunpack.c.0.s8 %v1122
        %v1124 = vlaneseq
        %v1125 = vshrl.u32 %v1124, 7
        %v1126 = vsub.s32 %v1123, %v1125
        %v1127 = vrot.slane %v1120, %v1126
        %v1128 = vcombine.low %v1077, %v1093
        %v1130 = vunpack.c.l.s4 1983009808
        %v1131 = vunpack.c.0.s8 %v1130
        %v1132 = vlaneseq
        %v1133 = vshrl.u32 %v1132, 7
        %v1134 = vsub.s32 %v1131, %v1133
        %v1135 = vrot.slane %v1128, %v1134
        %v1136 = vcombine.low %v1127, %v1135
        %v1138 = vunpack.c.l.s4 1934713408
        %v1139 = vunpack.c.0.s8 %v1138
        %v1140 = vlaneseq
        %v1141 = vshrl.u32 %v1140, 7
        %v1142 = vsub.s32 %v1139, %v1141
        %v1143 = vrot.slane %v1136, %v1142
        %v1144 = vcombine.high %v1143, 0
        %v1147 = vpack.i.b16 %v1143, %v1118
        %v1148 = vshrl.u32 %v1118, 16
        %v1149 = vshrl.u32 %v1143, 16
        %v1150 = vpack.i.b16 %v1149, %v1148
        %v1153 = vpack.i.b16 %v1144, %v1119
        %v1154 = vshrl.u32 %v1119, 16
        %v1155 = vshrl.u32 %v1144, 16
        %v1156 = vpack.i.b16 %v1155, %v1154
        %1157 = vrot.lane.b32.xlu0 %v988, 96
        %v1158 = vpop.permute.xlu0 %1157
        %1159 = vrot.lane.b32.xlu0 %v991, 96
        %v1160 = vpop.permute.xlu0 %1159
        %1161 = vrot.lane.b32.xlu0 %v993, 96
        %v1162 = vpop.permute.xlu0 %1161
        %1163 = vrot.lane.b32.xlu0 %v995, 96
        %v1164 = vpop.permute.xlu0 %1163
        %v1167 = vunpack.c.l.s4 1983009808
        %v1168 = vunpack.c.0.s8 %v1167
        %v1169 = vlaneseq
        %v1170 = vshrl.u32 %v1169, 7
        %v1171 = vsub.s32 %v1168, %v1170
        %v1172 = vrot.slane %v1158, %v1171
        %v1175 = vunpack.c.l.s4 1983009808
        %v1176 = vunpack.c.0.s8 %v1175
        %v1177 = vlaneseq
        %v1178 = vshrl.u32 %v1177, 7
        %v1179 = vsub.s32 %v1176, %v1178
        %v1180 = vrot.slane %v1162, %v1179
        %v1181 = vcombine.low %v1172, %v1180
        %v1182 = vcombine.high %v1172, %v1180
        %v1184 = vunpack.c.l.s4 1934713408
        %v1185 = vunpack.c.0.s8 %v1184
        %v1186 = vlaneseq
        %v1187 = vshrl.u32 %v1186, 7
        %v1188 = vsub.s32 %v1185, %v1187
        %v1189 = vrot.slane %v1181, %v1188
        %v1191 = vunpack.c.l.s4 1934713408
        %v1192 = vunpack.c.0.s8 %v1191
        %v1193 = vlaneseq
        %v1194 = vshrl.u32 %v1193, 7
        %v1195 = vsub.s32 %v1192, %v1194
        %v1196 = vrot.slane %v1182, %v1195
        %v1197 = vcombine.high %v1189, 0
        %v1198 = vcombine.high %v1196, 0
        %v1201 = vunpack.c.l.s4 1983009808
        %v1202 = vunpack.c.0.s8 %v1201
        %v1203 = vlaneseq
        %v1204 = vshrl.u32 %v1203, 7
        %v1205 = vsub.s32 %v1202, %v1204
        %v1206 = vrot.slane %v1160, %v1205
        %v1209 = vunpack.c.l.s4 1983009808
        %v1210 = vunpack.c.0.s8 %v1209
        %v1211 = vlaneseq
        %v1212 = vshrl.u32 %v1211, 7
        %v1213 = vsub.s32 %v1210, %v1212
        %v1214 = vrot.slane %v1164, %v1213
        %v1215 = vcombine.low %v1206, %v1214
        %v1216 = vcombine.high %v1206, %v1214
        %v1218 = vunpack.c.l.s4 1934713408
        %v1219 = vunpack.c.0.s8 %v1218
        %v1220 = vlaneseq
        %v1221 = vshrl.u32 %v1220, 7
        %v1222 = vsub.s32 %v1219, %v1221
        %v1223 = vrot.slane %v1215, %v1222
        %v1225 = vunpack.c.l.s4 1934713408
        %v1226 = vunpack.c.0.s8 %v1225
        %v1227 = vlaneseq
        %v1228 = vshrl.u32 %v1227, 7
        %v1229 = vsub.s32 %v1226, %v1228
        %v1230 = vrot.slane %v1216, %v1229
        %v1231 = vcombine.high %v1223, 0
        %v1232 = vcombine.high %v1230, 0
        %v1235 = vpack.i.b16 %v1223, %v1189
        %v1237 = vshrl.u32 %v1189, 16
        %v1238 = vshrl.u32 %v1223, 16
        %v1239 = vpack.i.b16 %v1238, %v1237
        %v1243 = vpack.i.b16 %v1231, %v1197
        %v1245 = vshrl.u32 %v1197, 16
        %v1246 = vshrl.u32 %v1231, 16
        %v1247 = vpack.i.b16 %v1246, %v1245
        %v1251 = vpack.i.b16 %v1230, %v1196
        %v1253 = vshrl.u32 %v1196, 16
        %v1254 = vshrl.u32 %v1230, 16
        %v1255 = vpack.i.b16 %v1254, %v1253
        %v1259 = vpack.i.b16 %v1232, %v1198
        %v1261 = vshrl.u32 %v1198, 16
        %v1262 = vshrl.u32 %v1232, 16
        %v1263 = vpack.i.b16 %v1262, %v1261
        %v1265 = vcombine.low %v1235, %v1251
        %v1267 = vunpack.c.l.s4 1983009808
        %v1268 = vunpack.c.0.s8 %v1267
        %v1269 = vlaneseq
        %v1270 = vshrl.u32 %v1269, 7
        %v1271 = vsub.s32 %v1268, %v1270
        %v1272 = vrot.slane %v1265, %v1271
        %v1273 = vcombine.low %v1243, %v1259
        %v1275 = vunpack.c.l.s4 1983009808
        %v1276 = vunpack.c.0.s8 %v1275
        %v1277 = vlaneseq
        %v1278 = vshrl.u32 %v1277, 7
        %v1279 = vsub.s32 %v1276, %v1278
        %v1280 = vrot.slane %v1273, %v1279
        %v1281 = vcombine.low %v1272, %v1280
        %v1283 = vunpack.c.l.s4 1934713408
        %v1284 = vunpack.c.0.s8 %v1283
        %v1285 = vlaneseq
        %v1286 = vshrl.u32 %v1285, 7
        %v1287 = vsub.s32 %v1284, %v1286
        %v1288 = vrot.slane %v1281, %v1287
        %v1289 = vcombine.high %v1288, 0
        %v1290 = vcombine.low %v1239, %v1255
        %v1292 = vunpack.c.l.s4 1983009808
        %v1293 = vunpack.c.0.s8 %v1292
        %v1294 = vlaneseq
        %v1295 = vshrl.u32 %v1294, 7
        %v1296 = vsub.s32 %v1293, %v1295
        %v1297 = vrot.slane %v1290, %v1296
        %v1298 = vcombine.low %v1247, %v1263
        %v1300 = vunpack.c.l.s4 1983009808
        %v1301 = vunpack.c.0.s8 %v1300
        %v1302 = vlaneseq
        %v1303 = vshrl.u32 %v1302, 7
        %v1304 = vsub.s32 %v1301, %v1303
        %v1305 = vrot.slane %v1298, %v1304
        %v1306 = vcombine.low %v1297, %v1305
        %v1308 = vunpack.c.l.s4 1934713408
        %v1309 = vunpack.c.0.s8 %v1308
        %v1310 = vlaneseq
        %v1311 = vshrl.u32 %v1310, 7
        %v1312 = vsub.s32 %v1309, %v1311
        %v1313 = vrot.slane %v1306, %v1312
        %v1314 = vcombine.high %v1313, 0
        %v1317 = vpack.i.b16 %v1313, %v1288
        %v1318 = vshrl.u32 %v1288, 16
        %v1319 = vshrl.u32 %v1313, 16
        %v1320 = vpack.i.b16 %v1319, %v1318
        %v1323 = vpack.i.b16 %v1314, %v1289
        %v1324 = vshrl.u32 %v1289, 16
        %v1325 = vshrl.u32 %v1314, 16
        %v1326 = vpack.i.b16 %v1325, %v1324
        %v1328 = vlaneseq
        %v1329 = vshrl.u32 %v1328, 7
        %v1330 = vsub.s32 0, %v1329
        %v1331 = vrot.slane %v683, %v1330
        %vm1333 = vcmask 64512
        %v1335 = vsel %vm1333, %v978, 0
        %v1338 = vsel %vm1333, %v1147, 0
        %1340 = vmatprep.subr.bf16.mxu0 0
        %1341 = vmatpush1.bf16.xpose.msra.mxu0 %v1338
        %1342 = vmatprep.subr.bf16.mxu0 0
        %1343 = vmatpush1.bf16.xpose.msra.mxu0 0
        %1344 = vmatprep.subr.bf16.mxu0 0
        %1345 = vmatpush1.bf16.xpose.msra.mxu0 0
        %1346 = vmatprep.subr.bf16.mxu0 0
        %1347 = vmatpush1.bf16.xpose.msra.mxu0 0
        %1348 = vmatprep.subr.bf16.mxu0 0
        %1349 = vmatpush1.bf16.xpose.msra.mxu0 0
        %1350 = vmatprep.subr.bf16.mxu0 0
        %1351 = vmatpush1.bf16.xpose.msra.mxu0 0
        %1352 = vmatprep.subr.bf16.mxu0 0
        %1353 = vmatpush1.bf16.xpose.msra.mxu0 0
        %1354 = vmatprep.subr.bf16.mxu0 0
        %1355 = vmatpush1.bf16.xpose.msra.mxu0 0
        %1356 = vmatprep.subr.bf16.mxu0 0
        %1357 = vmatpush1.bf16.xpose.msra.mxu0 0
        %1358 = vmatprep.subr.bf16.mxu0 0
        %1359 = vmatpush1.bf16.xpose.msra.mxu0 0
        %1360 = vmatprep.subr.bf16.mxu0 0
        %1361 = vmatpush1.bf16.xpose.msra.mxu0 0
        %1362 = vmatprep.subr.bf16.mxu0 0
        %1363 = vmatpush1.bf16.xpose.msra.mxu0 0
        %1364 = vmatprep.subr.bf16.mxu0 0
        %1365 = vmatpush1.bf16.xpose.msra.mxu0 0
        %1366 = vmatprep.subr.bf16.mxu0 0
        %1367 = vmatpush1.bf16.xpose.msra.mxu0 0
        %1368 = vmatprep.subr.bf16.mxu0 0
        %1369 = vmatpush1.bf16.xpose.msra.mxu0 0
        %1370 = vmatprep.subr.bf16.mxu0 0
        %1371 = vmatpush1.bf16.xpose.msra.mxu0 0
        %1372 = vmatprep.mubr.bf16.mxu0 0
        %1373 = vmatmul.mubr.bf16.gmra.mrb[0].mxu0 %v1335
        %v1374 = vpop.f32.mrb[0].mxu0
        %v1375 = vadd.f32 %v1331, %v1374
        %v1376 = vpop.f32.mrb[0].mxu0
        %v1377 = vpop.f32.mrb[0].mxu0
        %v1378 = vpop.f32.mrb[0].mxu0
        %1379 = vdwg.mxu0
        %v1381 = vsel %vm1333, %v981, 0
        %v1384 = vsel %vm1333, %v1150, 0
        %1386 = vmatprep.subr.bf16.mxu0 0
        %1387 = vmatpush1.bf16.xpose.msra.mxu0 %v1384
        %1388 = vmatprep.subr.bf16.mxu0 0
        %1389 = vmatpush1.bf16.xpose.msra.mxu0 0
        %1390 = vmatprep.subr.bf16.mxu0 0
        %1391 = vmatpush1.bf16.xpose.msra.mxu0 0
        %1392 = vmatprep.subr.bf16.mxu0 0
        %1393 = vmatpush1.bf16.xpose.msra.mxu0 0
        %1394 = vmatprep.subr.bf16.mxu0 0
        %1395 = vmatpush1.bf16.xpose.msra.mxu0 0
        %1396 = vmatprep.subr.bf16.mxu0 0
        %1397 = vmatpush1.bf16.xpose.msra.mxu0 0
        %1398 = vmatprep.subr.bf16.mxu0 0
        %1399 = vmatpush1.bf16.xpose.msra.mxu0 0
        %1400 = vmatprep.subr.bf16.mxu0 0
        %1401 = vmatpush1.bf16.xpose.msra.mxu0 0
        %1402 = vmatprep.subr.bf16.mxu0 0
        %1403 = vmatpush1.bf16.xpose.msra.mxu0 0
        %1404 = vmatprep.subr.bf16.mxu0 0
        %1405 = vmatpush1.bf16.xpose.msra.mxu0 0
        %1406 = vmatprep.subr.bf16.mxu0 0
        %1407 = vmatpush1.bf16.xpose.msra.mxu0 0
        %1408 = vmatprep.subr.bf16.mxu0 0
        %1409 = vmatpush1.bf16.xpose.msra.mxu0 0
        %1410 = vmatprep.subr.bf16.mxu0 0
        %1411 = vmatpush1.bf16.xpose.msra.mxu0 0
        %1412 = vmatprep.subr.bf16.mxu0 0
        %1413 = vmatpush1.bf16.xpose.msra.mxu0 0
        %1414 = vmatprep.subr.bf16.mxu0 0
        %1415 = vmatpush1.bf16.xpose.msra.mxu0 0
        %1416 = vmatprep.subr.bf16.mxu0 0
        %1417 = vmatpush1.bf16.xpose.msra.mxu0 0
        %1418 = vmatprep.mubr.bf16.mxu0 0
        %1419 = vmatmul.mubr.bf16.gmra.mrb[0].mxu0 %v1381
        %v1420 = vpop.f32.mrb[0].mxu0
        %v1421 = vadd.f32 %v1331, %v1420
        %v1422 = vpop.f32.mrb[0].mxu0
        %v1423 = vpop.f32.mrb[0].mxu0
        %v1424 = vpop.f32.mrb[0].mxu0
        %1425 = vdwg.mxu0
        %v1427 = vsel %vm1333, %v984, 0
        %v1430 = vsel %vm1333, %v1153, 0
        %1432 = vmatprep.subr.bf16.mxu0 0
        %1433 = vmatpush1.bf16.xpose.msra.mxu0 %v1430
        %1434 = vmatprep.subr.bf16.mxu0 0
        %1435 = vmatpush1.bf16.xpose.msra.mxu0 0
        %1436 = vmatprep.subr.bf16.mxu0 0
        %1437 = vmatpush1.bf16.xpose.msra.mxu0 0
        %1438 = vmatprep.subr.bf16.mxu0 0
        %1439 = vmatpush1.bf16.xpose.msra.mxu0 0
        %1440 = vmatprep.subr.bf16.mxu0 0
        %1441 = vmatpush1.bf16.xpose.msra.mxu0 0
        %1442 = vmatprep.subr.bf16.mxu0 0
        %1443 = vmatpush1.bf16.xpose.msra.mxu0 0
        %1444 = vmatprep.subr.bf16.mxu0 0
        %1445 = vmatpush1.bf16.xpose.msra.mxu0 0
        %1446 = vmatprep.subr.bf16.mxu0 0
        %1447 = vmatpush1.bf16.xpose.msra.mxu0 0
        %1448 = vmatprep.subr.bf16.mxu0 0
        %1449 = vmatpush1.bf16.xpose.msra.mxu0 0
        %1450 = vmatprep.subr.bf16.mxu0 0
        %1451 = vmatpush1.bf16.xpose.msra.mxu0 0
        %1452 = vmatprep.subr.bf16.mxu0 0
        %1453 = vmatpush1.bf16.xpose.msra.mxu0 0
        %1454 = vmatprep.subr.bf16.mxu0 0
        %1455 = vmatpush1.bf16.xpose.msra.mxu0 0
        %1456 = vmatprep.subr.bf16.mxu0 0
        %1457 = vmatpush1.bf16.xpose.msra.mxu0 0
        %1458 = vmatprep.subr.bf16.mxu0 0
        %1459 = vmatpush1.bf16.xpose.msra.mxu0 0
        %1460 = vmatprep.subr.bf16.mxu0 0
        %1461 = vmatpush1.bf16.xpose.msra.mxu0 0
        %1462 = vmatprep.subr.bf16.mxu0 0
        %1463 = vmatpush1.bf16.xpose.msra.mxu0 0
        %1464 = vmatprep.mubr.bf16.mxu0 0
        %1465 = vmatmul.mubr.bf16.gmra.mrb[0].mxu0 %v1427
        %v1466 = vpop.f32.mrb[0].mxu0
        %v1467 = vadd.f32 %v1331, %v1466
        %v1468 = vpop.f32.mrb[0].mxu0
        %v1469 = vpop.f32.mrb[0].mxu0
        %v1470 = vpop.f32.mrb[0].mxu0
        %1471 = vdwg.mxu0
        %v1473 = vsel %vm1333, %v987, 0
        %v1476 = vsel %vm1333, %v1156, 0
        %1478 = vmatprep.subr.bf16.mxu0 0
        %1479 = vmatpush1.bf16.xpose.msra.mxu0 %v1476
        %1480 = vmatprep.subr.bf16.mxu0 0
        %1481 = vmatpush1.bf16.xpose.msra.mxu0 0
        %1482 = vmatprep.subr.bf16.mxu0 0
        %1483 = vmatpush1.bf16.xpose.msra.mxu0 0
        %1484 = vmatprep.subr.bf16.mxu0 0
        %1485 = vmatpush1.bf16.xpose.msra.mxu0 0
        %1486 = vmatprep.subr.bf16.mxu0 0
        %1487 = vmatpush1.bf16.xpose.msra.mxu0 0
        %1488 = vmatprep.subr.bf16.mxu0 0
        %1489 = vmatpush1.bf16.xpose.msra.mxu0 0
        %1490 = vmatprep.subr.bf16.mxu0 0
        %1491 = vmatpush1.bf16.xpose.msra.mxu0 0
        %1492 = vmatprep.subr.bf16.mxu0 0
        %1493 = vmatpush1.bf16.xpose.msra.mxu0 0
        %1494 = vmatprep.subr.bf16.mxu0 0
        %1495 = vmatpush1.bf16.xpose.msra.mxu0 0
        %1496 = vmatprep.subr.bf16.mxu0 0
        %1497 = vmatpush1.bf16.xpose.msra.mxu0 0
        %1498 = vmatprep.subr.bf16.mxu0 0
        %1499 = vmatpush1.bf16.xpose.msra.mxu0 0
        %1500 = vmatprep.subr.bf16.mxu0 0
        %1501 = vmatpush1.bf16.xpose.msra.mxu0 0
        %1502 = vmatprep.subr.bf16.mxu0 0
        %1503 = vmatpush1.bf16.xpose.msra.mxu0 0
        %1504 = vmatprep.subr.bf16.mxu0 0
        %1505 = vmatpush1.bf16.xpose.msra.mxu0 0
        %1506 = vmatprep.subr.bf16.mxu0 0
        %1507 = vmatpush1.bf16.xpose.msra.mxu0 0
        %1508 = vmatprep.subr.bf16.mxu0 0
        %1509 = vmatpush1.bf16.xpose.msra.mxu0 0
        %1510 = vmatprep.mubr.bf16.mxu0 0
        %1511 = vmatmul.mubr.bf16.gmra.mrb[0].mxu0 %v1473
        %v1512 = vpop.f32.mrb[0].mxu0
        %v1513 = vadd.f32 %v1331, %v1512
        %v1514 = vpop.f32.mrb[0].mxu0
        %v1515 = vpop.f32.mrb[0].mxu0
        %v1516 = vpop.f32.mrb[0].mxu0
        %1517 = vdwg.mxu0
        %v1518 = vsel %vm1333, %v1375, -inf
        %1519 = vmax.xlane.f32.xlu0 %v1518
        %v1520 = vpop.xlane.xlu0 %1519
        %v1521 = vsel %vm1333, %v1421, -inf
        %1522 = vmax.xlane.f32.xlu0 %v1521
        %v1523 = vpop.xlane.xlu0 %1522
        %v1524 = vsel %vm1333, %v1467, -inf
        %1525 = vmax.xlane.f32.xlu0 %v1524
        %v1526 = vpop.xlane.xlu0 %1525
        %v1527 = vsel %vm1333, %v1513, -inf
        %1528 = vmax.xlane.f32.xlu0 %v1527
        %v1529 = vpop.xlane.xlu0 %1528
        %v1530 = vsub.f32 %v1375, %v1520
        %v1531 = vsub.f32 %v1421, %v1523
        %v1532 = vsub.f32 %v1467, %v1526
        %v1533 = vsub.f32 %v1513, %v1529
        %v1534 = vmul.f32 %v1530, 1.442695
        %v1535 = vpow.pop %v1534
        %v1536 = vmul.f32 %v1531, 1.442695
        %v1537 = vpow.pop %v1536
        %v1538 = vmul.f32 %v1532, 1.442695
        %v1539 = vpow.pop %v1538
        %v1540 = vmul.f32 %v1533, 1.442695
        %v1541 = vpow.pop %v1540
        %v1542 = vsel %vm1333, %v1535, 0.0
        %1543 = vadd.xlane.f32.xlu0 %v1542
        %v1544 = vpop.xlane.xlu0 %1543
        %v1545 = vsel %vm1333, %v1537, 0.0
        %1546 = vadd.xlane.f32.xlu0 %v1545
        %v1547 = vpop.xlane.xlu0 %1546
        %v1548 = vsel %vm1333, %v1539, 0.0
        %1549 = vadd.xlane.f32.xlu0 %v1548
        %v1550 = vpop.xlane.xlu0 %1549
        %v1551 = vsel %vm1333, %v1541, 0.0
        %1552 = vadd.xlane.f32.xlu0 %v1551
        %v1553 = vpop.xlane.xlu0 %1552
        %v1554 = vrcp.pop %v1544
        %v1555 = vrcp.pop %v1547
        %v1556 = vrcp.pop %v1550
        %v1557 = vrcp.pop %v1553
        %v1558 = vmul.f32 %v1535, %v1554
        %v1559 = vmul.f32 %v1537, %v1555
        %v1560 = vmul.f32 %v1539, %v1556
        %v1561 = vmul.f32 %v1541, %v1557
        %v1562 = vpack.c.bf16 %v1558, %v1558
        %v1563 = vpack.c.bf16 %v1559, %v1559
        %v1564 = vpack.c.bf16 %v1560, %v1560
        %v1565 = vpack.c.bf16 %v1561, %v1561
        %v1567 = vsel %vm1333, %v1562, 0
        %vm1569 = vcmask 1043456
        %v1571 = vsel %vm1569, %v1317, 0
        %1573 = vmatprep.subr.bf16.mxu0 0
        %1574 = vmatpush1.bf16.msra.mxu0 %v1571
        %1575 = vmatprep.subr.bf16.mxu0 0
        %1576 = vmatpush1.bf16.msra.mxu0 0
        %1577 = vmatprep.subr.bf16.mxu0 0
        %1578 = vmatpush1.bf16.msra.mxu0 0
        %1579 = vmatprep.subr.bf16.mxu0 0
        %1580 = vmatpush1.bf16.msra.mxu0 0
        %1581 = vmatprep.subr.bf16.mxu0 0
        %1582 = vmatpush1.bf16.msra.mxu0 0
        %1583 = vmatprep.subr.bf16.mxu0 0
        %1584 = vmatpush1.bf16.msra.mxu0 0
        %1585 = vmatprep.subr.bf16.mxu0 0
        %1586 = vmatpush1.bf16.msra.mxu0 0
        %1587 = vmatprep.subr.bf16.mxu0 0
        %1588 = vmatpush1.bf16.msra.mxu0 0
        %1589 = vmatprep.subr.bf16.mxu0 0
        %1590 = vmatpush1.bf16.msra.mxu0 0
        %1591 = vmatprep.subr.bf16.mxu0 0
        %1592 = vmatpush1.bf16.msra.mxu0 0
        %1593 = vmatprep.subr.bf16.mxu0 0
        %1594 = vmatpush1.bf16.msra.mxu0 0
        %1595 = vmatprep.subr.bf16.mxu0 0
        %1596 = vmatpush1.bf16.msra.mxu0 0
        %1597 = vmatprep.subr.bf16.mxu0 0
        %1598 = vmatpush1.bf16.msra.mxu0 0
        %1599 = vmatprep.subr.bf16.mxu0 0
        %1600 = vmatpush1.bf16.msra.mxu0 0
        %1601 = vmatprep.subr.bf16.mxu0 0
        %1602 = vmatpush1.bf16.msra.mxu0 0
        %1603 = vmatprep.subr.bf16.mxu0 0
        %1604 = vmatpush1.bf16.msra.mxu0 0
        %1605 = vmatprep.mubr.bf16.mxu0 0
        %1606 = vmatmul.mubr.bf16.gmra.mrb[0].mxu0 %v1567
        %v1607 = vpop.f32.mrb[0].mxu0
        %v1608 = vadd.f32 0.0, %v1607
        %v1609 = vpop.f32.mrb[0].mxu0
        %v1610 = vpop.f32.mrb[0].mxu0
        %v1611 = vpop.f32.mrb[0].mxu0
        %1612 = vdwg.mxu0
        %v1614 = vsel %vm1333, %v1563, 0
        %v1617 = vsel %vm1569, %v1320, 0
        %1619 = vmatprep.subr.bf16.mxu0 0
        %1620 = vmatpush1.bf16.msra.mxu0 %v1617
        %1621 = vmatprep.subr.bf16.mxu0 0
        %1622 = vmatpush1.bf16.msra.mxu0 0
        %1623 = vmatprep.subr.bf16.mxu0 0
        %1624 = vmatpush1.bf16.msra.mxu0 0
        %1625 = vmatprep.subr.bf16.mxu0 0
        %1626 = vmatpush1.bf16.msra.mxu0 0
        %1627 = vmatprep.subr.bf16.mxu0 0
        %1628 = vmatpush1.bf16.msra.mxu0 0
        %1629 = vmatprep.subr.bf16.mxu0 0
        %1630 = vmatpush1.bf16.msra.mxu0 0
        %1631 = vmatprep.subr.bf16.mxu0 0
        %1632 = vmatpush1.bf16.msra.mxu0 0
        %1633 = vmatprep.subr.bf16.mxu0 0
        %1634 = vmatpush1.bf16.msra.mxu0 0
        %1635 = vmatprep.subr.bf16.mxu0 0
        %1636 = vmatpush1.bf16.msra.mxu0 0
        %1637 = vmatprep.subr.bf16.mxu0 0
        %1638 = vmatpush1.bf16.msra.mxu0 0
        %1639 = vmatprep.subr.bf16.mxu0 0
        %1640 = vmatpush1.bf16.msra.mxu0 0
        %1641 = vmatprep.subr.bf16.mxu0 0
        %1642 = vmatpush1.bf16.msra.mxu0 0
        %1643 = vmatprep.subr.bf16.mxu0 0
        %1644 = vmatpush1.bf16.msra.mxu0 0
        %1645 = vmatprep.subr.bf16.mxu0 0
        %1646 = vmatpush1.bf16.msra.mxu0 0
        %1647 = vmatprep.subr.bf16.mxu0 0
        %1648 = vmatpush1.bf16.msra.mxu0 0
        %1649 = vmatprep.subr.bf16.mxu0 0
        %1650 = vmatpush1.bf16.msra.mxu0 0
        %1651 = vmatprep.mubr.bf16.mxu0 0
        %1652 = vmatmul.mubr.bf16.gmra.mrb[0].mxu0 %v1614
        %v1653 = vpop.f32.mrb[0].mxu0
        %v1654 = vadd.f32 0.0, %v1653
        %v1655 = vpop.f32.mrb[0].mxu0
        %v1656 = vpop.f32.mrb[0].mxu0
        %v1657 = vpop.f32.mrb[0].mxu0
        %1658 = vdwg.mxu0
        %v1660 = vsel %vm1333, %v1564, 0
        %v1663 = vsel %vm1569, %v1323, 0
        %1665 = vmatprep.subr.bf16.mxu0 0
        %1666 = vmatpush1.bf16.msra.mxu0 %v1663
        %1667 = vmatprep.subr.bf16.mxu0 0
        %1668 = vmatpush1.bf16.msra.mxu0 0
        %1669 = vmatprep.subr.bf16.mxu0 0
        %1670 = vmatpush1.bf16.msra.mxu0 0
        %1671 = vmatprep.subr.bf16.mxu0 0
        %1672 = vmatpush1.bf16.msra.mxu0 0
        %1673 = vmatprep.subr.bf16.mxu0 0
        %1674 = vmatpush1.bf16.msra.mxu0 0
        %1675 = vmatprep.subr.bf16.mxu0 0
        %1676 = vmatpush1.bf16.msra.mxu0 0
        %1677 = vmatprep.subr.bf16.mxu0 0
        %1678 = vmatpush1.bf16.msra.mxu0 0
        %1679 = vmatprep.subr.bf16.mxu0 0
        %1680 = vmatpush1.bf16.msra.mxu0 0
        %1681 = vmatprep.subr.bf16.mxu0 0
        %1682 = vmatpush1.bf16.msra.mxu0 0
        %1683 = vmatprep.subr.bf16.mxu0 0
        %1684 = vmatpush1.bf16.msra.mxu0 0
        %1685 = vmatprep.subr.bf16.mxu0 0
        %1686 = vmatpush1.bf16.msra.mxu0 0
        %1687 = vmatprep.subr.bf16.mxu0 0
        %1688 = vmatpush1.bf16.msra.mxu0 0
        %1689 = vmatprep.subr.bf16.mxu0 0
        %1690 = vmatpush1.bf16.msra.mxu0 0
        %1691 = vmatprep.subr.bf16.mxu0 0
        %1692 = vmatpush1.bf16.msra.mxu0 0
        %1693 = vmatprep.subr.bf16.mxu0 0
        %1694 = vmatpush1.bf16.msra.mxu0 0
        %1695 = vmatprep.subr.bf16.mxu0 0
        %1696 = vmatpush1.bf16.msra.mxu0 0
        %1697 = vmatprep.mubr.bf16.mxu0 0
        %1698 = vmatmul.mubr.bf16.gmra.mrb[0].mxu0 %v1660
        %v1699 = vpop.f32.mrb[0].mxu0
        %v1700 = vadd.f32 0.0, %v1699
        %v1701 = vpop.f32.mrb[0].mxu0
        %v1702 = vpop.f32.mrb[0].mxu0
        %v1703 = vpop.f32.mrb[0].mxu0
        %1704 = vdwg.mxu0
        %v1706 = vsel %vm1333, %v1565, 0
        %v1709 = vsel %vm1569, %v1326, 0
        %1711 = vmatprep.subr.bf16.mxu0 0
        %1712 = vmatpush1.bf16.msra.mxu0 %v1709
        %1713 = vmatprep.subr.bf16.mxu0 0
        %1714 = vmatpush1.bf16.msra.mxu0 0
        %1715 = vmatprep.subr.bf16.mxu0 0
        %1716 = vmatpush1.bf16.msra.mxu0 0
        %1717 = vmatprep.subr.bf16.mxu0 0
        %1718 = vmatpush1.bf16.msra.mxu0 0
        %1719 = vmatprep.subr.bf16.mxu0 0
        %1720 = vmatpush1.bf16.msra.mxu0 0
        %1721 = vmatprep.subr.bf16.mxu0 0
        %1722 = vmatpush1.bf16.msra.mxu0 0
        %1723 = vmatprep.subr.bf16.mxu0 0
        %1724 = vmatpush1.bf16.msra.mxu0 0
        %1725 = vmatprep.subr.bf16.mxu0 0
        %1726 = vmatpush1.bf16.msra.mxu0 0
        %1727 = vmatprep.subr.bf16.mxu0 0
        %1728 = vmatpush1.bf16.msra.mxu0 0
        %1729 = vmatprep.subr.bf16.mxu0 0
        %1730 = vmatpush1.bf16.msra.mxu0 0
        %1731 = vmatprep.subr.bf16.mxu0 0
        %1732 = vmatpush1.bf16.msra.mxu0 0
        %1733 = vmatprep.subr.bf16.mxu0 0
        %1734 = vmatpush1.bf16.msra.mxu0 0
        %1735 = vmatprep.subr.bf16.mxu0 0
        %1736 = vmatpush1.bf16.msra.mxu0 0
        %1737 = vmatprep.subr.bf16.mxu0 0
        %1738 = vmatpush1.bf16.msra.mxu0 0
        %1739 = vmatprep.subr.bf16.mxu0 0
        %1740 = vmatpush1.bf16.msra.mxu0 0
        %1741 = vmatprep.subr.bf16.mxu0 0
        %1742 = vmatpush1.bf16.msra.mxu0 0
        %1743 = vmatprep.mubr.bf16.mxu0 0
        %1744 = vmatmul.mubr.bf16.gmra.mrb[0].mxu0 %v1706
        %v1745 = vpop.f32.mrb[0].mxu0
        %v1746 = vadd.f32 0.0, %v1745
        %v1747 = vpop.f32.mrb[0].mxu0
        %v1748 = vpop.f32.mrb[0].mxu0
        %v1749 = vpop.f32.mrb[0].mxu0
        %1750 = vdwg.mxu0
        %v1751 = vcombine.low %v1608, %v1700
        %v1752 = vcombine.high %v1608, %v1700
        %v1754 = vunpack.c.l.s4 1983009808
        %v1755 = vunpack.c.0.s8 %v1754
        %v1756 = vlaneseq
        %v1757 = vshrl.u32 %v1756, 7
        %v1758 = vsub.s32 %v1755, %v1757
        %v1759 = vrot.slane %v1751, %v1758
        %v1761 = vunpack.c.l.s4 1983009808
        %v1762 = vunpack.c.0.s8 %v1761
        %v1763 = vlaneseq
        %v1764 = vshrl.u32 %v1763, 7
        %v1765 = vsub.s32 %v1762, %v1764
        %v1766 = vrot.slane %v1752, %v1765
        %v1767 = vcombine.low %v1654, %v1746
        %v1768 = vcombine.high %v1654, %v1746
        %v1770 = vunpack.c.l.s4 1983009808
        %v1771 = vunpack.c.0.s8 %v1770
        %v1772 = vlaneseq
        %v1773 = vshrl.u32 %v1772, 7
        %v1774 = vsub.s32 %v1771, %v1773
        %v1775 = vrot.slane %v1767, %v1774
        %v1777 = vunpack.c.l.s4 1983009808
        %v1778 = vunpack.c.0.s8 %v1777
        %v1779 = vlaneseq
        %v1780 = vshrl.u32 %v1779, 7
        %v1781 = vsub.s32 %v1778, %v1780
        %v1782 = vrot.slane %v1768, %v1781
        %v1783 = vcombine.low %v1759, %v1775
        %v1784 = vcombine.high %v1759, %v1775
        %v1786 = vunpack.c.l.s4 1934713408
        %v1787 = vunpack.c.0.s8 %v1786
        %v1788 = vlaneseq
        %v1789 = vshrl.u32 %v1788, 7
        %v1790 = vsub.s32 %v1787, %v1789
        %v1791 = vrot.slane %v1783, %v1790
        %v1793 = vunpack.c.l.s4 1934713408
        %v1794 = vunpack.c.0.s8 %v1793
        %v1795 = vlaneseq
        %v1796 = vshrl.u32 %v1795, 7
        %v1797 = vsub.s32 %v1794, %v1796
        %v1798 = vrot.slane %v1784, %v1797
        %v1799 = vcombine.low %v1766, %v1782
        %v1800 = vcombine.high %v1766, %v1782
        %v1802 = vunpack.c.l.s4 1934713408
        %v1803 = vunpack.c.0.s8 %v1802
        %v1804 = vlaneseq
        %v1805 = vshrl.u32 %v1804, 7
        %v1806 = vsub.s32 %v1803, %v1805
        %v1807 = vrot.slane %v1799, %v1806
        %v1809 = vunpack.c.l.s4 1934713408
        %v1810 = vunpack.c.0.s8 %v1809
        %v1811 = vlaneseq
        %v1812 = vshrl.u32 %v1811, 7
        %v1813 = vsub.s32 %v1810, %v1812
        %v1814 = vrot.slane %v1800, %v1813
        %v1815 = vcombine.high %v1791, 0.0
        %v1816 = vcombine.high %v1798, 0.0
        %v1817 = vcombine.high %v1807, 0.0
        %v1818 = vcombine.high %v1814, 0.0
        %v1819 = vcombine.low %v1791, %v1798
        %v1821 = vunpack.c.l.s4 1983009808
        %v1822 = vunpack.c.0.s8 %v1821
        %v1823 = vlaneseq
        %v1824 = vshrl.u32 %v1823, 7
        %v1825 = vsub.s32 %v1822, %v1824
        %v1826 = vrot.slane %v1819, %v1825
        %v1827 = vcombine.low %v1815, %v1816
        %v1829 = vunpack.c.l.s4 1983009808
        %v1830 = vunpack.c.0.s8 %v1829
        %v1831 = vlaneseq
        %v1832 = vshrl.u32 %v1831, 7
        %v1833 = vsub.s32 %v1830, %v1832
        %v1834 = vrot.slane %v1827, %v1833
        %v1835 = vcombine.low %v1807, %v1814
        %v1837 = vunpack.c.l.s4 1983009808
        %v1838 = vunpack.c.0.s8 %v1837
        %v1839 = vlaneseq
        %v1840 = vshrl.u32 %v1839, 7
        %v1841 = vsub.s32 %v1838, %v1840
        %v1842 = vrot.slane %v1835, %v1841
        %v1843 = vcombine.low %v1817, %v1818
        %v1845 = vunpack.c.l.s4 1983009808
        %v1846 = vunpack.c.0.s8 %v1845
        %v1847 = vlaneseq
        %v1848 = vshrl.u32 %v1847, 7
        %v1849 = vsub.s32 %v1846, %v1848
        %v1850 = vrot.slane %v1843, %v1849
        %v1851 = vcombine.low %v1826, %v1834
        %v1852 = vcombine.high %v1826, %v1834
        %v1854 = vunpack.c.l.s4 1934713408
        %v1855 = vunpack.c.0.s8 %v1854
        %v1856 = vlaneseq
        %v1857 = vshrl.u32 %v1856, 7
        %v1858 = vsub.s32 %v1855, %v1857
        %v1859 = vrot.slane %v1851, %v1858
        %v1861 = vunpack.c.l.s4 1934713408
        %v1862 = vunpack.c.0.s8 %v1861
        %v1863 = vlaneseq
        %v1864 = vshrl.u32 %v1863, 7
        %v1865 = vsub.s32 %v1862, %v1864
        %v1866 = vrot.slane %v1852, %v1865
        %v1867 = vcombine.low %v1842, %v1850
        %v1868 = vcombine.high %v1842, %v1850
        %v1870 = vunpack.c.l.s4 1934713408
        %v1871 = vunpack.c.0.s8 %v1870
        %v1872 = vlaneseq
        %v1873 = vshrl.u32 %v1872, 7
        %v1874 = vsub.s32 %v1871, %v1873
        %v1875 = vrot.slane %v1867, %v1874
        %v1877 = vunpack.c.l.s4 1934713408
        %v1878 = vunpack.c.0.s8 %v1877
        %v1879 = vlaneseq
        %v1880 = vshrl.u32 %v1879, 7
        %v1881 = vsub.s32 %v1878, %v1880
        %v1882 = vrot.slane %v1868, %v1881
        %v1883 = vcombine.low %v1859, %v1875
        %v1884 = vcombine.high %v1859, %v1875
        %v1885 = vcombine.low %v1866, %v1882
        %v1886 = vcombine.high %v1866, %v1882
        %1888 = vrot.lane.b32.xlu0 %v1884, 8
        %v1889 = vpop.permute.xlu0 %1888
        %1892 = vrot.lane.b32.xlu0 %v1885, 16
        %v1893 = vpop.permute.xlu0 %1892
        %1896 = vrot.lane.b32.xlu0 %v1886, 24
        %v1897 = vpop.permute.xlu0 %1896
        %v1899 = vsel %vm1333, %v1883, %v1889
        %vm1900 = vcmask 130048
        %v1901 = vsel %vm1900, %v1899, %v1893
        %vm1902 = vcmask 195584
        %v1903 = vsel %vm1902, %v1901, %v1897
        %v1904 = vpack.c.bf16 %v1903, %v1903
        %v1905 = vld [vmem:[#allocation8] sm:$0xf]
        %v1906 = vld [vmem:[#allocation8 + $0x4] sm:$0xf]
        %v1907 = vld [vmem:[#allocation8 + $0x8] sm:$0xf]
        %v1908 = vld [vmem:[#allocation8 + $0xc] sm:$0xf]
        %v1909 = vld [vmem:[#allocation10] sm:$0x1]
        %v1911 = vlaneseq
        %v1912 = vshrl.u32 %v1911, 7
        %v1913 = vsub.s32 0, %v1912
        %v1914 = vrot.slane %v1909, %v1913
        %v1920 = vunpack.c.l.b16 %v1905
        %v1921 = vunpack.c.l.b16 %v1906
        %v1922 = vunpack.c.l.b16 %v1907
        %v1923 = vunpack.c.l.b16 %v1908
        %v1924 = vpack.c.b16 %v1921, %v1920
        %v1925 = vpack.c.b16 %v1923, %v1922
        %v1929 = vsel %vm709, %v1904, 0
        %1931 = vmatprep.subr.bf16.mxu0 0
        %1932 = vmatpush1.bf16.msra.mxu0 %v1924
        %1933 = vmatprep.subr.bf16.mxu0 0
        %1934 = vmatpush1.bf16.msra.mxu0 %v1925
        %1935 = vmatprep.subr.bf16.mxu0 0
        %1936 = vmatpush1.bf16.msra.mxu0 0
        %1937 = vmatprep.subr.bf16.mxu0 0
        %1938 = vmatpush1.bf16.msra.mxu0 0
        %1939 = vmatprep.subr.bf16.mxu0 0
        %1940 = vmatpush1.bf16.msra.mxu0 0
        %1941 = vmatprep.subr.bf16.mxu0 0
        %1942 = vmatpush1.bf16.msra.mxu0 0
        %1943 = vmatprep.subr.bf16.mxu0 0
        %1944 = vmatpush1.bf16.msra.mxu0 0
        %1945 = vmatprep.subr.bf16.mxu0 0
        %1946 = vmatpush1.bf16.msra.mxu0 0
        %1947 = vmatprep.subr.bf16.mxu0 0
        %1948 = vmatpush1.bf16.msra.mxu0 0
        %1949 = vmatprep.subr.bf16.mxu0 0
        %1950 = vmatpush1.bf16.msra.mxu0 0
        %1951 = vmatprep.subr.bf16.mxu0 0
        %1952 = vmatpush1.bf16.msra.mxu0 0
        %1953 = vmatprep.subr.bf16.mxu0 0
        %1954 = vmatpush1.bf16.msra.mxu0 0
        %1955 = vmatprep.subr.bf16.mxu0 0
        %1956 = vmatpush1.bf16.msra.mxu0 0
        %1957 = vmatprep.subr.bf16.mxu0 0
        %1958 = vmatpush1.bf16.msra.mxu0 0
        %1959 = vmatprep.subr.bf16.mxu0 0
        %1960 = vmatpush1.bf16.msra.mxu0 0
        %1961 = vmatprep.subr.bf16.mxu0 0
        %1962 = vmatpush1.bf16.msra.mxu0 0
        %1963 = vmatprep.mubr.bf16.mxu0 0
        %1964 = vmatmul.mubr.bf16.gmra.mrb[0].mxu0 %v1929
        %v1965 = vpop.f32.mrb[0].mxu0
        %v1966 = vadd.f32 %v1914, %v1965
        %v1967 = vpop.f32.mrb[0].mxu0
        %v1968 = vpop.f32.mrb[0].mxu0
        %v1969 = vpop.f32.mrb[0].mxu0
        %1970 = vdwg.mxu0
        %v1971 = vadd.f32 %v1966, %v681
        %v1972 = vld [vmem:[#allocation11] sm:$0x1]
        %v1973 = vld [vmem:[%s10] sm:$0x1]
        %v1974 = vsel %vm709, %v1971, 0.0
        %1975 = vadd.xlane.f32.xlu0 %v1974
        %v1976 = vpop.xlane.xlu0 %1975
        %v1977 = vrcp.pop 32.0
        %v1978 = vmul.f32 %v1976, %v1977
        %v1979 = vsub.f32 %v1971, %v1978
        %v1980 = vmul.f32 %v1979, %v1979
        %v1981 = vsel %vm709, %v1980, 0.0
        %1982 = vadd.xlane.f32.xlu0 %v1981
        %v1983 = vpop.xlane.xlu0 %1982
        %v1984 = vmul.f32 %v1983, %v1977
        %v1985 = vadd.f32 %v1984, 1e-12
        %v1986 = vrsqrt.pop %v1985
        %v1987 = vmul.f32 %v1979, %v1986
        %v1989 = vlaneseq
        %v1990 = vshrl.u32 %v1989, 7
        %v1991 = vsub.s32 0, %v1990
        %v1992 = vrot.slane %v1972, %v1991
        %v1994 = vmul.f32 %v1987, %v1992
        %v1996 = vlaneseq
        %v1997 = vshrl.u32 %v1996, 7
        %v1998 = vsub.s32 0, %v1997
        %v1999 = vrot.slane %v1973, %v1998
        %v2001 = vadd.f32 %v1994, %v1999
        %v2002 = vpack.c.bf16 %v2001, %v2001
        %v2003 = vld [vmem:[%s11] sm:$0xf]
        %v2004 = vld [vmem:[%s11 + $0x4] sm:$0xf]
        %v2005 = vld [vmem:[%s11 + $0x8] sm:$0xf]
        %v2006 = vld [vmem:[%s11 + $0xc] sm:$0xf]
        %v2007 = vld [vmem:[%s12] sm:$0x1]
        %v2009 = vlaneseq
        %v2010 = vshrl.u32 %v2009, 7
        %v2011 = vsub.s32 0, %v2010
        %v2012 = vrot.slane %v2007, %v2011
        %v2018 = vunpack.c.l.b16 %v2003
        %v2019 = vunpack.c.l.b16 %v2004
        %v2020 = vunpack.c.l.b16 %v2005
        %v2021 = vunpack.c.l.b16 %v2006
        %v2022 = vpack.c.b16 %v2019, %v2018
        %v2023 = vpack.c.b16 %v2021, %v2020
        %v2027 = vsel %vm709, %v2002, 0
        %2029 = vmatprep.subr.bf16.mxu0 0
        %2030 = vmatpush1.bf16.msra.mxu0 %v2022
        %2031 = vmatprep.subr.bf16.mxu0 0
        %2032 = vmatpush1.bf16.msra.mxu0 %v2023
        %2033 = vmatprep.subr.bf16.mxu0 0
        %2034 = vmatpush1.bf16.msra.mxu0 0
        %2035 = vmatprep.subr.bf16.mxu0 0
        %2036 = vmatpush1.bf16.msra.mxu0 0
        %2037 = vmatprep.subr.bf16.mxu0 0
        %2038 = vmatpush1.bf16.msra.mxu0 0
        %2039 = vmatprep.subr.bf16.mxu0 0
        %2040 = vmatpush1.bf16.msra.mxu0 0
        %2041 = vmatprep.subr.bf16.mxu0 0
        %2042 = vmatpush1.bf16.msra.mxu0 0
        %2043 = vmatprep.subr.bf16.mxu0 0
        %2044 = vmatpush1.bf16.msra.mxu0 0
        %2045 = vmatprep.subr.bf16.mxu0 0
        %2046 = vmatpush1.bf16.msra.mxu0 0
        %2047 = vmatprep.subr.bf16.mxu0 0
        %2048 = vmatpush1.bf16.msra.mxu0 0
        %2049 = vmatprep.subr.bf16.mxu0 0
        %2050 = vmatpush1.bf16.msra.mxu0 0
        %2051 = vmatprep.subr.bf16.mxu0 0
        %2052 = vmatpush1.bf16.msra.mxu0 0
        %2053 = vmatprep.subr.bf16.mxu0 0
        %2054 = vmatpush1.bf16.msra.mxu0 0
        %2055 = vmatprep.subr.bf16.mxu0 0
        %2056 = vmatpush1.bf16.msra.mxu0 0
        %2057 = vmatprep.subr.bf16.mxu0 0
        %2058 = vmatpush1.bf16.msra.mxu0 0
        %2059 = vmatprep.subr.bf16.mxu0 0
        %2060 = vmatpush1.bf16.msra.mxu0 0
        %2061 = vmatprep.mubr.bf16.mxu0 0
        %2062 = vmatmul.mubr.bf16.gmra.mrb[0].mxu0 %v2027
        %v2063 = vpop.f32.mrb[0].mxu0
        %v2064 = vadd.f32 %v2012, %v2063
        %v2065 = vpop.f32.mrb[0].mxu0
        %v2066 = vpop.f32.mrb[0].mxu0
        %v2067 = vpop.f32.mrb[0].mxu0
        %2068 = vdwg.mxu0
        %v2069 = vmul.f32 %v2064, 0.5
        %v2070 = vmul.f32 %v2064, 0.044715
        %v2071 = vmul.f32 %v2070, %v2064
        %v2072 = vmul.f32 %v2071, %v2064
        %v2073 = vadd.f32 %v2064, %v2072
        %v2074 = vmul.f32 %v2073, 0.7978846
        %v2075 = vtanh.pop %v2074
        %v2076 = vadd.f32 %v2075, 1.0
        %v2077 = vmul.f32 %v2069, %v2076
        %v2078 = vpack.c.bf16 %v2077, %v2077
        %v2079 = vld [vmem:[%s13] sm:$0xf]
        %v2080 = vld [vmem:[%s13 + $0x4] sm:$0xf]
        %v2081 = vld [vmem:[%s13 + $0x8] sm:$0xf]
        %v2082 = vld [vmem:[%s13 + $0xc] sm:$0xf]
        %v2083 = vld [vmem:[%s13 + $0x10] sm:$0xf]
        %v2084 = vld [vmem:[%s13 + $0x14] sm:$0xf]
        %v2085 = vld [vmem:[%s13 + $0x18] sm:$0xf]
        %v2086 = vld [vmem:[%s13 + $0x1c] sm:$0xf]
        %v2087 = vld [vmem:[%s14] sm:$0x1]
        %v2089 = vlaneseq
        %v2090 = vshrl.u32 %v2089, 7
        %v2091 = vsub.s32 0, %v2090
        %v2092 = vrot.slane %v2087, %v2091
        %v2102 = vunpack.c.l.b16 %v2079
        %v2103 = vunpack.c.l.b16 %v2080
        %v2104 = vunpack.c.l.b16 %v2081
        %v2105 = vunpack.c.l.b16 %v2082
        %v2106 = vunpack.c.l.b16 %v2083
        %v2107 = vunpack.c.l.b16 %v2084
        %v2108 = vunpack.c.l.b16 %v2085
        %v2109 = vunpack.c.l.b16 %v2086
        %v2110 = vpack.c.b16 %v2103, %v2102
        %v2111 = vpack.c.b16 %v2105, %v2104
        %v2112 = vpack.c.b16 %v2107, %v2106
        %v2113 = vpack.c.b16 %v2109, %v2108
        %vm2118 = vcmask 523264
        %v2120 = vsel %vm2118, %v2078, 0
        %2122 = vmatprep.subr.bf16.mxu0 0
        %2123 = vmatpush1.bf16.msra.mxu0 %v2110
        %2124 = vmatprep.subr.bf16.mxu0 0
        %2125 = vmatpush1.bf16.msra.mxu0 %v2111
        %2126 = vmatprep.subr.bf16.mxu0 0
        %2127 = vmatpush1.bf16.msra.mxu0 %v2112
        %2128 = vmatprep.subr.bf16.mxu0 0
        %2129 = vmatpush1.bf16.msra.mxu0 %v2113
        %2130 = vmatprep.subr.bf16.mxu0 0
        %2131 = vmatpush1.bf16.msra.mxu0 0
        %2132 = vmatprep.subr.bf16.mxu0 0
        %2133 = vmatpush1.bf16.msra.mxu0 0
        %2134 = vmatprep.subr.bf16.mxu0 0
        %2135 = vmatpush1.bf16.msra.mxu0 0
        %2136 = vmatprep.subr.bf16.mxu0 0
        %2137 = vmatpush1.bf16.msra.mxu0 0
        %2138 = vmatprep.subr.bf16.mxu0 0
        %2139 = vmatpush1.bf16.msra.mxu0 0
        %2140 = vmatprep.subr.bf16.mxu0 0
        %2141 = vmatpush1.bf16.msra.mxu0 0
        %2142 = vmatprep.subr.bf16.mxu0 0
        %2143 = vmatpush1.bf16.msra.mxu0 0
        %2144 = vmatprep.subr.bf16.mxu0 0
        %2145 = vmatpush1.bf16.msra.mxu0 0
        %2146 = vmatprep.subr.bf16.mxu0 0
        %2147 = vmatpush1.bf16.msra.mxu0 0
        %2148 = vmatprep.subr.bf16.mxu0 0
        %2149 = vmatpush1.bf16.msra.mxu0 0
        %2150 = vmatprep.subr.bf16.mxu0 0
        %2151 = vmatpush1.bf16.msra.mxu0 0
        %2152 = vmatprep.subr.bf16.mxu0 0
        %2153 = vmatpush1.bf16.msra.mxu0 0
        %2154 = vmatprep.mubr.bf16.mxu0 0
        %2155 = vmatmul.mubr.bf16.gmra.mrb[0].mxu0 %v2120
        %v2156 = vpop.f32.mrb[0].mxu0
        %v2157 = vadd.f32 %v2092, %v2156
        %v2158 = vpop.f32.mrb[0].mxu0
        %v2159 = vpop.f32.mrb[0].mxu0
        %v2160 = vpop.f32.mrb[0].mxu0
        %2161 = vdwg.mxu0
        %v2162 = vadd.f32 %v2157, %v2001
        %v2163 = vld [vmem:[%s15] sm:$0x1]
        %v2164 = vld [vmem:[%s16] sm:$0x1]
        %v2165 = vsel %vm709, %v2162, 0.0
        %2166 = vadd.xlane.f32.xlu0 %v2165
        %v2167 = vpop.xlane.xlu0 %2166
        %v2168 = vmul.f32 %v2167, %v1977
        %v2169 = vsub.f32 %v2162, %v2168
        %v2170 = vmul.f32 %v2169, %v2169
        %v2171 = vsel %vm709, %v2170, 0.0
        %2172 = vadd.xlane.f32.xlu0 %v2171
        %v2173 = vpop.xlane.xlu0 %2172
        %v2174 = vmul.f32 %v2173, %v1977
        %v2175 = vadd.f32 %v2174, 1e-12
        %v2176 = vrsqrt.pop %v2175
        %v2177 = vmul.f32 %v2169, %v2176
        %v2179 = vlaneseq
        %v2180 = vshrl.u32 %v2179, 7
        %v2181 = vsub.s32 0, %v2180
        %v2182 = vrot.slane %v2163, %v2181
        %v2184 = vmul.f32 %v2177, %v2182
        %v2186 = vlaneseq
        %v2187 = vshrl.u32 %v2186, 7
        %v2188 = vsub.s32 0, %v2187
        %v2189 = vrot.slane %v2164, %v2188
        %v2191 = vadd.f32 %v2184, %v2189
        %v2192 = vpack.c.bf16 %v2191, %v2191
        %vm2193 = vcmask 257024
        %2194 = vst.msk [vmem:[%s665] sm:$0xf] %vm2193, %v2192
        %s2195 = sand.u32 %s431, 1
        %s2196 = scalar_lea.sflag [#allocation4], %s2195
        %s2197 = sand.u32 %s431, 1
        %s2198 = smul.addr %s2197, 4
        %s2199 = scalar_lea.vmem [#allocation13], %s2198
        // Predicated region
        $region113: #{tpu_custom_call.1} parent=87 // pred_check
          %p2200 = pneg %p441
        $region114: #{tpu_custom_call.1} parent=87 // pred_check_branch
          %2202 = sbr.rel (%p2200) target = $region116
        $region115: #{tpu_custom_call.1} parent=87 // pred_region
          %s2204 = ssub.s32 64, 64
          %2205 = vsyncadd %s2196, %s2204
          %s2206 = sadd.s32 %s40, %s39
          %s2207 = smul.addr %s2206, 64
          %s2208 = scalar_lea.hbm %s17, %s2207
          %s2210 = sshll.u32 %s2199, 4
          %s2211 = int_to_ptr.vmem [resolvable:$true] %s2210
          %2213 = dma.vmem_to_hbm [thread:$0]  %s2211, 64, %s2208, %s2196
        $region116: #{tpu_custom_call.1} parent=87 // pred_fallthru
          _
      $region88: #{tpu_custom_call.1} parent=5 // pred_fallthru
        _
      %p2214 = scmp.le.s32.totalorder 2, %s30
      // Predicated region
      $region117: #{tpu_custom_call.1} parent=5 // pred_check
        %p2215 = pneg %p2214
      $region118: #{tpu_custom_call.1} parent=5 // pred_check_branch
        %2217 = sbr.rel (%p2215) target = $region120
      $region119: #{tpu_custom_call.1} parent=5 // pred_region
        %s2218 = ssub.s32 %s30, 2
        // Predicated region
        $region121: #{tpu_custom_call.1} parent=119 // pred_check
          %p2219 = pneg %p447
        $region122: #{tpu_custom_call.1} parent=119 // pred_check_branch
          %2221 = sbr.rel (%p2219) target = $region124
        $region123: #{tpu_custom_call.1} parent=119 // pred_region
          %s2222 = sand.u32 %s432, 1
          %s2223 = scalar_lea.sflag [#allocation4], %s2222
          %s2224 = sand.u32 %s432, 1
          %s2225 = smul.addr %s2224, 4
          %s2226 = scalar_lea.vmem [#allocation13], %s2225
          %2227 = dma.done %s2223, 64
        $region124: #{tpu_custom_call.1} parent=119 // pred_fallthru
          _
      $region120: #{tpu_custom_call.1} parent=5 // pred_fallthru
        _
    $region6: #{tpu_custom_call.1} parent=1 // loop_footer
      %s34 = sadd.s32 1, %s30
    $region7: #{tpu_custom_call.1} parent=1 // loop_footer_branch
      %29 = sbr.rel target = $region3
    $region8: #{tpu_custom_call.1} parent=1 // loop_exit
      _
    %2228 = vsyncpa [#allocation3], 1
    %s2229 = scalar_lea.sflag [#allocation3], 1
    %2230 = vsyncpa %s2229, 1
    %2231 = vsyncpa [#allocation6], 1
    %2232 = vsyncpa [#allocation9], 1
    %2233 = vsyncpa [#allocation12], 1
    %2234 = vsyncpa [#allocation4], 1
    %s2235 = scalar_lea.sflag [#allocation4], 1
    %2236 = vsyncpa %s2235, 1

// kernel: tpu_custom_call.1
$region0: #{tpu_custom_call.1}
  #allocation0 [shape = 'u32[]', space=smem, size = 0x4, offset = 0x4, fixed_abs, tag = 'smem constant byte address 0x4 - core index']
  #allocation1 [shape = 'u32[144,128]{1,0:T(1,128)}', space=vmem, size = 0x12000, scoped, tag = 'internal scratch']
  %s0 = inlined_call_operand.vmem [shape: f32[2,8,32], index: 0, kind: input, shape index: {}]
  %s1 = inlined_call_operand.vmem [shape: f32[2,8,32], index: 1, kind: input, shape index: {}]
  %s2 = inlined_call_operand.vmem [shape: f32[2,1,8], index: 2, kind: input, shape index: {}]
  %s3 = inlined_call_operand.vmem [shape: bf16[32,32], index: 3, kind: input, shape index: {}]
  %s4 = inlined_call_operand.hbm [shape: f32[1,32], index: 4, kind: input, shape index: {}]
  %s5 = inlined_call_operand.hbm [shape: bf16[32,64], index: 5, kind: input, shape index: {}]
  %s6 = inlined_call_operand.hbm [shape: f32[1,64], index: 6, kind: input, shape index: {}]
  %s7 = inlined_call_operand.hbm [shape: bf16[32,32], index: 7, kind: input, shape index: {}]
  %s8 = inlined_call_operand.hbm [shape: f32[1,32], index: 8, kind: input, shape index: {}]
  %s9 = inlined_call_operand.hbm [shape: f32[1,32], index: 9, kind: input, shape index: {}]
  %s10 = inlined_call_operand.vmem [shape: f32[1,32], index: 10, kind: input, shape index: {}]
  %s11 = inlined_call_operand.vmem [shape: bf16[32,64], index: 11, kind: input, shape index: {}]
  %s12 = inlined_call_operand.vmem [shape: f32[1,64], index: 12, kind: input, shape index: {}]
  %s13 = inlined_call_operand.vmem [shape: bf16[64,32], index: 13, kind: input, shape index: {}]
  %s14 = inlined_call_operand.vmem [shape: f32[1,32], index: 14, kind: input, shape index: {}]
  %s15 = inlined_call_operand.vmem [shape: f32[1,32], index: 15, kind: input, shape index: {}]
  %s16 = inlined_call_operand.vmem [shape: f32[1,32], index: 16, kind: input, shape index: {}]
  %s17 = inlined_call_operand.hbm [shape: bf16[2,8,32], index: 17, kind: output, shape index: {}]
  %s18 = sld [smem:[#allocation0]]
  $region125: #{tpu_custom_call.1} parent=0
    _
  %s20 = ssub.s32 1, %s18
  %s21 = scalar_select 0, %s20, %s18
  $region1: #{tpu_custom_call.1} parent=0
    #allocation2 [shape = 'u8[512]{0}', space=vmem, size = 0x400, scoped, tag = 'input window, operand 4, single buffered']
    #allocation3 [shape = 's32[2]{0}', space=sflag, size = 0x8, scoped, tag = 'scoped memory for tpu_custom_call.1']
    #allocation4 [shape = 's32[2]{0}', space=sflag, size = 0x8, scoped, tag = 'scoped memory for tpu_custom_call.1']
    #allocation5 [shape = 'u8[8192]{0}', space=vmem, size = 0x2000, scoped, tag = 'input window, operand 5, single buffered']
    #allocation6 [shape = 's32[1]{0}', space=sflag, size = 0x4, scoped, tag = 'scoped memory for tpu_custom_call.1']
    #allocation7 [shape = 'u8[512]{0}', space=vmem, size = 0x400, scoped, tag = 'input window, operand 6, single buffered']
    #allocation8 [shape = 'u8[8192]{0}', space=vmem, size = 0x2000, scoped, tag = 'input window, operand 7, single buffered']
    #allocation9 [shape = 's32[1]{0}', space=sflag, size = 0x4, scoped, tag = 'scoped memory for tpu_custom_call.1']
    #allocation10 [shape = 'u8[512]{0}', space=vmem, size = 0x400, scoped, tag = 'input window, operand 8, single buffered']
    #allocation11 [shape = 'u8[512]{0}', space=vmem, size = 0x400, scoped, tag = 'input window, operand 9, single buffered']
    #allocation12 [shape = 's32[1]{0}', space=sflag, size = 0x4, scoped, tag = 'scoped memory for tpu_custom_call.1']
    #allocation13 [shape = 'u8[4096]{0}', space=vmem, size = 0x1000, scoped, tag = 'output window, operand 0']
    %22 = vsyncpa [#allocation3], 0
    %23 = vsyncpa [#allocation6], 0
    %24 = vsyncpa [#allocation9], 0
    %25 = vsyncpa [#allocation12], 0
    %26 = vsyncpa [#allocation4], 0
    %s27 = scalar_lea.sflag [#allocation4], 1
    %28 = vsyncpa %s27, 0
    loop: start=0, step=1, limit=4
    $region2: #{tpu_custom_call.1} parent=1 // loop_pre_header
      _
    $region3: #{tpu_custom_call.1} parent=1 // loop_header
      %s30 = sphi 0, %s34
      %p31 = scmp.ge.s32.totalorder %s30, 4
      %s37 = sphi 0, %s49
      %s38 = sphi 0, %s45
      %s39 = sphi 0, %s37
      %s40 = sphi 0, %s38
      %s41 = sphi 0, %s39
      %s42 = sphi 0, %s40
      %s54 = sphi 0, %s56
      %s57 = sphi 0, %s54
      %s58 = sphi 0, %s57
      %s74 = sphi 0, %s58
      %s80 = sphi 0, %s82
      %s83 = sphi 0, %s80
      %s84 = sphi 0, %s83
      %s100 = sphi 0, %s84
      %s106 = sphi 0, %s108
      %s109 = sphi 0, %s106
      %s110 = sphi 0, %s109
      %s126 = sphi 0, %s110
      %s130 = sphi 0, %s130
      %s132 = sphi 0, %s130
      %s133 = sphi 0, %s132
      %s147 = sphi 0, %s133
      %s151 = sphi 0, %s151
      %s153 = sphi 0, %s151
      %s154 = sphi 0, %s153
      %s168 = sphi 0, %s154
      %s172 = sphi 0, %s172
      %s174 = sphi 0, %s172
      %s175 = sphi 0, %s174
      %s189 = sphi 0, %s175
      %s193 = sphi 0, %s193
      %s195 = sphi 0, %s193
      %s196 = sphi 0, %s195
      %s210 = sphi 0, %s196
      %s214 = sphi 0, %s214
      %s216 = sphi 0, %s214
      %s217 = sphi 0, %s216
      %s231 = sphi 0, %s217
      %s235 = sphi 0, %s235
      %s237 = sphi 0, %s235
      %s238 = sphi 0, %s237
      %s252 = sphi 0, %s238
      %s256 = sphi 0, %s256
      %s258 = sphi 0, %s256
      %s259 = sphi 0, %s258
      %s273 = sphi 0, %s259
      %s277 = sphi 0, %s277
      %s279 = sphi 0, %s277
      %s280 = sphi 0, %s279
      %s294 = sphi 0, %s280
      %s298 = sphi 0, %s298
      %s300 = sphi 0, %s298
      %s301 = sphi 0, %s300
      %s315 = sphi 0, %s301
      %s319 = sphi 0, %s319
      %s321 = sphi 0, %s319
      %s322 = sphi 0, %s321
      %s336 = sphi 0, %s322
      %s340 = sphi 0, %s340
      %s342 = sphi 0, %s340
      %s343 = sphi 0, %s342
      %s357 = sphi 0, %s343
      %s361 = sphi 0, %s361
      %s363 = sphi 0, %s361
      %s364 = sphi 0, %s363
      %s378 = sphi 0, %s364
      %s382 = sphi 0, %s382
      %s384 = sphi 0, %s382
      %s385 = sphi 0, %s384
      %s399 = sphi 0, %s385
      %s403 = sphi 0, %s403
      %s405 = sphi 0, %s403
      %s406 = sphi 0, %s405
      %s420 = sphi 0, %s406
      %s428 = sphi 0, %s430
      %s431 = sphi 0, %s428
      %s432 = sphi 0, %s431
      %s448 = sphi 0, %s432
    $region4: #{tpu_custom_call.1} parent=1 // loop_header_branch
      %33 = sbr.rel (%p31) target = $region8
    $region5: #{tpu_custom_call.1} parent=1 // loop_body
      %s35 = ssub.s32 %s30, 1
      %s36 = ssub.s32 %s30, 2
      %s43 = sadd.s32 1, %s38
      %p44 = scmp.ge.s32.totalorder %s43, 1
      %s45 = scalar_select %p44, 0, %s43
      %s46 = sadd.s32 1, %s37
      %s47 = scalar_select %p44, %s46, %s37
      %p48 = scmp.ge.s32.totalorder %s47, 2
      %s49 = scalar_select %p48, 0, %s47
      %s50 = ssub.s32 %s37, %s49
      %s51 = ssub.s32 %s38, %s45
      %s52 = sor.u32 %s50, %s51
      %p53 = scmp.eq.s32.totalorder %s52, 0
      %s55 = sadd.s32 %s54, 1
      %s56 = scalar_select %p53, %s54, %s55
      %p59 = pneg %p53
      %p60 = scmp.eq.s32.totalorder %s30, 1
      %p61 = por %p59, %p60
      %p62 = scmp.ne.s32.totalorder %s54, %s57
      %p63 = scmp.eq.s32.totalorder %s30, 0
      %p64 = por %p62, %p63
      %p65 = scmp.ne.s32.totalorder %s54, %s57
      %p66 = scmp.eq.s32.totalorder %s35, 1
      %p67 = por %p65, %p66
      %p68 = scmp.ne.s32.totalorder %s57, %s58
      %p69 = scmp.eq.s32.totalorder %s35, 0
      %p70 = por %p68, %p69
      %p71 = scmp.ne.s32.totalorder %s57, %s58
      %p72 = scmp.eq.s32.totalorder %s36, 1
      %p73 = por %p71, %p72
      %p75 = scmp.ne.s32.totalorder %s58, %s74
      %p76 = scmp.eq.s32.totalorder %s36, 0
      %p77 = por %p75, %p76
      %s78 = ssub.s32 %s37, %s49
      %p79 = scmp.eq.s32.totalorder %s78, 0
      %s81 = sadd.s32 %s80, 1
      %s82 = scalar_select %p79, %s80, %s81
      %p85 = pneg %p79
      %p86 = scmp.eq.s32.totalorder %s30, 1
      %p87 = por %p85, %p86
      %p88 = scmp.ne.s32.totalorder %s80, %s83
      %p89 = scmp.eq.s32.totalorder %s30, 0
      %p90 = por %p88, %p89
      %p91 = scmp.ne.s32.totalorder %s80, %s83
      %p92 = scmp.eq.s32.totalorder %s35, 1
      %p93 = por %p91, %p92
      %p94 = scmp.ne.s32.totalorder %s83, %s84
      %p95 = scmp.eq.s32.totalorder %s35, 0
      %p96 = por %p94, %p95
      %p97 = scmp.ne.s32.totalorder %s83, %s84
      %p98 = scmp.eq.s32.totalorder %s36, 1
      %p99 = por %p97, %p98
      %p101 = scmp.ne.s32.totalorder %s84, %s100
      %p102 = scmp.eq.s32.totalorder %s36, 0
      %p103 = por %p101, %p102
      %s104 = ssub.s32 %s37, %s49
      %p105 = scmp.eq.s32.totalorder %s104, 0
      %s107 = sadd.s32 %s106, 1
      %s108 = scalar_select %p105, %s106, %s107
      %p111 = pneg %p105
      %p112 = scmp.eq.s32.totalorder %s30, 1
      %p113 = por %p111, %p112
      %p114 = scmp.ne.s32.totalorder %s106, %s109
      %p115 = scmp.eq.s32.totalorder %s30, 0
      %p116 = por %p114, %p115
      %p117 = scmp.ne.s32.totalorder %s106, %s109
      %p118 = scmp.eq.s32.totalorder %s35, 1
      %p119 = por %p117, %p118
      %p120 = scmp.ne.s32.totalorder %s109, %s110
      %p121 = scmp.eq.s32.totalorder %s35, 0
      %p122 = por %p120, %p121
      %p123 = scmp.ne.s32.totalorder %s109, %s110
      %p124 = scmp.eq.s32.totalorder %s36, 1
      %p125 = por %p123, %p124
      %p127 = scmp.ne.s32.totalorder %s110, %s126
      %p128 = scmp.eq.s32.totalorder %s36, 0
      %p129 = por %p127, %p128
      %s131 = sadd.s32 %s130, 1
      %p134 = scmp.eq.s32.totalorder %s30, 1
      %p135 = scmp.ne.s32.totalorder %s130, %s132
      %p136 = scmp.eq.s32.totalorder %s30, 0
      %p137 = por %p135, %p136
      %p138 = scmp.ne.s32.totalorder %s130, %s132
      %p139 = scmp.eq.s32.totalorder %s35, 1
      %p140 = por %p138, %p139
      %p141 = scmp.ne.s32.totalorder %s132, %s133
      %p142 = scmp.eq.s32.totalorder %s35, 0
      %p143 = por %p141, %p142
      %p144 = scmp.ne.s32.totalorder %s132, %s133
      %p145 = scmp.eq.s32.totalorder %s36, 1
      %p146 = por %p144, %p145
      %p148 = scmp.ne.s32.totalorder %s133, %s147
      %p149 = scmp.eq.s32.totalorder %s36, 0
      %p150 = por %p148, %p149
      %s152 = sadd.s32 %s151, 1
      %p155 = scmp.eq.s32.totalorder %s30, 1
      %p156 = scmp.ne.s32.totalorder %s151, %s153
      %p157 = scmp.eq.s32.totalorder %s30, 0
      %p158 = por %p156, %p157
      %p159 = scmp.ne.s32.totalorder %s151, %s153
      %p160 = scmp.eq.s32.totalorder %s35, 1
      %p161 = por %p159, %p160
      %p162 = scmp.ne.s32.totalorder %s153, %s154
      %p163 = scmp.eq.s32.totalorder %s35, 0
      %p164 = por %p162, %p163
      %p165 = scmp.ne.s32.totalorder %s153, %s154
      %p166 = scmp.eq.s32.totalorder %s36, 1
      %p167 = por %p165, %p166
      %p169 = scmp.ne.s32.totalorder %s154, %s168
      %p170 = scmp.eq.s32.totalorder %s36, 0
      %p171 = por %p169, %p170
      %s173 = sadd.s32 %s172, 1
      %p176 = scmp.eq.s32.totalorder %s30, 1
      %p177 = scmp.ne.s32.totalorder %s172, %s174
      %p178 = scmp.eq.s32.totalorder %s30, 0
      %p179 = por %p177, %p178
      %p180 = scmp.ne.s32.totalorder %s172, %s174
      %p181 = scmp.eq.s32.totalorder %s35, 1
      %p182 = por %p180, %p181
      %p183 = scmp.ne.s32.totalorder %s174, %s175
      %p184 = scmp.eq.s32.totalorder %s35, 0
      %p185 = por %p183, %p184
      %p186 = scmp.ne.s32.totalorder %s174, %s175
      %p187 = scmp.eq.s32.totalorder %s36, 1
      %p188 = por %p186, %p187
      %p190 = scmp.ne.s32.totalorder %s175, %s189
      %p191 = scmp.eq.s32.totalorder %s36, 0
      %p192 = por %p190, %p191
      %s194 = sadd.s32 %s193, 1
      %p197 = scmp.eq.s32.totalorder %s30, 1
      %p198 = scmp.ne.s32.totalorder %s193, %s195
      %p199 = scmp.eq.s32.totalorder %s30, 0
      %p200 = por %p198, %p199
      %p201 = scmp.ne.s32.totalorder %s193, %s195
      %p202 = scmp.eq.s32.totalorder %s35, 1
      %p203 = por %p201, %p202
      %p204 = scmp.ne.s32.totalorder %s195, %s196
      %p205 = scmp.eq.s32.totalorder %s35, 0
      %p206 = por %p204, %p205
      %p207 = scmp.ne.s32.totalorder %s195, %s196
      %p208 = scmp.eq.s32.totalorder %s36, 1
      %p209 = por %p207, %p208
      %p211 = scmp.ne.s32.totalorder %s196, %s210
      %p212 = scmp.eq.s32.totalorder %s36, 0
      %p213 = por %p211, %p212
      %s215 = sadd.s32 %s214, 1
      %p218 = scmp.eq.s32.totalorder %s30, 1
      %p219 = scmp.ne.s32.totalorder %s214, %s216
      %p220 = scmp.eq.s32.totalorder %s30, 0
      %p221 = por %p219, %p220
      %p222 = scmp.ne.s32.totalorder %s214, %s216
      %p223 = scmp.eq.s32.totalorder %s35, 1
      %p224 = por %p222, %p223
      %p225 = scmp.ne.s32.totalorder %s216, %s217
      %p226 = scmp.eq.s32.totalorder %s35, 0
      %p227 = por %p225, %p226
      %p228 = scmp.ne.s32.totalorder %s216, %s217
      %p229 = scmp.eq.s32.totalorder %s36, 1
      %p230 = por %p228, %p229
      %p232 = scmp.ne.s32.totalorder %s217, %s231
      %p233 = scmp.eq.s32.totalorder %s36, 0
      %p234 = por %p232, %p233
      %s236 = sadd.s32 %s235, 1
      %p239 = scmp.eq.s32.totalorder %s30, 1
      %p240 = scmp.ne.s32.totalorder %s235, %s237
      %p241 = scmp.eq.s32.totalorder %s30, 0
      %p242 = por %p240, %p241
      %p243 = scmp.ne.s32.totalorder %s235, %s237
      %p244 = scmp.eq.s32.totalorder %s35, 1
      %p245 = por %p243, %p244
      %p246 = scmp.ne.s32.totalorder %s237, %s238
      %p247 = scmp.eq.s32.totalorder %s35, 0
      %p248 = por %p246, %p247
      %p249 = scmp.ne.s32.totalorder %s237, %s238
      %p250 = scmp.eq.s32.totalorder %s36, 1
      %p251 = por %p249, %p250
      %p253 = scmp.ne.s32.totalorder %s238, %s252
      %p254 = scmp.eq.s32.totalorder %s36, 0
      %p255 = por %p253, %p254
      %s257 = sadd.s32 %s256, 1
      %p260 = scmp.eq.s32.totalorder %s30, 1
      %p261 = scmp.ne.s32.totalorder %s256, %s258
      %p262 = scmp.eq.s32.totalorder %s30, 0
      %p263 = por %p261, %p262
      %p264 = scmp.ne.s32.totalorder %s256, %s258
      %p265 = scmp.eq.s32.totalorder %s35, 1
      %p266 = por %p264, %p265
      %p267 = scmp.ne.s32.totalorder %s258, %s259
      %p268 = scmp.eq.s32.totalorder %s35, 0
      %p269 = por %p267, %p268
      %p270 = scmp.ne.s32.totalorder %s258, %s259
      %p271 = scmp.eq.s32.totalorder %s36, 1
      %p272 = por %p270, %p271
      %p274 = scmp.ne.s32.totalorder %s259, %s273
      %p275 = scmp.eq.s32.totalorder %s36, 0
      %p276 = por %p274, %p275
      %s278 = sadd.s32 %s277, 1
      %p281 = scmp.eq.s32.totalorder %s30, 1
      %p282 = scmp.ne.s32.totalorder %s277, %s279
      %p283 = scmp.eq.s32.totalorder %s30, 0
      %p284 = por %p282, %p283
      %p285 = scmp.ne.s32.totalorder %s277, %s279
      %p286 = scmp.eq.s32.totalorder %s35, 1
      %p287 = por %p285, %p286
      %p288 = scmp.ne.s32.totalorder %s279, %s280
      %p289 = scmp.eq.s32.totalorder %s35, 0
      %p290 = por %p288, %p289
      %p291 = scmp.ne.s32.totalorder %s279, %s280
      %p292 = scmp.eq.s32.totalorder %s36, 1
      %p293 = por %p291, %p292
      %p295 = scmp.ne.s32.totalorder %s280, %s294
      %p296 = scmp.eq.s32.totalorder %s36, 0
      %p297 = por %p295, %p296
      %s299 = sadd.s32 %s298, 1
      %p302 = scmp.eq.s32.totalorder %s30, 1
      %p303 = scmp.ne.s32.totalorder %s298, %s300
      %p304 = scmp.eq.s32.totalorder %s30, 0
      %p305 = por %p303, %p304
      %p306 = scmp.ne.s32.totalorder %s298, %s300
      %p307 = scmp.eq.s32.totalorder %s35, 1
      %p308 = por %p306, %p307
      %p309 = scmp.ne.s32.totalorder %s300, %s301
      %p310 = scmp.eq.s32.totalorder %s35, 0
      %p311 = por %p309, %p310
      %p312 = scmp.ne.s32.totalorder %s300, %s301
      %p313 = scmp.eq.s32.totalorder %s36, 1
      %p314 = por %p312, %p313
      %p316 = scmp.ne.s32.totalorder %s301, %s315
      %p317 = scmp.eq.s32.totalorder %s36, 0
      %p318 = por %p316, %p317
      %s320 = sadd.s32 %s319, 1
      %p323 = scmp.eq.s32.totalorder %s30, 1
      %p324 = scmp.ne.s32.totalorder %s319, %s321
      %p325 = scmp.eq.s32.totalorder %s30, 0
      %p326 = por %p324, %p325
      %p327 = scmp.ne.s32.totalorder %s319, %s321
      %p328 = scmp.eq.s32.totalorder %s35, 1
      %p329 = por %p327, %p328
      %p330 = scmp.ne.s32.totalorder %s321, %s322
      %p331 = scmp.eq.s32.totalorder %s35, 0
      %p332 = por %p330, %p331
      %p333 = scmp.ne.s32.totalorder %s321, %s322
      %p334 = scmp.eq.s32.totalorder %s36, 1
      %p335 = por %p333, %p334
      %p337 = scmp.ne.s32.totalorder %s322, %s336
      %p338 = scmp.eq.s32.totalorder %s36, 0
      %p339 = por %p337, %p338
      %s341 = sadd.s32 %s340, 1
      %p344 = scmp.eq.s32.totalorder %s30, 1
      %p345 = scmp.ne.s32.totalorder %s340, %s342
      %p346 = scmp.eq.s32.totalorder %s30, 0
      %p347 = por %p345, %p346
      %p348 = scmp.ne.s32.totalorder %s340, %s342
      %p349 = scmp.eq.s32.totalorder %s35, 1
      %p350 = por %p348, %p349
      %p351 = scmp.ne.s32.totalorder %s342, %s343
      %p352 = scmp.eq.s32.totalorder %s35, 0
      %p353 = por %p351, %p352
      %p354 = scmp.ne.s32.totalorder %s342, %s343
      %p355 = scmp.eq.s32.totalorder %s36, 1
      %p356 = por %p354, %p355
      %p358 = scmp.ne.s32.totalorder %s343, %s357
      %p359 = scmp.eq.s32.totalorder %s36, 0
      %p360 = por %p358, %p359
      %s362 = sadd.s32 %s361, 1
      %p365 = scmp.eq.s32.totalorder %s30, 1
      %p366 = scmp.ne.s32.totalorder %s361, %s363
      %p367 = scmp.eq.s32.totalorder %s30, 0
      %p368 = por %p366, %p367
      %p369 = scmp.ne.s32.totalorder %s361, %s363
      %p370 = scmp.eq.s32.totalorder %s35, 1
      %p371 = por %p369, %p370
      %p372 = scmp.ne.s32.totalorder %s363, %s364
      %p373 = scmp.eq.s32.totalorder %s35, 0
      %p374 = por %p372, %p373
      %p375 = scmp.ne.s32.totalorder %s363, %s364
      %p376 = scmp.eq.s32.totalorder %s36, 1
      %p377 = por %p375, %p376
      %p379 = scmp.ne.s32.totalorder %s364, %s378
      %p380 = scmp.eq.s32.totalorder %s36, 0
      %p381 = por %p379, %p380
      %s383 = sadd.s32 %s382, 1
      %p386 = scmp.eq.s32.totalorder %s30, 1
      %p387 = scmp.ne.s32.totalorder %s382, %s384
      %p388 = scmp.eq.s32.totalorder %s30, 0
      %p389 = por %p387, %p388
      %p390 = scmp.ne.s32.totalorder %s382, %s384
      %p391 = scmp.eq.s32.totalorder %s35, 1
      %p392 = por %p390, %p391
      %p393 = scmp.ne.s32.totalorder %s384, %s385
      %p394 = scmp.eq.s32.totalorder %s35, 0
      %p395 = por %p393, %p394
      %p396 = scmp.ne.s32.totalorder %s384, %s385
      %p397 = scmp.eq.s32.totalorder %s36, 1
      %p398 = por %p396, %p397
      %p400 = scmp.ne.s32.totalorder %s385, %s399
      %p401 = scmp.eq.s32.totalorder %s36, 0
      %p402 = por %p400, %p401
      %s404 = sadd.s32 %s403, 1
      %p407 = scmp.eq.s32.totalorder %s30, 1
      %p408 = scmp.ne.s32.totalorder %s403, %s405
      %p409 = scmp.eq.s32.totalorder %s30, 0
      %p410 = por %p408, %p409
      %p411 = scmp.ne.s32.totalorder %s403, %s405
      %p412 = scmp.eq.s32.totalorder %s35, 1
      %p413 = por %p411, %p412
      %p414 = scmp.ne.s32.totalorder %s405, %s406
      %p415 = scmp.eq.s32.totalorder %s35, 0
      %p416 = por %p414, %p415
      %p417 = scmp.ne.s32.totalorder %s405, %s406
      %p418 = scmp.eq.s32.totalorder %s36, 1
      %p419 = por %p417, %p418
      %p421 = scmp.ne.s32.totalorder %s406, %s420
      %p422 = scmp.eq.s32.totalorder %s36, 0
      %p423 = por %p421, %p422
      %s424 = ssub.s32 %s37, %s49
      %s425 = ssub.s32 %s38, %s45
      %s426 = sor.u32 %s424, %s425
      %p427 = scmp.eq.s32.totalorder %s426, 0
      %s429 = sadd.s32 %s428, 1
      %s430 = scalar_select %p427, %s428, %s429
      %p433 = pneg %p427
      %p434 = scmp.eq.s32.totalorder %s30, 1
      %p435 = por %p433, %p434
      %p436 = scmp.ne.s32.totalorder %s428, %s431
      %p437 = scmp.eq.s32.totalorder %s30, 0
      %p438 = por %p436, %p437
      %p439 = scmp.ne.s32.totalorder %s428, %s431
      %p440 = scmp.eq.s32.totalorder %s35, 1
      %p441 = por %p439, %p440
      %p442 = scmp.ne.s32.totalorder %s431, %s432
      %p443 = scmp.eq.s32.totalorder %s35, 0
      %p444 = por %p442, %p443
      %p445 = scmp.ne.s32.totalorder %s431, %s432
      %p446 = scmp.eq.s32.totalorder %s36, 1
      %p447 = por %p445, %p446
      %p449 = scmp.ne.s32.totalorder %s432, %s448
      %p450 = scmp.eq.s32.totalorder %s36, 0
      %p451 = por %p449, %p450
      %p452 = scmp.le.s32.totalorder 1, %s30
      %p453 = scmp.lt.s32.totalorder %s30, 3
      %p454 = pnand %p452, %p453
      %p455 = pneg %p454
      // Predicated region
      $region9: #{tpu_custom_call.1} parent=5 // pred_check
        _
      $region10: #{tpu_custom_call.1} parent=5 // pred_check_branch
        %457 = sbr.rel (%p454) target = $region12
      $region11: #{tpu_custom_call.1} parent=5 // pred_region
        %s458 = ssub.s32 %s30, 1
        // Predicated region
        $region13: #{tpu_custom_call.1} parent=11 // pred_check
          %p459 = pneg %p143
        $region14: #{tpu_custom_call.1} parent=11 // pred_check_branch
          %461 = sbr.rel (%p459) target = $region16
        $region15: #{tpu_custom_call.1} parent=11 // pred_region
          _
        $region16: #{tpu_custom_call.1} parent=11 // pred_fallthru
          _
        // Predicated region
        $region17: #{tpu_custom_call.1} parent=11 // pred_check
          %p462 = pneg %p164
        $region18: #{tpu_custom_call.1} parent=11 // pred_check_branch
          %464 = sbr.rel (%p462) target = $region20
        $region19: #{tpu_custom_call.1} parent=11 // pred_region
          %s466 = ssub.s32 16, 16
          %467 = vsyncadd [#allocation3], %s466
          %s469 = sshll.u32 [#allocation2], 4
          %s470 = int_to_ptr.vmem [resolvable:$true] %s469
          %472 = dma.hbm_to_vmem [thread:$0]  %s4, 16, %s470, [#allocation3]
        $region20: #{tpu_custom_call.1} parent=11 // pred_fallthru
          _
        // Predicated region
        $region21: #{tpu_custom_call.1} parent=11 // pred_check
          %p473 = pneg %p185
        $region22: #{tpu_custom_call.1} parent=11 // pred_check_branch
          %475 = sbr.rel (%p473) target = $region24
        $region23: #{tpu_custom_call.1} parent=11 // pred_region
          %s477 = ssub.s32 256, 256
          %478 = vsyncadd [#allocation6], %s477
          %s479 = sshll.u32 [#allocation5], 4
          %s480 = int_to_ptr.vmem [resolvable:$true] %s479
          %485 = dma.hbm_to_vmem [thread:$0]  %s5, 256, %s480, [#allocation6], 64, 64, 4
        $region24: #{tpu_custom_call.1} parent=11 // pred_fallthru
          _
        // Predicated region
        $region25: #{tpu_custom_call.1} parent=11 // pred_check
          %p486 = pneg %p206
        $region26: #{tpu_custom_call.1} parent=11 // pred_check_branch
          %488 = sbr.rel (%p486) target = $region28
        $region27: #{tpu_custom_call.1} parent=11 // pred_region
          %s490 = ssub.s32 16, 16
          %491 = vsyncadd [#allocation6], %s490
          %s493 = sshll.u32 [#allocation7], 4
          %s494 = int_to_ptr.vmem [resolvable:$true] %s493
          %496 = dma.hbm_to_vmem [thread:$0]  %s6, 16, %s494, [#allocation6]
        $region28: #{tpu_custom_call.1} parent=11 // pred_fallthru
          _
        // Predicated region
        $region29: #{tpu_custom_call.1} parent=11 // pred_check
          %p497 = pneg %p227
        $region30: #{tpu_custom_call.1} parent=11 // pred_check_branch
          %499 = sbr.rel (%p497) target = $region32
        $region31: #{tpu_custom_call.1} parent=11 // pred_region
          %s501 = ssub.s32 256, 256
          %502 = vsyncadd [#allocation9], %s501
          %s503 = sshll.u32 [#allocation8], 4
          %s504 = int_to_ptr.vmem [resolvable:$true] %s503
          %509 = dma.hbm_to_vmem [thread:$0]  %s7, 256, %s504, [#allocation9], 64, 64, 4
        $region32: #{tpu_custom_call.1} parent=11 // pred_fallthru
          _
        // Predicated region
        $region33: #{tpu_custom_call.1} parent=11 // pred_check
          %p510 = pneg %p248
        $region34: #{tpu_custom_call.1} parent=11 // pred_check_branch
          %512 = sbr.rel (%p510) target = $region36
        $region35: #{tpu_custom_call.1} parent=11 // pred_region
          %s514 = ssub.s32 16, 16
          %515 = vsyncadd [#allocation9], %s514
          %s517 = sshll.u32 [#allocation10], 4
          %s518 = int_to_ptr.vmem [resolvable:$true] %s517
          %520 = dma.hbm_to_vmem [thread:$0]  %s8, 16, %s518, [#allocation9]
        $region36: #{tpu_custom_call.1} parent=11 // pred_fallthru
          _
        // Predicated region
        $region37: #{tpu_custom_call.1} parent=11 // pred_check
          %p521 = pneg %p269
        $region38: #{tpu_custom_call.1} parent=11 // pred_check_branch
          %523 = sbr.rel (%p521) target = $region40
        $region39: #{tpu_custom_call.1} parent=11 // pred_region
          %s525 = ssub.s32 16, 16
          %526 = vsyncadd [#allocation12], %s525
          %s528 = sshll.u32 [#allocation11], 4
          %s529 = int_to_ptr.vmem [resolvable:$true] %s528
          %531 = dma.hbm_to_vmem [thread:$0]  %s9, 16, %s529, [#allocation12]
        $region40: #{tpu_custom_call.1} parent=11 // pred_fallthru
          _
        // Predicated region
        $region41: #{tpu_custom_call.1} parent=11 // pred_check
          %p532 = pneg %p290
        $region42: #{tpu_custom_call.1} parent=11 // pred_check_branch
          %534 = sbr.rel (%p532) target = $region44
        $region43: #{tpu_custom_call.1} parent=11 // pred_region
          _
        $region44: #{tpu_custom_call.1} parent=11 // pred_fallthru
          _
        // Predicated region
        $region45: #{tpu_custom_call.1} parent=11 // pred_check
          %p535 = pneg %p311
        $region46: #{tpu_custom_call.1} parent=11 // pred_check_branch
          %537 = sbr.rel (%p535) target = $region48
        $region47: #{tpu_custom_call.1} parent=11 // pred_region
          _
        $region48: #{tpu_custom_call.1} parent=11 // pred_fallthru
          _
        // Predicated region
        $region49: #{tpu_custom_call.1} parent=11 // pred_check
          %p538 = pneg %p332
        $region50: #{tpu_custom_call.1} parent=11 // pred_check_branch
          %540 = sbr.rel (%p538) target = $region52
        $region51: #{tpu_custom_call.1} parent=11 // pred_region
          _
        $region52: #{tpu_custom_call.1} parent=11 // pred_fallthru
          _
        // Predicated region
        $region53: #{tpu_custom_call.1} parent=11 // pred_check
          %p541 = pneg %p353
        $region54: #{tpu_custom_call.1} parent=11 // pred_check_branch
          %543 = sbr.rel (%p541) target = $region56
        $region55: #{tpu_custom_call.1} parent=11 // pred_region
          _
        $region56: #{tpu_custom_call.1} parent=11 // pred_fallthru
          _
        // Predicated region
        $region57: #{tpu_custom_call.1} parent=11 // pred_check
          %p544 = pneg %p374
        $region58: #{tpu_custom_call.1} parent=11 // pred_check_branch
          %546 = sbr.rel (%p544) target = $region60
        $region59: #{tpu_custom_call.1} parent=11 // pred_region
          _
        $region60: #{tpu_custom_call.1} parent=11 // pred_fallthru
          _
        // Predicated region
        $region61: #{tpu_custom_call.1} parent=11 // pred_check
          %p547 = pneg %p395
        $region62: #{tpu_custom_call.1} parent=11 // pred_check_branch
          %549 = sbr.rel (%p547) target = $region64
        $region63: #{tpu_custom_call.1} parent=11 // pred_region
          _
        $region64: #{tpu_custom_call.1} parent=11 // pred_fallthru
          _
        // Predicated region
        $region65: #{tpu_custom_call.1} parent=11 // pred_check
          %p550 = pneg %p416
        $region66: #{tpu_custom_call.1} parent=11 // pred_check_branch
          %552 = sbr.rel (%p550) target = $region68
        $region67: #{tpu_custom_call.1} parent=11 // pred_region
          _
        $region68: #{tpu_custom_call.1} parent=11 // pred_fallthru
          _
      $region12: #{tpu_custom_call.1} parent=5 // pred_fallthru
        _
      %p553 = scmp.lt.s32.totalorder %s30, 2
      // Predicated region
      $region69: #{tpu_custom_call.1} parent=5 // pred_check
        %p554 = pneg %p553
      $region70: #{tpu_custom_call.1} parent=5 // pred_check_branch
        %556 = sbr.rel (%p554) target = $region72
      $region71: #{tpu_custom_call.1} parent=5 // pred_region
        // Predicated region
        $region73: #{tpu_custom_call.1} parent=71 // pred_check
          %p557 = pneg %p64
        $region74: #{tpu_custom_call.1} parent=71 // pred_check_branch
          %559 = sbr.rel (%p557) target = $region76
        $region75: #{tpu_custom_call.1} parent=71 // pred_region
          %p560 = scmp.lt.s32.totalorder %s37, 1
          %s561 = scalar_select %p560, %s37, 1
          %p562 = scmp.lt.s32.totalorder %s38, 0
          %s563 = scalar_select %p562, %s38, 0
          %s564 = sadd.s32 %s563, %s561
          %s565 = smul.addr %s564, 8
          %s566 = scalar_lea.vmem %s0, %s565
        $region76: #{tpu_custom_call.1} parent=71 // pred_fallthru
          _
        // Predicated region
        $region77: #{tpu_custom_call.1} parent=71 // pred_check
          %p567 = pneg %p90
        $region78: #{tpu_custom_call.1} parent=71 // pred_check_branch
          %569 = sbr.rel (%p567) target = $region80
        $region79: #{tpu_custom_call.1} parent=71 // pred_region
          %p570 = scmp.lt.s32.totalorder %s37, 1
          %s571 = scalar_select %p570, %s37, 1
          %s572 = smul.addr %s571, 8
          %s573 = scalar_lea.vmem %s1, %s572
        $region80: #{tpu_custom_call.1} parent=71 // pred_fallthru
          _
        // Predicated region
        $region81: #{tpu_custom_call.1} parent=71 // pred_check
          %p574 = pneg %p116
        $region82: #{tpu_custom_call.1} parent=71 // pred_check_branch
          %576 = sbr.rel (%p574) target = $region84
        $region83: #{tpu_custom_call.1} parent=71 // pred_region
          %p577 = scmp.lt.s32.totalorder %s37, 1
          %s578 = scalar_select %p577, %s37, 1
          %s579 = scalar_lea.vmem %s2, %s578
        $region84: #{tpu_custom_call.1} parent=71 // pred_fallthru
          _
      $region72: #{tpu_custom_call.1} parent=5 // pred_fallthru
        _
      %p580 = scmp.le.s32.totalorder 1, %s30
      %p581 = scmp.lt.s32.totalorder %s30, 3
      %p582 = pnand %p580, %p581
      %p583 = pneg %p582
      // Predicated region
      $region85: #{tpu_custom_call.1} parent=5 // pred_check
        _
      $region86: #{tpu_custom_call.1} parent=5 // pred_check_branch
        %585 = sbr.rel (%p582) target = $region88
      $region87: #{tpu_custom_call.1} parent=5 // pred_region
        %s586 = ssub.s32 %s30, 1
        // Predicated region
        $region89: #{tpu_custom_call.1} parent=87 // pred_check
          %p587 = pneg %p164
        $region90: #{tpu_custom_call.1} parent=87 // pred_check_branch
          %589 = sbr.rel (%p587) target = $region92
        $region91: #{tpu_custom_call.1} parent=87 // pred_region
          %590 = dma.done [#allocation3], 16
        $region92: #{tpu_custom_call.1} parent=87 // pred_fallthru
          _
        // Predicated region
        $region93: #{tpu_custom_call.1} parent=87 // pred_check
          %p591 = pneg %p185
        $region94: #{tpu_custom_call.1} parent=87 // pred_check_branch
          %593 = sbr.rel (%p591) target = $region96
        $region95: #{tpu_custom_call.1} parent=87 // pred_region
          %594 = dma.done [#allocation6], 256
        $region96: #{tpu_custom_call.1} parent=87 // pred_fallthru
          _
        // Predicated region
        $region97: #{tpu_custom_call.1} parent=87 // pred_check
          %p595 = pneg %p206
        $region98: #{tpu_custom_call.1} parent=87 // pred_check_branch
          %597 = sbr.rel (%p595) target = $region100
        $region99: #{tpu_custom_call.1} parent=87 // pred_region
          %598 = dma.done [#allocation6], 16
        $region100: #{tpu_custom_call.1} parent=87 // pred_fallthru
          _
        // Predicated region
        $region101: #{tpu_custom_call.1} parent=87 // pred_check
          %p599 = pneg %p227
        $region102: #{tpu_custom_call.1} parent=87 // pred_check_branch
          %601 = sbr.rel (%p599) target = $region104
        $region103: #{tpu_custom_call.1} parent=87 // pred_region
          %602 = dma.done [#allocation9], 256
        $region104: #{tpu_custom_call.1} parent=87 // pred_fallthru
          _
        // Predicated region
        $region105: #{tpu_custom_call.1} parent=87 // pred_check
          %p603 = pneg %p248
        $region106: #{tpu_custom_call.1} parent=87 // pred_check_branch
          %605 = sbr.rel (%p603) target = $region108
        $region107: #{tpu_custom_call.1} parent=87 // pred_region
          %606 = dma.done [#allocation9], 16
        $region108: #{tpu_custom_call.1} parent=87 // pred_fallthru
          _
        // Predicated region
        $region109: #{tpu_custom_call.1} parent=87 // pred_check
          %p607 = pneg %p269
        $region110: #{tpu_custom_call.1} parent=87 // pred_check_branch
          %609 = sbr.rel (%p607) target = $region112
        $region111: #{tpu_custom_call.1} parent=87 // pred_region
          %610 = dma.done [#allocation12], 16
        $region112: #{tpu_custom_call.1} parent=87 // pred_fallthru
          _
        %p611 = scmp.lt.s32.totalorder %s39, 1
        %s612 = scalar_select %p611, %s39, 1
        %p613 = scmp.lt.s32.totalorder %s40, 0
        %s614 = scalar_select %p613, %s40, 0
        %s615 = sadd.s32 %s614, %s612
        %s616 = smul.addr %s615, 8
        %s617 = scalar_lea.vmem %s0, %s616
        %p618 = pneg %p70
        %p619 = pneg %p67
        %p620 = scmp.lt.s32.totalorder %s39, 1
        %s621 = scalar_select %p620, %s39, 1
        %s622 = smul.addr %s621, 8
        %s623 = scalar_lea.vmem %s1, %s622
        %p624 = pneg %p96
        %p625 = pneg %p93
        %p626 = scmp.lt.s32.totalorder %s39, 1
        %s627 = scalar_select %p626, %s39, 1
        %s628 = scalar_lea.vmem %s2, %s627
        %p629 = pneg %p122
        %p630 = pneg %p119
        %p631 = pneg %p143
        %p632 = pneg %p140
        %p633 = pneg %p164
        %p634 = pneg %p161
        %p635 = pneg %p185
        %p636 = pneg %p182
        %p637 = pneg %p206
        %p638 = pneg %p203
        %p639 = pneg %p227
        %p640 = pneg %p224
        %p641 = pneg %p248
        %p642 = pneg %p245
        %p643 = pneg %p269
        %p644 = pneg %p266
        %p645 = pneg %p290
        %p646 = pneg %p287
        %p647 = pneg %p311
        %p648 = pneg %p308
        %p649 = pneg %p332
        %p650 = pneg %p329
        %p651 = pneg %p353
        %p652 = pneg %p350
        %p653 = pneg %p374
        %p654 = pneg %p371
        %p655 = pneg %p395
        %p656 = pneg %p392
        %p657 = pneg %p416
        %p658 = pneg %p413
        %p659 = pneg %p444
        %p660 = pneg %p441
        %s661 = sand.u32 %s431, 1
        %s662 = scalar_lea.sflag [#allocation4], %s661
        %s663 = sand.u32 %s431, 1
        %s664 = smul.addr %s663, 4
        %s665 = scalar_lea.vmem [#allocation13], %s664
        %p666 = scmp.lt.s32.totalorder %s39, 1
        %s667 = scalar_select %p666, %s39, 1
        %p668 = scmp.lt.s32.totalorder %s40, 0
        %s669 = scalar_select %p668, %s40, 0
        %s670 = sadd.s32 %s669, %s667
        %s671 = smul.addr %s670, 8
        %s672 = scalar_lea.vmem %s0, %s671
        %p673 = scmp.lt.s32.totalorder %s39, 1
        %s674 = scalar_select %p673, %s39, 1
        %s675 = smul.addr %s674, 8
        %s676 = scalar_lea.vmem %s1, %s675
        %p677 = scmp.lt.s32.totalorder %s39, 1
        %s678 = scalar_select %p677, %s39, 1
        %s679 = scalar_lea.vmem %s2, %s678
        %v681 = vld [vmem:[%s672] sm:$0xff]
        %v682 = vld [vmem:[%s676] sm:$0xff]
        %v683 = vld [vmem:[%s679] sm:$0x1]
        %v684 = vpack.c.bf16 %v681, %v681
        %v685 = vpack.c.bf16 %v682, %v682
        %v686 = vld [vmem:[%s3] sm:$0xf]
        %v687 = vld [vmem:[%s3 + $0x4] sm:$0xf]
        %v688 = vld [vmem:[%s3 + $0x8] sm:$0xf]
        %v689 = vld [vmem:[%s3 + $0xc] sm:$0xf]
        %v690 = vld [vmem:[#allocation2] sm:$0x1]
        %v692 = vlaneseq
        %v693 = vshrl.u32 %v692, 7
        %v694 = vsub.s32 0, %v693
        %v695 = vrot.slane %v690, %v694
        %v701 = vunpack.c.l.b16 %v686
        %v702 = vunpack.c.l.b16 %v687
        %v703 = vunpack.c.l.b16 %v688
        %v704 = vunpack.c.l.b16 %v689
        %v705 = vpack.c.b16 %v702, %v701
        %v706 = vpack.c.b16 %v704, %v703
        %vm709 = vcmask 261120
        %v711 = vsel %vm709, %v684, 0
        %713 = vmatprep.subr.bf16.mxu0 0
        %714 = vmatpush1.bf16.msra.mxu0 %v705
        %715 = vmatprep.subr.bf16.mxu0 0
        %716 = vmatpush1.bf16.msra.mxu0 %v706
        %717 = vmatprep.subr.bf16.mxu0 0
        %718 = vmatpush1.bf16.msra.mxu0 0
        %719 = vmatprep.subr.bf16.mxu0 0
        %720 = vmatpush1.bf16.msra.mxu0 0
        %721 = vmatprep.subr.bf16.mxu0 0
        %722 = vmatpush1.bf16.msra.mxu0 0
        %723 = vmatprep.subr.bf16.mxu0 0
        %724 = vmatpush1.bf16.msra.mxu0 0
        %725 = vmatprep.subr.bf16.mxu0 0
        %726 = vmatpush1.bf16.msra.mxu0 0
        %727 = vmatprep.subr.bf16.mxu0 0
        %728 = vmatpush1.bf16.msra.mxu0 0
        %729 = vmatprep.subr.bf16.mxu0 0
        %730 = vmatpush1.bf16.msra.mxu0 0
        %731 = vmatprep.subr.bf16.mxu0 0
        %732 = vmatpush1.bf16.msra.mxu0 0
        %733 = vmatprep.subr.bf16.mxu0 0
        %734 = vmatpush1.bf16.msra.mxu0 0
        %735 = vmatprep.subr.bf16.mxu0 0
        %736 = vmatpush1.bf16.msra.mxu0 0
        %737 = vmatprep.subr.bf16.mxu0 0
        %738 = vmatpush1.bf16.msra.mxu0 0
        %739 = vmatprep.subr.bf16.mxu0 0
        %740 = vmatpush1.bf16.msra.mxu0 0
        %741 = vmatprep.subr.bf16.mxu0 0
        %742 = vmatpush1.bf16.msra.mxu0 0
        %743 = vmatprep.subr.bf16.mxu0 0
        %744 = vmatpush1.bf16.msra.mxu0 0
        %745 = vmatprep.mubr.bf16.mxu0 0
        %746 = vmatmul.mubr.bf16.gmra.mrb[0].mxu0 %v711
        %v747 = vpop.f32.mrb[0].mxu0
        %v748 = vadd.f32 %v695, %v747
        %v749 = vpop.f32.mrb[0].mxu0
        %v750 = vpop.f32.mrb[0].mxu0
        %v751 = vpop.f32.mrb[0].mxu0
        %752 = vdwg.mxu0
        %v753 = vld [vmem:[#allocation5] sm:$0xf]
        %v754 = vld [vmem:[#allocation5 + $0x4] sm:$0xf]
        %v755 = vld [vmem:[#allocation5 + $0x8] sm:$0xf]
        %v756 = vld [vmem:[#allocation5 + $0xc] sm:$0xf]
        %v757 = vld [vmem:[#allocation7] sm:$0x1]
        %v759 = vlaneseq
        %v760 = vshrl.u32 %v759, 7
        %v761 = vsub.s32 0, %v760
        %v762 = vrot.slane %v757, %v761
        %v768 = vunpack.c.l.b16 %v753
        %v769 = vunpack.c.l.b16 %v754
        %v770 = vunpack.c.l.b16 %v755
        %v771 = vunpack.c.l.b16 %v756
        %v772 = vpack.c.b16 %v769, %v768
        %v773 = vpack.c.b16 %v771, %v770
        %v777 = vsel %vm709, %v685, 0
        %779 = vmatprep.subr.bf16.mxu0 0
        %780 = vmatpush1.bf16.msra.mxu0 %v772
        %781 = vmatprep.subr.bf16.mxu0 0
        %782 = vmatpush1.bf16.msra.mxu0 %v773
        %783 = vmatprep.subr.bf16.mxu0 0
        %784 = vmatpush1.bf16.msra.mxu0 0
        %785 = vmatprep.subr.bf16.mxu0 0
        %786 = vmatpush1.bf16.msra.mxu0 0
        %787 = vmatprep.subr.bf16.mxu0 0
        %788 = vmatpush1.bf16.msra.mxu0 0
        %789 = vmatprep.subr.bf16.mxu0 0
        %790 = vmatpush1.bf16.msra.mxu0 0
        %791 = vmatprep.subr.bf16.mxu0 0
        %792 = vmatpush1.bf16.msra.mxu0 0
        %793 = vmatprep.subr.bf16.mxu0 0
        %794 = vmatpush1.bf16.msra.mxu0 0
        %795 = vmatprep.subr.bf16.mxu0 0
        %796 = vmatpush1.bf16.msra.mxu0 0
        %797 = vmatprep.subr.bf16.mxu0 0
        %798 = vmatpush1.bf16.msra.mxu0 0
        %799 = vmatprep.subr.bf16.mxu0 0
        %800 = vmatpush1.bf16.msra.mxu0 0
        %801 = vmatprep.subr.bf16.mxu0 0
        %802 = vmatpush1.bf16.msra.mxu0 0
        %803 = vmatprep.subr.bf16.mxu0 0
        %804 = vmatpush1.bf16.msra.mxu0 0
        %805 = vmatprep.subr.bf16.mxu0 0
        %806 = vmatpush1.bf16.msra.mxu0 0
        %807 = vmatprep.subr.bf16.mxu0 0
        %808 = vmatpush1.bf16.msra.mxu0 0
        %809 = vmatprep.subr.bf16.mxu0 0
        %810 = vmatpush1.bf16.msra.mxu0 0
        %811 = vmatprep.mubr.bf16.mxu0 0
        %812 = vmatmul.mubr.bf16.gmra.mrb[0].mxu0 %v777
        %v813 = vpop.f32.mrb[0].mxu0
        %v814 = vadd.f32 %v762, %v813
        %v815 = vpop.f32.mrb[0].mxu0
        %v816 = vpop.f32.mrb[0].mxu0
        %v817 = vpop.f32.mrb[0].mxu0
        %818 = vdwg.mxu0
        %v819 = vpack.c.bf16 %v748, %v748
        %821 = vrot.lane.b32.xlu0 %v819, 120
        %v822 = vpop.permute.xlu0 %821
        %823 = vrot.lane.b32.xlu0 %v819, 112
        %v824 = vpop.permute.xlu0 %823
        %825 = vrot.lane.b32.xlu0 %v819, 104
        %v826 = vpop.permute.xlu0 %825
        %v828 = vunpack.c.l.s4 1983009808
        %v829 = vunpack.c.0.s8 %v828
        %v830 = vlaneseq
        %v831 = vshrl.u32 %v830, 7
        %v832 = vsub.s32 %v829, %v831
        %v833 = vrot.slane %v819, %v832
        %v836 = vunpack.c.l.s4 1983009808
        %v837 = vunpack.c.0.s8 %v836
        %v838 = vlaneseq
        %v839 = vshrl.u32 %v838, 7
        %v840 = vsub.s32 %v837, %v839
        %v841 = vrot.slane %v824, %v840
        %v842 = vcombine.low %v833, %v841
        %v843 = vcombine.high %v833, %v841
        %v845 = vunpack.c.l.s4 1934713408
        %v846 = vunpack.c.0.s8 %v845
        %v847 = vlaneseq
        %v848 = vshrl.u32 %v847, 7
        %v849 = vsub.s32 %v846, %v848
        %v850 = vrot.slane %v842, %v849
        %v852 = vunpack.c.l.s4 1934713408
        %v853 = vunpack.c.0.s8 %v852
        %v854 = vlaneseq
        %v855 = vshrl.u32 %v854, 7
        %v856 = vsub.s32 %v853, %v855
        %v857 = vrot.slane %v843, %v856
        %v858 = vcombine.high %v850, 0
        %v859 = vcombine.high %v857, 0
        %v862 = vunpack.c.l.s4 1983009808
        %v863 = vunpack.c.0.s8 %v862
        %v864 = vlaneseq
        %v865 = vshrl.u32 %v864, 7
        %v866 = vsub.s32 %v863, %v865
        %v867 = vrot.slane %v822, %v866
        %v870 = vunpack.c.l.s4 1983009808
        %v871 = vunpack.c.0.s8 %v870
        %v872 = vlaneseq
        %v873 = vshrl.u32 %v872, 7
        %v874 = vsub.s32 %v871, %v873
        %v875 = vrot.slane %v826, %v874
        %v876 = vcombine.low %v867, %v875
        %v877 = vcombine.high %v867, %v875
        %v879 = vunpack.c.l.s4 1934713408
        %v880 = vunpack.c.0.s8 %v879
        %v881 = vlaneseq
        %v882 = vshrl.u32 %v881, 7
        %v883 = vsub.s32 %v880, %v882
        %v884 = vrot.slane %v876, %v883
        %v886 = vunpack.c.l.s4 1934713408
        %v887 = vunpack.c.0.s8 %v886
        %v888 = vlaneseq
        %v889 = vshrl.u32 %v888, 7
        %v890 = vsub.s32 %v887, %v889
        %v891 = vrot.slane %v877, %v890
        %v892 = vcombine.high %v884, 0
        %v893 = vcombine.high %v891, 0
        %v896 = vpack.i.b16 %v884, %v850
        %v898 = vshrl.u32 %v850, 16
        %v899 = vshrl.u32 %v884, 16
        %v900 = vpack.i.b16 %v899, %v898
        %v904 = vpack.i.b16 %v892, %v858
        %v906 = vshrl.u32 %v858, 16
        %v907 = vshrl.u32 %v892, 16
        %v908 = vpack.i.b16 %v907, %v906
        %v912 = vpack.i.b16 %v891, %v857
        %v914 = vshrl.u32 %v857, 16
        %v915 = vshrl.u32 %v891, 16
        %v916 = vpack.i.b16 %v915, %v914
        %v920 = vpack.i.b16 %v893, %v859
        %v922 = vshrl.u32 %v859, 16
        %v923 = vshrl.u32 %v893, 16
        %v924 = vpack.i.b16 %v923, %v922
        %v926 = vcombine.low %v896, %v912
        %v928 = vunpack.c.l.s4 1983009808
        %v929 = vunpack.c.0.s8 %v928
        %v930 = vlaneseq
        %v931 = vshrl.u32 %v930, 7
        %v932 = vsub.s32 %v929, %v931
        %v933 = vrot.slane %v926, %v932
        %v934 = vcombine.low %v904, %v920
        %v936 = vunpack.c.l.s4 1983009808
        %v937 = vunpack.c.0.s8 %v936
        %v938 = vlaneseq
        %v939 = vshrl.u32 %v938, 7
        %v940 = vsub.s32 %v937, %v939
        %v941 = vrot.slane %v934, %v940
        %v942 = vcombine.low %v933, %v941
        %v944 = vunpack.c.l.s4 1934713408
        %v945 = vunpack.c.0.s8 %v944
        %v946 = vlaneseq
        %v947 = vshrl.u32 %v946, 7
        %v948 = vsub.s32 %v945, %v947
        %v949 = vrot.slane %v942, %v948
        %v950 = vcombine.high %v949, 0
        %v951 = vcombine.low %v900, %v916
        %v953 = vunpack.c.l.s4 1983009808
        %v954 = vunpack.c.0.s8 %v953
        %v955 = vlaneseq
        %v956 = vshrl.u32 %v955, 7
        %v957 = vsub.s32 %v954, %v956
        %v958 = vrot.slane %v951, %v957
        %v959 = vcombine.low %v908, %v924
        %v961 = vunpack.c.l.s4 1983009808
        %v962 = vunpack.c.0.s8 %v961
        %v963 = vlaneseq
        %v964 = vshrl.u32 %v963, 7
        %v965 = vsub.s32 %v962, %v964
        %v966 = vrot.slane %v959, %v965
        %v967 = vcombine.low %v958, %v966
        %v969 = vunpack.c.l.s4 1934713408
        %v970 = vunpack.c.0.s8 %v969
        %v971 = vlaneseq
        %v972 = vshrl.u32 %v971, 7
        %v973 = vsub.s32 %v970, %v972
        %v974 = vrot.slane %v967, %v973
        %v975 = vcombine.high %v974, 0
        %v978 = vpack.i.b16 %v974, %v949
        %v979 = vshrl.u32 %v949, 16
        %v980 = vshrl.u32 %v974, 16
        %v981 = vpack.i.b16 %v980, %v979
        %v984 = vpack.i.b16 %v975, %v950
        %v985 = vshrl.u32 %v950, 16
        %v986 = vshrl.u32 %v975, 16
        %v987 = vpack.i.b16 %v986, %v985
        %v988 = vpack.c.bf16 %v814, %v814
        %990 = vrot.lane.b32.xlu0 %v988, 120
        %v991 = vpop.permute.xlu0 %990
        %992 = vrot.lane.b32.xlu0 %v988, 112
        %v993 = vpop.permute.xlu0 %992
        %994 = vrot.lane.b32.xlu0 %v988, 104
        %v995 = vpop.permute.xlu0 %994
        %v997 = vunpack.c.l.s4 1983009808
        %v998 = vunpack.c.0.s8 %v997
        %v999 = vlaneseq
        %v1000 = vshrl.u32 %v999, 7
        %v1001 = vsub.s32 %v998, %v1000
        %v1002 = vrot.slane %v988, %v1001
        %v1005 = vunpack.c.l.s4 1983009808
        %v1006 = vunpack.c.0.s8 %v1005
        %v1007 = vlaneseq
        %v1008 = vshrl.u32 %v1007, 7
        %v1009 = vsub.s32 %v1006, %v1008
        %v1010 = vrot.slane %v993, %v1009
        %v1011 = vcombine.low %v1002, %v1010
        %v1012 = vcombine.high %v1002, %v1010
        %v1014 = vunpack.c.l.s4 1934713408
        %v1015 = vunpack.c.0.s8 %v1014
        %v1016 = vlaneseq
        %v1017 = vshrl.u32 %v1016, 7
        %v1018 = vsub.s32 %v1015, %v1017
        %v1019 = vrot.slane %v1011, %v1018
        %v1021 = vunpack.c.l.s4 1934713408
        %v1022 = vunpack.c.0.s8 %v1021
        %v1023 = vlaneseq
        %v1024 = vshrl.u32 %v1023, 7
        %v1025 = vsub.s32 %v1022, %v1024
        %v1026 = vrot.slane %v1012, %v1025
        %v1027 = vcombine.high %v1019, 0
        %v1028 = vcombine.high %v1026, 0
        %v1031 = vunpack.c.l.s4 1983009808
        %v1032 = vunpack.c.0.s8 %v1031
        %v1033 = vlaneseq
        %v1034 = vshrl.u32 %v1033, 7
        %v1035 = vsub.s32 %v1032, %v1034
        %v1036 = vrot.slane %v991, %v1035
        %v1039 = vunpack.c.l.s4 1983009808
        %v1040 = vunpack.c.0.s8 %v1039
        %v1041 = vlaneseq
        %v1042 = vshrl.u32 %v1041, 7
        %v1043 = vsub.s32 %v1040, %v1042
        %v1044 = vrot.slane %v995, %v1043
        %v1045 = vcombine.low %v1036, %v1044
        %v1046 = vcombine.high %v1036, %v1044
        %v1048 = vunpack.c.l.s4 1934713408
        %v1049 = vunpack.c.0.s8 %v1048
        %v1050 = vlaneseq
        %v1051 = vshrl.u32 %v1050, 7
        %v1052 = vsub.s32 %v1049, %v1051
        %v1053 = vrot.slane %v1045, %v1052
        %v1055 = vunpack.c.l.s4 1934713408
        %v1056 = vunpack.c.0.s8 %v1055
        %v1057 = vlaneseq
        %v1058 = vshrl.u32 %v1057, 7
        %v1059 = vsub.s32 %v1056, %v1058
        %v1060 = vrot.slane %v1046, %v1059
        %v1061 = vcombine.high %v1053, 0
        %v1062 = vcombine.high %v1060, 0
        %v1065 = vpack.i.b16 %v1053, %v1019
        %v1067 = vshrl.u32 %v1019, 16
        %v1068 = vshrl.u32 %v1053, 16
        %v1069 = vpack.i.b16 %v1068, %v1067
        %v1073 = vpack.i.b16 %v1061, %v1027
        %v1075 = vshrl.u32 %v1027, 16
        %v1076 = vshrl.u32 %v1061, 16
        %v1077 = vpack.i.b16 %v1076, %v1075
        %v1081 = vpack.i.b16 %v1060, %v1026
        %v1083 = vshrl.u32 %v1026, 16
        %v1084 = vshrl.u32 %v1060, 16
        %v1085 = vpack.i.b16 %v1084, %v1083
        %v1089 = vpack.i.b16 %v1062, %v1028
        %v1091 = vshrl.u32 %v1028, 16
        %v1092 = vshrl.u32 %v1062, 16
        %v1093 = vpack.i.b16 %v1092, %v1091
        %v1095 = vcombine.low %v1065, %v1081
        %v1097 = vunpack.c.l.s4 1983009808
        %v1098 = vunpack.c.0.s8 %v1097
        %v1099 = vlaneseq
        %v1100 = vshrl.u32 %v1099, 7
        %v1101 = vsub.s32 %v1098, %v1100
        %v1102 = vrot.slane %v1095, %v1101
        %v1103 = vcombine.low %v1073, %v1089
        %v1105 = vunpack.c.l.s4 1983009808
        %v1106 = vunpack.c.0.s8 %v1105
        %v1107 = vlaneseq
        %v1108 = vshrl.u32 %v1107, 7
        %v1109 = vsub.s32 %v1106, %v1108
        %v1110 = vrot.slane %v1103, %v1109
        %v1111 = vcombine.low %v1102, %v1110
        %v1113 = vunpack.c.l.s4 1934713408
        %v1114 = vunpack.c.0.s8 %v1113
        %v1115 = vlaneseq
        %v1116 = vshrl.u32 %v1115, 7
        %v1117 = vsub.s32 %v1114, %v1116
        %v1118 = vrot.slane %v1111, %v1117
        %v1119 = vcombine.high %v1118, 0
        %v1120 = vcombine.low %v1069, %v1085
        %v1122 = vunpack.c.l.s4 1983009808
        %v1123 = vunpack.c.0.s8 %v1122
        %v1124 = vlaneseq
        %v1125 = vshrl.u32 %v1124, 7
        %v1126 = vsub.s32 %v1123, %v1125
        %v1127 = vrot.slane %v1120, %v1126
        %v1128 = vcombine.low %v1077, %v1093
        %v1130 = vunpack.c.l.s4 1983009808
        %v1131 = vunpack.c.0.s8 %v1130
        %v1132 = vlaneseq
        %v1133 = vshrl.u32 %v1132, 7
        %v1134 = vsub.s32 %v1131, %v1133
        %v1135 = vrot.slane %v1128, %v1134
        %v1136 = vcombine.low %v1127, %v1135
        %v1138 = vunpack.c.l.s4 1934713408
        %v1139 = vunpack.c.0.s8 %v1138
        %v1140 = vlaneseq
        %v1141 = vshrl.u32 %v1140, 7
        %v1142 = vsub.s32 %v1139, %v1141
        %v1143 = vrot.slane %v1136, %v1142
        %v1144 = vcombine.high %v1143, 0
        %v1147 = vpack.i.b16 %v1143, %v1118
        %v1148 = vshrl.u32 %v1118, 16
        %v1149 = vshrl.u32 %v1143, 16
        %v1150 = vpack.i.b16 %v1149, %v1148
        %v1153 = vpack.i.b16 %v1144, %v1119
        %v1154 = vshrl.u32 %v1119, 16
        %v1155 = vshrl.u32 %v1144, 16
        %v1156 = vpack.i.b16 %v1155, %v1154
        %1157 = vrot.lane.b32.xlu0 %v988, 96
        %v1158 = vpop.permute.xlu0 %1157
        %1159 = vrot.lane.b32.xlu0 %v991, 96
        %v1160 = vpop.permute.xlu0 %1159
        %1161 = vrot.lane.b32.xlu0 %v993, 96
        %v1162 = vpop.permute.xlu0 %1161
        %1163 = vrot.lane.b32.xlu0 %v995, 96
        %v1164 = vpop.permute.xlu0 %1163
        %v1167 = vunpack.c.l.s4 1983009808
        %v1168 = vunpack.c.0.s8 %v1167
        %v1169 = vlaneseq
        %v1170 = vshrl.u32 %v1169, 7
        %v1171 = vsub.s32 %v1168, %v1170
        %v1172 = vrot.slane %v1158, %v1171
        %v1175 = vunpack.c.l.s4 1983009808
        %v1176 = vunpack.c.0.s8 %v1175
        %v1177 = vlaneseq
        %v1178 = vshrl.u32 %v1177, 7
        %v1179 = vsub.s32 %v1176, %v1178
        %v1180 = vrot.slane %v1162, %v1179
        %v1181 = vcombine.low %v1172, %v1180
        %v1182 = vcombine.high %v1172, %v1180
        %v1184 = vunpack.c.l.s4 1934713408
        %v1185 = vunpack.c.0.s8 %v1184
        %v1186 = vlaneseq
        %v1187 = vshrl.u32 %v1186, 7
        %v1188 = vsub.s32 %v1185, %v1187
        %v1189 = vrot.slane %v1181, %v1188
        %v1191 = vunpack.c.l.s4 1934713408
        %v1192 = vunpack.c.0.s8 %v1191
        %v1193 = vlaneseq
        %v1194 = vshrl.u32 %v1193, 7
        %v1195 = vsub.s32 %v1192, %v1194
        %v1196 = vrot.slane %v1182, %v1195
        %v1197 = vcombine.high %v1189, 0
        %v1198 = vcombine.high %v1196, 0
        %v1201 = vunpack.c.l.s4 1983009808
        %v1202 = vunpack.c.0.s8 %v1201
        %v1203 = vlaneseq
        %v1204 = vshrl.u32 %v1203, 7
        %v1205 = vsub.s32 %v1202, %v1204
        %v1206 = vrot.slane %v1160, %v1205
        %v1209 = vunpack.c.l.s4 1983009808
        %v1210 = vunpack.c.0.s8 %v1209
        %v1211 = vlaneseq
        %v1212 = vshrl.u32 %v1211, 7
        %v1213 = vsub.s32 %v1210, %v1212
        %v1214 = vrot.slane %v1164, %v1213
        %v1215 = vcombine.low %v1206, %v1214
        %v1216 = vcombine.high %v1206, %v1214
        %v1218 = vunpack.c.l.s4 1934713408
        %v1219 = vunpack.c.0.s8 %v1218
        %v1220 = vlaneseq
        %v1221 = vshrl.u32 %v1220, 7
        %v1222 = vsub.s32 %v1219, %v1221
        %v1223 = vrot.slane %v1215, %v1222
        %v1225 = vunpack.c.l.s4 1934713408
        %v1226 = vunpack.c.0.s8 %v1225
        %v1227 = vlaneseq
        %v1228 = vshrl.u32 %v1227, 7
        %v1229 = vsub.s32 %v1226, %v1228
        %v1230 = vrot.slane %v1216, %v1229
        %v1231 = vcombine.high %v1223, 0
        %v1232 = vcombine.high %v1230, 0
        %v1235 = vpack.i.b16 %v1223, %v1189
        %v1237 = vshrl.u32 %v1189, 16
        %v1238 = vshrl.u32 %v1223, 16
        %v1239 = vpack.i.b16 %v1238, %v1237
        %v1243 = vpack.i.b16 %v1231, %v1197
        %v1245 = vshrl.u32 %v1197, 16
        %v1246 = vshrl.u32 %v1231, 16
        %v1247 = vpack.i.b16 %v1246, %v1245
        %v1251 = vpack.i.b16 %v1230, %v1196
        %v1253 = vshrl.u32 %v1196, 16
        %v1254 = vshrl.u32 %v1230, 16
        %v1255 = vpack.i.b16 %v1254, %v1253
        %v1259 = vpack.i.b16 %v1232, %v1198
        %v1261 = vshrl.u32 %v1198, 16
        %v1262 = vshrl.u32 %v1232, 16
        %v1263 = vpack.i.b16 %v1262, %v1261
        %v1265 = vcombine.low %v1235, %v1251
        %v1267 = vunpack.c.l.s4 1983009808
        %v1268 = vunpack.c.0.s8 %v1267
        %v1269 = vlaneseq
        %v1270 = vshrl.u32 %v1269, 7
        %v1271 = vsub.s32 %v1268, %v1270
        %v1272 = vrot.slane %v1265, %v1271
        %v1273 = vcombine.low %v1243, %v1259
        %v1275 = vunpack.c.l.s4 1983009808
        %v1276 = vunpack.c.0.s8 %v1275
        %v1277 = vlaneseq
        %v1278 = vshrl.u32 %v1277, 7
        %v1279 = vsub.s32 %v1276, %v1278
        %v1280 = vrot.slane %v1273, %v1279
        %v1281 = vcombine.low %v1272, %v1280
        %v1283 = vunpack.c.l.s4 1934713408
        %v1284 = vunpack.c.0.s8 %v1283
        %v1285 = vlaneseq
        %v1286 = vshrl.u32 %v1285, 7
        %v1287 = vsub.s32 %v1284, %v1286
        %v1288 = vrot.slane %v1281, %v1287
        %v1289 = vcombine.high %v1288, 0
        %v1290 = vcombine.low %v1239, %v1255
        %v1292 = vunpack.c.l.s4 1983009808
        %v1293 = vunpack.c.0.s8 %v1292
        %v1294 = vlaneseq
        %v1295 = vshrl.u32 %v1294, 7
        %v1296 = vsub.s32 %v1293, %v1295
        %v1297 = vrot.slane %v1290, %v1296
        %v1298 = vcombine.low %v1247, %v1263
        %v1300 = vunpack.c.l.s4 1983009808
        %v1301 = vunpack.c.0.s8 %v1300
        %v1302 = vlaneseq
        %v1303 = vshrl.u32 %v1302, 7
        %v1304 = vsub.s32 %v1301, %v1303
        %v1305 = vrot.slane %v1298, %v1304
        %v1306 = vcombine.low %v1297, %v1305
        %v1308 = vunpack.c.l.s4 1934713408
        %v1309 = vunpack.c.0.s8 %v1308
        %v1310 = vlaneseq
        %v1311 = vshrl.u32 %v1310, 7
        %v1312 = vsub.s32 %v1309, %v1311
        %v1313 = vrot.slane %v1306, %v1312
        %v1314 = vcombine.high %v1313, 0
        %v1317 = vpack.i.b16 %v1313, %v1288
        %v1318 = vshrl.u32 %v1288, 16
        %v1319 = vshrl.u32 %v1313, 16
        %v1320 = vpack.i.b16 %v1319, %v1318
        %v1323 = vpack.i.b16 %v1314, %v1289
        %v1324 = vshrl.u32 %v1289, 16
        %v1325 = vshrl.u32 %v1314, 16
        %v1326 = vpack.i.b16 %v1325, %v1324
        %v1328 = vlaneseq
        %v1329 = vshrl.u32 %v1328, 7
        %v1330 = vsub.s32 0, %v1329
        %v1331 = vrot.slane %v683, %v1330
        %vm1333 = vcmask 64512
        %v1335 = vsel %vm1333, %v978, 0
        %v1338 = vsel %vm1333, %v1147, 0
        %1340 = vmatprep.subr.bf16.mxu0 0
        %1341 = vmatpush1.bf16.xpose.msra.mxu0 %v1338
        %1342 = vmatprep.subr.bf16.mxu0 0
        %1343 = vmatpush1.bf16.xpose.msra.mxu0 0
        %1344 = vmatprep.subr.bf16.mxu0 0
        %1345 = vmatpush1.bf16.xpose.msra.mxu0 0
        %1346 = vmatprep.subr.bf16.mxu0 0
        %1347 = vmatpush1.bf16.xpose.msra.mxu0 0
        %1348 = vmatprep.subr.bf16.mxu0 0
        %1349 = vmatpush1.bf16.xpose.msra.mxu0 0
        %1350 = vmatprep.subr.bf16.mxu0 0
        %1351 = vmatpush1.bf16.xpose.msra.mxu0 0
        %1352 = vmatprep.subr.bf16.mxu0 0
        %1353 = vmatpush1.bf16.xpose.msra.mxu0 0
        %1354 = vmatprep.subr.bf16.mxu0 0
        %1355 = vmatpush1.bf16.xpose.msra.mxu0 0
        %1356 = vmatprep.subr.bf16.mxu0 0
        %1357 = vmatpush1.bf16.xpose.msra.mxu0 0
        %1358 = vmatprep.subr.bf16.mxu0 0
        %1359 = vmatpush1.bf16.xpose.msra.mxu0 0
        %1360 = vmatprep.subr.bf16.mxu0 0
        %1361 = vmatpush1.bf16.xpose.msra.mxu0 0
        %1362 = vmatprep.subr.bf16.mxu0 0
        %1363 = vmatpush1.bf16.xpose.msra.mxu0 0
        %1364 = vmatprep.subr.bf16.mxu0 0
        %1365 = vmatpush1.bf16.xpose.msra.mxu0 0
        %1366 = vmatprep.subr.bf16.mxu0 0
        %1367 = vmatpush1.bf16.xpose.msra.mxu0 0
        %1368 = vmatprep.subr.bf16.mxu0 0
        %1369 = vmatpush1.bf16.xpose.msra.mxu0 0
        %1370 = vmatprep.subr.bf16.mxu0 0
        %1371 = vmatpush1.bf16.xpose.msra.mxu0 0
        %1372 = vmatprep.mubr.bf16.mxu0 0
        %1373 = vmatmul.mubr.bf16.gmra.mrb[0].mxu0 %v1335
        %v1374 = vpop.f32.mrb[0].mxu0
        %v1375 = vadd.f32 %v1331, %v1374
        %v1376 = vpop.f32.mrb[0].mxu0
        %v1377 = vpop.f32.mrb[0].mxu0
        %v1378 = vpop.f32.mrb[0].mxu0
        %1379 = vdwg.mxu0
        %v1381 = vsel %vm1333, %v981, 0
        %v1384 = vsel %vm1333, %v1150, 0
        %1386 = vmatprep.subr.bf16.mxu0 0
        %1387 = vmatpush1.bf16.xpose.msra.mxu0 %v1384
        %1388 = vmatprep.subr.bf16.mxu0 0
        %1389 = vmatpush1.bf16.xpose.msra.mxu0 0
        %1390 = vmatprep.subr.bf16.mxu0 0
        %1391 = vmatpush1.bf16.xpose.msra.mxu0 0
        %1392 = vmatprep.subr.bf16.mxu0 0
        %1393 = vmatpush1.bf16.xpose.msra.mxu0 0
        %1394 = vmatprep.subr.bf16.mxu0 0
        %1395 = vmatpush1.bf16.xpose.msra.mxu0 0
        %1396 = vmatprep.subr.bf16.mxu0 0
        %1397 = vmatpush1.bf16.xpose.msra.mxu0 0
        %1398 = vmatprep.subr.bf16.mxu0 0
        %1399 = vmatpush1.bf16.xpose.msra.mxu0 0
        %1400 = vmatprep.subr.bf16.mxu0 0
        %1401 = vmatpush1.bf16.xpose.msra.mxu0 0
        %1402 = vmatprep.subr.bf16.mxu0 0
        %1403 = vmatpush1.bf16.xpose.msra.mxu0 0
        %1404 = vmatprep.subr.bf16.mxu0 0
        %1405 = vmatpush1.bf16.xpose.msra.mxu0 0
        %1406 = vmatprep.subr.bf16.mxu0 0
        %1407 = vmatpush1.bf16.xpose.msra.mxu0 0
        %1408 = vmatprep.subr.bf16.mxu0 0
        %1409 = vmatpush1.bf16.xpose.msra.mxu0 0
        %1410 = vmatprep.subr.bf16.mxu0 0
        %1411 = vmatpush1.bf16.xpose.msra.mxu0 0
        %1412 = vmatprep.subr.bf16.mxu0 0
        %1413 = vmatpush1.bf16.xpose.msra.mxu0 0
        %1414 = vmatprep.subr.bf16.mxu0 0
        %1415 = vmatpush1.bf16.xpose.msra.mxu0 0
        %1416 = vmatprep.subr.bf16.mxu0 0
        %1417 = vmatpush1.bf16.xpose.msra.mxu0 0
        %1418 = vmatprep.mubr.bf16.mxu0 0
        %1419 = vmatmul.mubr.bf16.gmra.mrb[0].mxu0 %v1381
        %v1420 = vpop.f32.mrb[0].mxu0
        %v1421 = vadd.f32 %v1331, %v1420
        %v1422 = vpop.f32.mrb[0].mxu0
        %v1423 = vpop.f32.mrb[0].mxu0
        %v1424 = vpop.f32.mrb[0].mxu0
        %1425 = vdwg.mxu0
        %v1427 = vsel %vm1333, %v984, 0
        %v1430 = vsel %vm1333, %v1153, 0
        %1432 = vmatprep.subr.bf16.mxu0 0
        %1433 = vmatpush1.bf16.xpose.msra.mxu0 %v1430
        %1434 = vmatprep.subr.bf16.mxu0 0
        %1435 = vmatpush1.bf16.xpose.msra.mxu0 0
        %1436 = vmatprep.subr.bf16.mxu0 0
        %1437 = vmatpush1.bf16.xpose.msra.mxu0 0
        %1438 = vmatprep.subr.bf16.mxu0 0
        %1439 = vmatpush1.bf16.xpose.msra.mxu0 0
        %1440 = vmatprep.subr.bf16.mxu0 0
        %1441 = vmatpush1.bf16.xpose.msra.mxu0 0
        %1442 = vmatprep.subr.bf16.mxu0 0
        %1443 = vmatpush1.bf16.xpose.msra.mxu0 0
        %1444 = vmatprep.subr.bf16.mxu0 0
        %1445 = vmatpush1.bf16.xpose.msra.mxu0 0
        %1446 = vmatprep.subr.bf16.mxu0 0
        %1447 = vmatpush1.bf16.xpose.msra.mxu0 0
        %1448 = vmatprep.subr.bf16.mxu0 0
        %1449 = vmatpush1.bf16.xpose.msra.mxu0 0
        %1450 = vmatprep.subr.bf16.mxu0 0
        %1451 = vmatpush1.bf16.xpose.msra.mxu0 0
        %1452 = vmatprep.subr.bf16.mxu0 0
        %1453 = vmatpush1.bf16.xpose.msra.mxu0 0
        %1454 = vmatprep.subr.bf16.mxu0 0
        %1455 = vmatpush1.bf16.xpose.msra.mxu0 0
        %1456 = vmatprep.subr.bf16.mxu0 0
        %1457 = vmatpush1.bf16.xpose.msra.mxu0 0
        %1458 = vmatprep.subr.bf16.mxu0 0
        %1459 = vmatpush1.bf16.xpose.msra.mxu0 0
        %1460 = vmatprep.subr.bf16.mxu0 0
        %1461 = vmatpush1.bf16.xpose.msra.mxu0 0
        %1462 = vmatprep.subr.bf16.mxu0 0
        %1463 = vmatpush1.bf16.xpose.msra.mxu0 0
        %1464 = vmatprep.mubr.bf16.mxu0 0
        %1465 = vmatmul.mubr.bf16.gmra.mrb[0].mxu0 %v1427
        %v1466 = vpop.f32.mrb[0].mxu0
        %v1467 = vadd.f32 %v1331, %v1466
        %v1468 = vpop.f32.mrb[0].mxu0
        %v1469 = vpop.f32.mrb[0].mxu0
        %v1470 = vpop.f32.mrb[0].mxu0
        %1471 = vdwg.mxu0
        %v1473 = vsel %vm1333, %v987, 0
        %v1476 = vsel %vm1333, %v1156, 0
        %1478 = vmatprep.subr.bf16.mxu0 0
        %1479 = vmatpush1.bf16.xpose.msra.mxu0 %v1476
        %1480 = vmatprep.subr.bf16.mxu0 0
        %1481 = vmatpush1.bf16.xpose.msra.mxu0 0
        %1482 = vmatprep.subr.bf16.mxu0 0
        %1483 = vmatpush1.bf16.xpose.msra.mxu0 0
        %1484 = vmatprep.subr.bf16.mxu0 0
        %1485 = vmatpush1.bf16.xpose.msra.mxu0 0
        %1486 = vmatprep.subr.bf16.mxu0 0
        %1487 = vmatpush1.bf16.xpose.msra.mxu0 0
        %1488 = vmatprep.subr.bf16.mxu0 0
        %1489 = vmatpush1.bf16.xpose.msra.mxu0 0
        %1490 = vmatprep.subr.bf16.mxu0 0
        %1491 = vmatpush1.bf16.xpose.msra.mxu0 0
        %1492 = vmatprep.subr.bf16.mxu0 0
        %1493 = vmatpush1.bf16.xpose.msra.mxu0 0
        %1494 = vmatprep.subr.bf16.mxu0 0
        %1495 = vmatpush1.bf16.xpose.msra.mxu0 0
        %1496 = vmatprep.subr.bf16.mxu0 0
        %1497 = vmatpush1.bf16.xpose.msra.mxu0 0
        %1498 = vmatprep.subr.bf16.mxu0 0
        %1499 = vmatpush1.bf16.xpose.msra.mxu0 0
        %1500 = vmatprep.subr.bf16.mxu0 0
        %1501 = vmatpush1.bf16.xpose.msra.mxu0 0
        %1502 = vmatprep.subr.bf16.mxu0 0
        %1503 = vmatpush1.bf16.xpose.msra.mxu0 0
        %1504 = vmatprep.subr.bf16.mxu0 0
        %1505 = vmatpush1.bf16.xpose.msra.mxu0 0
        %1506 = vmatprep.subr.bf16.mxu0 0
        %1507 = vmatpush1.bf16.xpose.msra.mxu0 0
        %1508 = vmatprep.subr.bf16.mxu0 0
        %1509 = vmatpush1.bf16.xpose.msra.mxu0 0
        %1510 = vmatprep.mubr.bf16.mxu0 0
        %1511 = vmatmul.mubr.bf16.gmra.mrb[0].mxu0 %v1473
        %v1512 = vpop.f32.mrb[0].mxu0
        %v1513 = vadd.f32 %v1331, %v1512
        %v1514 = vpop.f32.mrb[0].mxu0
        %v1515 = vpop.f32.mrb[0].mxu0
        %v1516 = vpop.f32.mrb[0].mxu0
        %1517 = vdwg.mxu0
        %v1518 = vsel %vm1333, %v1375, -inf
        %1519 = vmax.xlane.f32.xlu0 %v1518
        %v1520 = vpop.xlane.xlu0 %1519
        %v1521 = vsel %vm1333, %v1421, -inf
        %1522 = vmax.xlane.f32.xlu0 %v1521
        %v1523 = vpop.xlane.xlu0 %1522
        %v1524 = vsel %vm1333, %v1467, -inf
        %1525 = vmax.xlane.f32.xlu0 %v1524
        %v1526 = vpop.xlane.xlu0 %1525
        %v1527 = vsel %vm1333, %v1513, -inf
        %1528 = vmax.xlane.f32.xlu0 %v1527
        %v1529 = vpop.xlane.xlu0 %1528
        %v1530 = vsub.f32 %v1375, %v1520
        %v1531 = vsub.f32 %v1421, %v1523
        %v1532 = vsub.f32 %v1467, %v1526
        %v1533 = vsub.f32 %v1513, %v1529
        %v1534 = vmul.f32 %v1530, 1.442695
        %v1535 = vpow.pop %v1534
        %v1536 = vmul.f32 %v1531, 1.442695
        %v1537 = vpow.pop %v1536
        %v1538 = vmul.f32 %v1532, 1.442695
        %v1539 = vpow.pop %v1538
        %v1540 = vmul.f32 %v1533, 1.442695
        %v1541 = vpow.pop %v1540
        %v1542 = vsel %vm1333, %v1535, 0.0
        %1543 = vadd.xlane.f32.xlu0 %v1542
        %v1544 = vpop.xlane.xlu0 %1543
        %v1545 = vsel %vm1333, %v1537, 0.0
        %1546 = vadd.xlane.f32.xlu0 %v1545
        %v1547 = vpop.xlane.xlu0 %1546
        %v1548 = vsel %vm1333, %v1539, 0.0
        %1549 = vadd.xlane.f32.xlu0 %v1548
        %v1550 = vpop.xlane.xlu0 %1549
        %v1551 = vsel %vm1333, %v1541, 0.0
        %1552 = vadd.xlane.f32.xlu0 %v1551
        %v1553 = vpop.xlane.xlu0 %1552
        %v1554 = vrcp.pop %v1544
        %v1555 = vrcp.pop %v1547
        %v1556 = vrcp.pop %v1550
        %v1557 = vrcp.pop %v1553
        %v1558 = vmul.f32 %v1535, %v1554
        %v1559 = vmul.f32 %v1537, %v1555
        %v1560 = vmul.f32 %v1539, %v1556
        %v1561 = vmul.f32 %v1541, %v1557
        %v1562 = vpack.c.bf16 %v1558, %v1558
        %v1563 = vpack.c.bf16 %v1559, %v1559
        %v1564 = vpack.c.bf16 %v1560, %v1560
        %v1565 = vpack.c.bf16 %v1561, %v1561
        %v1567 = vsel %vm1333, %v1562, 0
        %vm1569 = vcmask 1043456
        %v1571 = vsel %vm1569, %v1317, 0
        %1573 = vmatprep.subr.bf16.mxu0 0
        %1574 = vmatpush1.bf16.msra.mxu0 %v1571
        %1575 = vmatprep.subr.bf16.mxu0 0
        %1576 = vmatpush1.bf16.msra.mxu0 0
        %1577 = vmatprep.subr.bf16.mxu0 0
        %1578 = vmatpush1.bf16.msra.mxu0 0
        %1579 = vmatprep.subr.bf16.mxu0 0
        %1580 = vmatpush1.bf16.msra.mxu0 0
        %1581 = vmatprep.subr.bf16.mxu0 0
        %1582 = vmatpush1.bf16.msra.mxu0 0
        %1583 = vmatprep.subr.bf16.mxu0 0
        %1584 = vmatpush1.bf16.msra.mxu0 0
        %1585 = vmatprep.subr.bf16.mxu0 0
        %1586 = vmatpush1.bf16.msra.mxu0 0
        %1587 = vmatprep.subr.bf16.mxu0 0
        %1588 = vmatpush1.bf16.msra.mxu0 0
        %1589 = vmatprep.subr.bf16.mxu0 0
        %1590 = vmatpush1.bf16.msra.mxu0 0
        %1591 = vmatprep.subr.bf16.mxu0 0
        %1592 = vmatpush1.bf16.msra.mxu0 0
        %1593 = vmatprep.subr.bf16.mxu0 0
        %1594 = vmatpush1.bf16.msra.mxu0 0
        %1595 = vmatprep.subr.bf16.mxu0 0
        %1596 = vmatpush1.bf16.msra.mxu0 0
        %1597 = vmatprep.subr.bf16.mxu0 0
        %1598 = vmatpush1.bf16.msra.mxu0 0
        %1599 = vmatprep.subr.bf16.mxu0 0
        %1600 = vmatpush1.bf16.msra.mxu0 0
        %1601 = vmatprep.subr.bf16.mxu0 0
        %1602 = vmatpush1.bf16.msra.mxu0 0
        %1603 = vmatprep.subr.bf16.mxu0 0
        %1604 = vmatpush1.bf16.msra.mxu0 0
        %1605 = vmatprep.mubr.bf16.mxu0 0
        %1606 = vmatmul.mubr.bf16.gmra.mrb[0].mxu0 %v1567
        %v1607 = vpop.f32.mrb[0].mxu0
        %v1608 = vadd.f32 0.0, %v1607
        %v1609 = vpop.f32.mrb[0].mxu0
        %v1610 = vpop.f32.mrb[0].mxu0
        %v1611 = vpop.f32.mrb[0].mxu0
        %1612 = vdwg.mxu0
        %v1614 = vsel %vm1333, %v1563, 0
        %v1617 = vsel %vm1569, %v1320, 0
        %1619 = vmatprep.subr.bf16.mxu0 0
        %1620 = vmatpush1.bf16.msra.mxu0 %v1617
        %1621 = vmatprep.subr.bf16.mxu0 0
        %1622 = vmatpush1.bf16.msra.mxu0 0
        %1623 = vmatprep.subr.bf16.mxu0 0
        %1624 = vmatpush1.bf16.msra.mxu0 0
        %1625 = vmatprep.subr.bf16.mxu0 0
        %1626 = vmatpush1.bf16.msra.mxu0 0
        %1627 = vmatprep.subr.bf16.mxu0 0
        %1628 = vmatpush1.bf16.msra.mxu0 0
        %1629 = vmatprep.subr.bf16.mxu0 0
        %1630 = vmatpush1.bf16.msra.mxu0 0
        %1631 = vmatprep.subr.bf16.mxu0 0
        %1632 = vmatpush1.bf16.msra.mxu0 0
        %1633 = vmatprep.subr.bf16.mxu0 0
        %1634 = vmatpush1.bf16.msra.mxu0 0
        %1635 = vmatprep.subr.bf16.mxu0 0
        %1636 = vmatpush1.bf16.msra.mxu0 0
        %1637 = vmatprep.subr.bf16.mxu0 0
        %1638 = vmatpush1.bf16.msra.mxu0 0
        %1639 = vmatprep.subr.bf16.mxu0 0
        %1640 = vmatpush1.bf16.msra.mxu0 0
        %1641 = vmatprep.subr.bf16.mxu0 0
        %1642 = vmatpush1.bf16.msra.mxu0 0
        %1643 = vmatprep.subr.bf16.mxu0 0
        %1644 = vmatpush1.bf16.msra.mxu0 0
        %1645 = vmatprep.subr.bf16.mxu0 0
        %1646 = vmatpush1.bf16.msra.mxu0 0
        %1647 = vmatprep.subr.bf16.mxu0 0
        %1648 = vmatpush1.bf16.msra.mxu0 0
        %1649 = vmatprep.subr.bf16.mxu0 0
        %1650 = vmatpush1.bf16.msra.mxu0 0
        %1651 = vmatprep.mubr.bf16.mxu0 0
        %1652 = vmatmul.mubr.bf16.gmra.mrb[0].mxu0 %v1614
        %v1653 = vpop.f32.mrb[0].mxu0
        %v1654 = vadd.f32 0.0, %v1653
        %v1655 = vpop.f32.mrb[0].mxu0
        %v1656 = vpop.f32.mrb[0].mxu0
        %v1657 = vpop.f32.mrb[0].mxu0
        %1658 = vdwg.mxu0
        %v1660 = vsel %vm1333, %v1564, 0
        %v1663 = vsel %vm1569, %v1323, 0
        %1665 = vmatprep.subr.bf16.mxu0 0
        %1666 = vmatpush1.bf16.msra.mxu0 %v1663
        %1667 = vmatprep.subr.bf16.mxu0 0
        %1668 = vmatpush1.bf16.msra.mxu0 0
        %1669 = vmatprep.subr.bf16.mxu0 0
        %1670 = vmatpush1.bf16.msra.mxu0 0
        %1671 = vmatprep.subr.bf16.mxu0 0
        %1672 = vmatpush1.bf16.msra.mxu0 0
        %1673 = vmatprep.subr.bf16.mxu0 0
        %1674 = vmatpush1.bf16.msra.mxu0 0
        %1675 = vmatprep.subr.bf16.mxu0 0
        %1676 = vmatpush1.bf16.msra.mxu0 0
        %1677 = vmatprep.subr.bf16.mxu0 0
        %1678 = vmatpush1.bf16.msra.mxu0 0
        %1679 = vmatprep.subr.bf16.mxu0 0
        %1680 = vmatpush1.bf16.msra.mxu0 0
        %1681 = vmatprep.subr.bf16.mxu0 0
        %1682 = vmatpush1.bf16.msra.mxu0 0
        %1683 = vmatprep.subr.bf16.mxu0 0
        %1684 = vmatpush1.bf16.msra.mxu0 0
        %1685 = vmatprep.subr.bf16.mxu0 0
        %1686 = vmatpush1.bf16.msra.mxu0 0
        %1687 = vmatprep.subr.bf16.mxu0 0
        %1688 = vmatpush1.bf16.msra.mxu0 0
        %1689 = vmatprep.subr.bf16.mxu0 0
        %1690 = vmatpush1.bf16.msra.mxu0 0
        %1691 = vmatprep.subr.bf16.mxu0 0
        %1692 = vmatpush1.bf16.msra.mxu0 0
        %1693 = vmatprep.subr.bf16.mxu0 0
        %1694 = vmatpush1.bf16.msra.mxu0 0
        %1695 = vmatprep.subr.bf16.mxu0 0
        %1696 = vmatpush1.bf16.msra.mxu0 0
        %1697 = vmatprep.mubr.bf16.mxu0 0
        %1698 = vmatmul.mubr.bf16.gmra.mrb[0].mxu0 %v1660
        %v1699 = vpop.f32.mrb[0].mxu0
        %v1700 = vadd.f32 0.0, %v1699
        %v1701 = vpop.f32.mrb[0].mxu0
        %v1702 = vpop.f32.mrb[0].mxu0
        %v1703 = vpop.f32.mrb[0].mxu0
        %1704 = vdwg.mxu0
        %v1706 = vsel %vm1333, %v1565, 0
        %v1709 = vsel %vm1569, %v1326, 0
        %1711 = vmatprep.subr.bf16.mxu0 0
        %1712 = vmatpush1.bf16.msra.mxu0 %v1709
        %1713 = vmatprep.subr.bf16.mxu0 0
        %1714 = vmatpush1.bf16.msra.mxu0 0
        %1715 = vmatprep.subr.bf16.mxu0 0
        %1716 = vmatpush1.bf16.msra.mxu0 0
        %1717 = vmatprep.subr.bf16.mxu0 0
        %1718 = vmatpush1.bf16.msra.mxu0 0
        %1719 = vmatprep.subr.bf16.mxu0 0
        %1720 = vmatpush1.bf16.msra.mxu0 0
        %1721 = vmatprep.subr.bf16.mxu0 0
        %1722 = vmatpush1.bf16.msra.mxu0 0
        %1723 = vmatprep.subr.bf16.mxu0 0
        %1724 = vmatpush1.bf16.msra.mxu0 0
        %1725 = vmatprep.subr.bf16.mxu0 0
        %1726 = vmatpush1.bf16.msra.mxu0 0
        %1727 = vmatprep.subr.bf16.mxu0 0
        %1728 = vmatpush1.bf16.msra.mxu0 0
        %1729 = vmatprep.subr.bf16.mxu0 0
        %1730 = vmatpush1.bf16.msra.mxu0 0
        %1731 = vmatprep.subr.bf16.mxu0 0
        %1732 = vmatpush1.bf16.msra.mxu0 0
        %1733 = vmatprep.subr.bf16.mxu0 0
        %1734 = vmatpush1.bf16.msra.mxu0 0
        %1735 = vmatprep.subr.bf16.mxu0 0
        %1736 = vmatpush1.bf16.msra.mxu0 0
        %1737 = vmatprep.subr.bf16.mxu0 0
        %1738 = vmatpush1.bf16.msra.mxu0 0
        %1739 = vmatprep.subr.bf16.mxu0 0
        %1740 = vmatpush1.bf16.msra.mxu0 0
        %1741 = vmatprep.subr.bf16.mxu0 0
        %1742 = vmatpush1.bf16.msra.mxu0 0
        %1743 = vmatprep.mubr.bf16.mxu0 0
        %1744 = vmatmul.mubr.bf16.gmra.mrb[0].mxu0 %v1706
        %v1745 = vpop.f32.mrb[0].mxu0
        %v1746 = vadd.f32 0.0, %v1745
        %v1747 = vpop.f32.mrb[0].mxu0
        %v1748 = vpop.f32.mrb[0].mxu0
        %v1749 = vpop.f32.mrb[0].mxu0
        %1750 = vdwg.mxu0
        %v1751 = vcombine.low %v1608, %v1700
        %v1752 = vcombine.high %v1608, %v1700
        %v1754 = vunpack.c.l.s4 1983009808
        %v1755 = vunpack.c.0.s8 %v1754
        %v1756 = vlaneseq
        %v1757 = vshrl.u32 %v1756, 7
        %v1758 = vsub.s32 %v1755, %v1757
        %v1759 = vrot.slane %v1751, %v1758
        %v1761 = vunpack.c.l.s4 1983009808
        %v1762 = vunpack.c.0.s8 %v1761
        %v1763 = vlaneseq
        %v1764 = vshrl.u32 %v1763, 7
        %v1765 = vsub.s32 %v1762, %v1764
        %v1766 = vrot.slane %v1752, %v1765
        %v1767 = vcombine.low %v1654, %v1746
        %v1768 = vcombine.high %v1654, %v1746
        %v1770 = vunpack.c.l.s4 1983009808
        %v1771 = vunpack.c.0.s8 %v1770
        %v1772 = vlaneseq
        %v1773 = vshrl.u32 %v1772, 7
        %v1774 = vsub.s32 %v1771, %v1773
        %v1775 = vrot.slane %v1767, %v1774
        %v1777 = vunpack.c.l.s4 1983009808
        %v1778 = vunpack.c.0.s8 %v1777
        %v1779 = vlaneseq
        %v1780 = vshrl.u32 %v1779, 7
        %v1781 = vsub.s32 %v1778, %v1780
        %v1782 = vrot.slane %v1768, %v1781
        %v1783 = vcombine.low %v1759, %v1775
        %v1784 = vcombine.high %v1759, %v1775
        %v1786 = vunpack.c.l.s4 1934713408
        %v1787 = vunpack.c.0.s8 %v1786
        %v1788 = vlaneseq
        %v1789 = vshrl.u32 %v1788, 7
        %v1790 = vsub.s32 %v1787, %v1789
        %v1791 = vrot.slane %v1783, %v1790
        %v1793 = vunpack.c.l.s4 1934713408
        %v1794 = vunpack.c.0.s8 %v1793
        %v1795 = vlaneseq
        %v1796 = vshrl.u32 %v1795, 7
        %v1797 = vsub.s32 %v1794, %v1796
        %v1798 = vrot.slane %v1784, %v1797
        %v1799 = vcombine.low %v1766, %v1782
        %v1800 = vcombine.high %v1766, %v1782
        %v1802 = vunpack.c.l.s4 1934713408
        %v1803 = vunpack.c.0.s8 %v1802
        %v1804 = vlaneseq
        %v1805 = vshrl.u32 %v1804, 7
        %v1806 = vsub.s32 %v1803, %v1805
        %v1807 = vrot.slane %v1799, %v1806
        %v1809 = vunpack.c.l.s4 1934713408
        %v1810 = vunpack.c.0.s8 %v1809
        %v1811 = vlaneseq
        %v1812 = vshrl.u32 %v1811, 7
        %v1813 = vsub.s32 %v1810, %v1812
        %v1814 = vrot.slane %v1800, %v1813
        %v1815 = vcombine.high %v1791, 0.0
        %v1816 = vcombine.high %v1798, 0.0
        %v1817 = vcombine.high %v1807, 0.0
        %v1818 = vcombine.high %v1814, 0.0
        %v1819 = vcombine.low %v1791, %v1798
        %v1821 = vunpack.c.l.s4 1983009808
        %v1822 = vunpack.c.0.s8 %v1821
        %v1823 = vlaneseq
        %v1824 = vshrl.u32 %v1823, 7
        %v1825 = vsub.s32 %v1822, %v1824
        %v1826 = vrot.slane %v1819, %v1825
        %v1827 = vcombine.low %v1815, %v1816
        %v1829 = vunpack.c.l.s4 1983009808
        %v1830 = vunpack.c.0.s8 %v1829
        %v1831 = vlaneseq
        %v1832 = vshrl.u32 %v1831, 7
        %v1833 = vsub.s32 %v1830, %v1832
        %v1834 = vrot.slane %v1827, %v1833
        %v1835 = vcombine.low %v1807, %v1814
        %v1837 = vunpack.c.l.s4 1983009808
        %v1838 = vunpack.c.0.s8 %v1837
        %v1839 = vlaneseq
        %v1840 = vshrl.u32 %v1839, 7
        %v1841 = vsub.s32 %v1838, %v1840
        %v1842 = vrot.slane %v1835, %v1841
        %v1843 = vcombine.low %v1817, %v1818
        %v1845 = vunpack.c.l.s4 1983009808
        %v1846 = vunpack.c.0.s8 %v1845
        %v1847 = vlaneseq
        %v1848 = vshrl.u32 %v1847, 7
        %v1849 = vsub.s32 %v1846, %v1848
        %v1850 = vrot.slane %v1843, %v1849
        %v1851 = vcombine.low %v1826, %v1834
        %v1852 = vcombine.high %v1826, %v1834
        %v1854 = vunpack.c.l.s4 1934713408
        %v1855 = vunpack.c.0.s8 %v1854
        %v1856 = vlaneseq
        %v1857 = vshrl.u32 %v1856, 7
        %v1858 = vsub.s32 %v1855, %v1857
        %v1859 = vrot.slane %v1851, %v1858
        %v1861 = vunpack.c.l.s4 1934713408
        %v1862 = vunpack.c.0.s8 %v1861
        %v1863 = vlaneseq
        %v1864 = vshrl.u32 %v1863, 7
        %v1865 = vsub.s32 %v1862, %v1864
        %v1866 = vrot.slane %v1852, %v1865
        %v1867 = vcombine.low %v1842, %v1850
        %v1868 = vcombine.high %v1842, %v1850
        %v1870 = vunpack.c.l.s4 1934713408
        %v1871 = vunpack.c.0.s8 %v1870
        %v1872 = vlaneseq
        %v1873 = vshrl.u32 %v1872, 7
        %v1874 = vsub.s32 %v1871, %v1873
        %v1875 = vrot.slane %v1867, %v1874
        %v1877 = vunpack.c.l.s4 1934713408
        %v1878 = vunpack.c.0.s8 %v1877
        %v1879 = vlaneseq
        %v1880 = vshrl.u32 %v1879, 7
        %v1881 = vsub.s32 %v1878, %v1880
        %v1882 = vrot.slane %v1868, %v1881
        %v1883 = vcombine.low %v1859, %v1875
        %v1884 = vcombine.high %v1859, %v1875
        %v1885 = vcombine.low %v1866, %v1882
        %v1886 = vcombine.high %v1866, %v1882
        %1888 = vrot.lane.b32.xlu0 %v1884, 8
        %v1889 = vpop.permute.xlu0 %1888
        %1892 = vrot.lane.b32.xlu0 %v1885, 16
        %v1893 = vpop.permute.xlu0 %1892
        %1896 = vrot.lane.b32.xlu0 %v1886, 24
        %v1897 = vpop.permute.xlu0 %1896
        %v1899 = vsel %vm1333, %v1883, %v1889
        %vm1900 = vcmask 130048
        %v1901 = vsel %vm1900, %v1899, %v1893
        %vm1902 = vcmask 195584
        %v1903 = vsel %vm1902, %v1901, %v1897
        %v1904 = vpack.c.bf16 %v1903, %v1903
        %v1905 = vld [vmem:[#allocation8] sm:$0xf]
        %v1906 = vld [vmem:[#allocation8 + $0x4] sm:$0xf]
        %v1907 = vld [vmem:[#allocation8 + $0x8] sm:$0xf]
        %v1908 = vld [vmem:[#allocation8 + $0xc] sm:$0xf]
        %v1909 = vld [vmem:[#allocation10] sm:$0x1]
        %v1911 = vlaneseq
        %v1912 = vshrl.u32 %v1911, 7
        %v1913 = vsub.s32 0, %v1912
        %v1914 = vrot.slane %v1909, %v1913
        %v1920 = vunpack.c.l.b16 %v1905
        %v1921 = vunpack.c.l.b16 %v1906
        %v1922 = vunpack.c.l.b16 %v1907
        %v1923 = vunpack.c.l.b16 %v1908
        %v1924 = vpack.c.b16 %v1921, %v1920
        %v1925 = vpack.c.b16 %v1923, %v1922
        %v1929 = vsel %vm709, %v1904, 0
        %1931 = vmatprep.subr.bf16.mxu0 0
        %1932 = vmatpush1.bf16.msra.mxu0 %v1924
        %1933 = vmatprep.subr.bf16.mxu0 0
        %1934 = vmatpush1.bf16.msra.mxu0 %v1925
        %1935 = vmatprep.subr.bf16.mxu0 0
        %1936 = vmatpush1.bf16.msra.mxu0 0
        %1937 = vmatprep.subr.bf16.mxu0 0
        %1938 = vmatpush1.bf16.msra.mxu0 0
        %1939 = vmatprep.subr.bf16.mxu0 0
        %1940 = vmatpush1.bf16.msra.mxu0 0
        %1941 = vmatprep.subr.bf16.mxu0 0
        %1942 = vmatpush1.bf16.msra.mxu0 0
        %1943 = vmatprep.subr.bf16.mxu0 0
        %1944 = vmatpush1.bf16.msra.mxu0 0
        %1945 = vmatprep.subr.bf16.mxu0 0
        %1946 = vmatpush1.bf16.msra.mxu0 0
        %1947 = vmatprep.subr.bf16.mxu0 0
        %1948 = vmatpush1.bf16.msra.mxu0 0
        %1949 = vmatprep.subr.bf16.mxu0 0
        %1950 = vmatpush1.bf16.msra.mxu0 0
        %1951 = vmatprep.subr.bf16.mxu0 0
        %1952 = vmatpush1.bf16.msra.mxu0 0
        %1953 = vmatprep.subr.bf16.mxu0 0
        %1954 = vmatpush1.bf16.msra.mxu0 0
        %1955 = vmatprep.subr.bf16.mxu0 0
        %1956 = vmatpush1.bf16.msra.mxu0 0
        %1957 = vmatprep.subr.bf16.mxu0 0
        %1958 = vmatpush1.bf16.msra.mxu0 0
        %1959 = vmatprep.subr.bf16.mxu0 0
        %1960 = vmatpush1.bf16.msra.mxu0 0
        %1961 = vmatprep.subr.bf16.mxu0 0
        %1962 = vmatpush1.bf16.msra.mxu0 0
        %1963 = vmatprep.mubr.bf16.mxu0 0
        %1964 = vmatmul.mubr.bf16.gmra.mrb[0].mxu0 %v1929
        %v1965 = vpop.f32.mrb[0].mxu0
        %v1966 = vadd.f32 %v1914, %v1965
        %v1967 = vpop.f32.mrb[0].mxu0
        %v1968 = vpop.f32.mrb[0].mxu0
        %v1969 = vpop.f32.mrb[0].mxu0
        %1970 = vdwg.mxu0
        %v1971 = vadd.f32 %v1966, %v681
        %v1972 = vld [vmem:[#allocation11] sm:$0x1]
        %v1973 = vld [vmem:[%s10] sm:$0x1]
        %v1974 = vsel %vm709, %v1971, 0.0
        %1975 = vadd.xlane.f32.xlu0 %v1974
        %v1976 = vpop.xlane.xlu0 %1975
        %v1977 = vrcp.pop 32.0
        %v1978 = vmul.f32 %v1976, %v1977
        %v1979 = vsub.f32 %v1971, %v1978
        %v1980 = vmul.f32 %v1979, %v1979
        %v1981 = vsel %vm709, %v1980, 0.0
        %1982 = vadd.xlane.f32.xlu0 %v1981
        %v1983 = vpop.xlane.xlu0 %1982
        %v1984 = vmul.f32 %v1983, %v1977
        %v1985 = vadd.f32 %v1984, 1e-12
        %v1986 = vrsqrt.pop %v1985
        %v1987 = vmul.f32 %v1979, %v1986
        %v1989 = vlaneseq
        %v1990 = vshrl.u32 %v1989, 7
        %v1991 = vsub.s32 0, %v1990
        %v1992 = vrot.slane %v1972, %v1991
        %v1994 = vmul.f32 %v1987, %v1992
        %v1996 = vlaneseq
        %v1997 = vshrl.u32 %v1996, 7
        %v1998 = vsub.s32 0, %v1997
        %v1999 = vrot.slane %v1973, %v1998
        %v2001 = vadd.f32 %v1994, %v1999
        %v2002 = vpack.c.bf16 %v2001, %v2001
        %v2003 = vld [vmem:[%s11] sm:$0xf]
        %v2004 = vld [vmem:[%s11 + $0x4] sm:$0xf]
        %v2005 = vld [vmem:[%s11 + $0x8] sm:$0xf]
        %v2006 = vld [vmem:[%s11 + $0xc] sm:$0xf]
        %v2007 = vld [vmem:[%s12] sm:$0x1]
        %v2009 = vlaneseq
        %v2010 = vshrl.u32 %v2009, 7
        %v2011 = vsub.s32 0, %v2010
        %v2012 = vrot.slane %v2007, %v2011
        %v2018 = vunpack.c.l.b16 %v2003
        %v2019 = vunpack.c.l.b16 %v2004
        %v2020 = vunpack.c.l.b16 %v2005
        %v2021 = vunpack.c.l.b16 %v2006
        %v2022 = vpack.c.b16 %v2019, %v2018
        %v2023 = vpack.c.b16 %v2021, %v2020
        %v2027 = vsel %vm709, %v2002, 0
        %2029 = vmatprep.subr.bf16.mxu0 0
        %2030 = vmatpush1.bf16.msra.mxu0 %v2022
        %2031 = vmatprep.subr.bf16.mxu0 0
        %2032 = vmatpush1.bf16.msra.mxu0 %v2023
        %2033 = vmatprep.subr.bf16.mxu0 0
        %2034 = vmatpush1.bf16.msra.mxu0 0
        %2035 = vmatprep.subr.bf16.mxu0 0
        %2036 = vmatpush1.bf16.msra.mxu0 0
        %2037 = vmatprep.subr.bf16.mxu0 0
        %2038 = vmatpush1.bf16.msra.mxu0 0
        %2039 = vmatprep.subr.bf16.mxu0 0
        %2040 = vmatpush1.bf16.msra.mxu0 0
        %2041 = vmatprep.subr.bf16.mxu0 0
        %2042 = vmatpush1.bf16.msra.mxu0 0
        %2043 = vmatprep.subr.bf16.mxu0 0
        %2044 = vmatpush1.bf16.msra.mxu0 0
        %2045 = vmatprep.subr.bf16.mxu0 0
        %2046 = vmatpush1.bf16.msra.mxu0 0
        %2047 = vmatprep.subr.bf16.mxu0 0
        %2048 = vmatpush1.bf16.msra.mxu0 0
        %2049 = vmatprep.subr.bf16.mxu0 0
        %2050 = vmatpush1.bf16.msra.mxu0 0
        %2051 = vmatprep.subr.bf16.mxu0 0
        %2052 = vmatpush1.bf16.msra.mxu0 0
        %2053 = vmatprep.subr.bf16.mxu0 0
        %2054 = vmatpush1.bf16.msra.mxu0 0
        %2055 = vmatprep.subr.bf16.mxu0 0
        %2056 = vmatpush1.bf16.msra.mxu0 0
        %2057 = vmatprep.subr.bf16.mxu0 0
        %2058 = vmatpush1.bf16.msra.mxu0 0
        %2059 = vmatprep.subr.bf16.mxu0 0
        %2060 = vmatpush1.bf16.msra.mxu0 0
        %2061 = vmatprep.mubr.bf16.mxu0 0
        %2062 = vmatmul.mubr.bf16.gmra.mrb[0].mxu0 %v2027
        %v2063 = vpop.f32.mrb[0].mxu0
        %v2064 = vadd.f32 %v2012, %v2063
        %v2065 = vpop.f32.mrb[0].mxu0
        %v2066 = vpop.f32.mrb[0].mxu0
        %v2067 = vpop.f32.mrb[0].mxu0
        %2068 = vdwg.mxu0
        %v2069 = vmul.f32 %v2064, 0.5
        %v2070 = vmul.f32 %v2064, 0.044715
        %v2071 = vmul.f32 %v2070, %v2064
        %v2072 = vmul.f32 %v2071, %v2064
        %v2073 = vadd.f32 %v2064, %v2072
        %v2074 = vmul.f32 %v2073, 0.7978846
        %v2075 = vtanh.pop %v2074
        %v2076 = vadd.f32 %v2075, 1.0
        %v2077 = vmul.f32 %v2069, %v2076
        %v2078 = vpack.c.bf16 %v2077, %v2077
        %v2079 = vld [vmem:[%s13] sm:$0xf]
        %v2080 = vld [vmem:[%s13 + $0x4] sm:$0xf]
        %v2081 = vld [vmem:[%s13 + $0x8] sm:$0xf]
        %v2082 = vld [vmem:[%s13 + $0xc] sm:$0xf]
        %v2083 = vld [vmem:[%s13 + $0x10] sm:$0xf]
        %v2084 = vld [vmem:[%s13 + $0x14] sm:$0xf]
        %v2085 = vld [vmem:[%s13 + $0x18] sm:$0xf]
        %v2086 = vld [vmem:[%s13 + $0x1c] sm:$0xf]
        %v2087 = vld [vmem:[%s14] sm:$0x1]
        %v2089 = vlaneseq
        %v2090 = vshrl.u32 %v2089, 7
        %v2091 = vsub.s32 0, %v2090
        %v2092 = vrot.slane %v2087, %v2091
        %v2102 = vunpack.c.l.b16 %v2079
        %v2103 = vunpack.c.l.b16 %v2080
        %v2104 = vunpack.c.l.b16 %v2081
        %v2105 = vunpack.c.l.b16 %v2082
        %v2106 = vunpack.c.l.b16 %v2083
        %v2107 = vunpack.c.l.b16 %v2084
        %v2108 = vunpack.c.l.b16 %v2085
        %v2109 = vunpack.c.l.b16 %v2086
        %v2110 = vpack.c.b16 %v2103, %v2102
        %v2111 = vpack.c.b16 %v2105, %v2104
        %v2112 = vpack.c.b16 %v2107, %v2106
        %v2113 = vpack.c.b16 %v2109, %v2108
        %vm2118 = vcmask 523264
        %v2120 = vsel %vm2118, %v2078, 0
        %2122 = vmatprep.subr.bf16.mxu0 0
        %2123 = vmatpush1.bf16.msra.mxu0 %v2110
        %2124 = vmatprep.subr.bf16.mxu0 0
        %2125 = vmatpush1.bf16.msra.mxu0 %v2111
        %2126 = vmatprep.subr.bf16.mxu0 0
        %2127 = vmatpush1.bf16.msra.mxu0 %v2112
        %2128 = vmatprep.subr.bf16.mxu0 0
        %2129 = vmatpush1.bf16.msra.mxu0 %v2113
        %2130 = vmatprep.subr.bf16.mxu0 0
        %2131 = vmatpush1.bf16.msra.mxu0 0
        %2132 = vmatprep.subr.bf16.mxu0 0
        %2133 = vmatpush1.bf16.msra.mxu0 0
        %2134 = vmatprep.subr.bf16.mxu0 0
        %2135 = vmatpush1.bf16.msra.mxu0 0
        %2136 = vmatprep.subr.bf16.mxu0 0
        %2137 = vmatpush1.bf16.msra.mxu0 0
        %2138 = vmatprep.subr.bf16.mxu0 0
        %2139 = vmatpush1.bf16.msra.mxu0 0
        %2140 = vmatprep.subr.bf16.mxu0 0
        %2141 = vmatpush1.bf16.msra.mxu0 0
        %2142 = vmatprep.subr.bf16.mxu0 0
        %2143 = vmatpush1.bf16.msra.mxu0 0
        %2144 = vmatprep.subr.bf16.mxu0 0
        %2145 = vmatpush1.bf16.msra.mxu0 0
        %2146 = vmatprep.subr.bf16.mxu0 0
        %2147 = vmatpush1.bf16.msra.mxu0 0
        %2148 = vmatprep.subr.bf16.mxu0 0
        %2149 = vmatpush1.bf16.msra.mxu0 0
        %2150 = vmatprep.subr.bf16.mxu0 0
        %2151 = vmatpush1.bf16.msra.mxu0 0
        %2152 = vmatprep.subr.bf16.mxu0 0
        %2153 = vmatpush1.bf16.msra.mxu0 0
        %2154 = vmatprep.mubr.bf16.mxu0 0
        %2155 = vmatmul.mubr.bf16.gmra.mrb[0].mxu0 %v2120
        %v2156 = vpop.f32.mrb[0].mxu0
        %v2157 = vadd.f32 %v2092, %v2156
        %v2158 = vpop.f32.mrb[0].mxu0
        %v2159 = vpop.f32.mrb[0].mxu0
        %v2160 = vpop.f32.mrb[0].mxu0
        %2161 = vdwg.mxu0
        %v2162 = vadd.f32 %v2157, %v2001
        %v2163 = vld [vmem:[%s15] sm:$0x1]
        %v2164 = vld [vmem:[%s16] sm:$0x1]
        %v2165 = vsel %vm709, %v2162, 0.0
        %2166 = vadd.xlane.f32.xlu0 %v2165
        %v2167 = vpop.xlane.xlu0 %2166
        %v2168 = vmul.f32 %v2167, %v1977
        %v2169 = vsub.f32 %v2162, %v2168
        %v2170 = vmul.f32 %v2169, %v2169
        %v2171 = vsel %vm709, %v2170, 0.0
        %2172 = vadd.xlane.f32.xlu0 %v2171
        %v2173 = vpop.xlane.xlu0 %2172
        %v2174 = vmul.f32 %v2173, %v1977
        %v2175 = vadd.f32 %v2174, 1e-12
        %v2176 = vrsqrt.pop %v2175
        %v2177 = vmul.f32 %v2169, %v2176
        %v2179 = vlaneseq
        %v2180 = vshrl.u32 %v2179, 7
        %v2181 = vsub.s32 0, %v2180
        %v2182 = vrot.slane %v2163, %v2181
        %v2184 = vmul.f32 %v2177, %v2182
        %v2186 = vlaneseq
        %v2187 = vshrl.u32 %v2186, 7
        %v2188 = vsub.s32 0, %v2187
        %v2189 = vrot.slane %v2164, %v2188
        %v2191 = vadd.f32 %v2184, %v2189
        %v2192 = vpack.c.bf16 %v2191, %v2191
        %vm2193 = vcmask 257024
        %2194 = vst.msk [vmem:[%s665] sm:$0xf] %vm2193, %v2192
        %s2195 = sand.u32 %s431, 1
        %s2196 = scalar_lea.sflag [#allocation4], %s2195
        %s2197 = sand.u32 %s431, 1
        %s2198 = smul.addr %s2197, 4
        %s2199 = scalar_lea.vmem [#allocation13], %s2198
        // Predicated region
        $region113: #{tpu_custom_call.1} parent=87 // pred_check
          %p2200 = pneg %p441
        $region114: #{tpu_custom_call.1} parent=87 // pred_check_branch
          %2202 = sbr.rel (%p2200) target = $region116
        $region115: #{tpu_custom_call.1} parent=87 // pred_region
          %s2204 = ssub.s32 64, 64
          %2205 = vsyncadd %s2196, %s2204
          %s2206 = sadd.s32 %s40, %s39
          %s2207 = smul.addr %s2206, 64
          %s2208 = scalar_lea.hbm %s17, %s2207
          %s2210 = sshll.u32 %s2199, 4
          %s2211 = int_to_ptr.vmem [resolvable:$true] %s2210
          %2213 = dma.vmem_to_hbm [thread:$0]  %s2211, 64, %s2208, %s2196
        $region116: #{tpu_custom_call.1} parent=87 // pred_fallthru
          _
      $region88: #{tpu_custom_call.1} parent=5 // pred_fallthru
        _
      %p2214 = scmp.le.s32.totalorder 2, %s30
      // Predicated region
      $region117: #{tpu_custom_call.1} parent=5 // pred_check
        %p2215 = pneg %p2214
      $region118: #{tpu_custom_call.1} parent=5 // pred_check_branch
        %2217 = sbr.rel (%p2215) target = $region120
      $region119: #{tpu_custom_call.1} parent=5 // pred_region
        %s2218 = ssub.s32 %s30, 2
        // Predicated region
        $region121: #{tpu_custom_call.1} parent=119 // pred_check
          %p2219 = pneg %p447
        $region122: #{tpu_custom_call.1} parent=119 // pred_check_branch
          %2221 = sbr.rel (%p2219) target = $region124
        $region123: #{tpu_custom_call.1} parent=119 // pred_region
          %s2222 = sand.u32 %s432, 1
          %s2223 = scalar_lea.sflag [#allocation4], %s2222
          %s2224 = sand.u32 %s432, 1
          %s2225 = smul.addr %s2224, 4
          %s2226 = scalar_lea.vmem [#allocation13], %s2225
          %2227 = dma.done %s2223, 64
        $region124: #{tpu_custom_call.1} parent=119 // pred_fallthru
          _
      $region120: #{tpu_custom_call.1} parent=5 // pred_fallthru
        _
    $region6: #{tpu_custom_call.1} parent=1 // loop_footer
      %s34 = sadd.s32 1, %s30
    $region7: #{tpu_custom_call.1} parent=1 // loop_footer_branch
      %29 = sbr.rel target = $region3
    $region8: #{tpu_custom_call.1} parent=1 // loop_exit
      _
    %2228 = vsyncpa [#allocation3], 1
    %s2229 = scalar_lea.sflag [#allocation3], 1
    %2230 = vsyncpa %s2229, 1
    %2231 = vsyncpa [#allocation6], 1
    %2232 = vsyncpa [#allocation9], 1
    %2233 = vsyncpa [#allocation12], 1
    %2234 = vsyncpa [#allocation4], 1
    %s2235 = scalar_lea.sflag [#allocation4], 1
    %2236 = vsyncpa %s2235, 1

</llo_original>
